<compile_context>
chip_gen: v6e
topology: v6e:2x2x1
jax: 0.10.0
libtpu: 0.0.40
codegen_flags: <defaults>
</compile_context>

<pallas_src>
import functools

import jax
import jax.numpy as jnp
from jax.experimental import pallas as pl
from jax.experimental.pallas import tpu as pltpu


def _round_up(x, m):
    return (x + m - 1) // m * m


# ---------------------------------------------------------------------------
# Pallas kernels
# ---------------------------------------------------------------------------

def _mm_bias_kernel(a_ref, w_ref, b_ref, o_ref, acc_ref, *, relu):
    # grid = (gm, gn, T, gk); reduction over (T, gk) accumulated in f32 scratch.
    t = pl.program_id(2)
    k = pl.program_id(3)

    @pl.when(jnp.logical_and(t == 0, k == 0))
    def _init():
        acc_ref[...] = jnp.zeros_like(acc_ref)

    acc_ref[...] += jnp.dot(a_ref[...], w_ref[...],
                            preferred_element_type=jnp.float32)

    @pl.when(jnp.logical_and(t == pl.num_programs(2) - 1,
                             k == pl.num_programs(3) - 1))
    def _finalize():
        y = acc_ref[...] + b_ref[...]          # f32 epilogue (v5e-safe)
        if relu:
            y = jnp.maximum(y, 0.0)
        o_ref[...] = y.astype(o_ref.dtype)


def _mm_bias_res_relu_kernel(a_ref, w_ref, b_ref, r_ref, o_ref, acc_ref):
    # Bottleneck tail: (A @ W) + bias + residual, ReLU, all fused.
    t = pl.program_id(2)
    k = pl.program_id(3)

    @pl.when(jnp.logical_and(t == 0, k == 0))
    def _init():
        acc_ref[...] = jnp.zeros_like(acc_ref)

    acc_ref[...] += jnp.dot(a_ref[...], w_ref[...],
                            preferred_element_type=jnp.float32)

    @pl.when(jnp.logical_and(t == pl.num_programs(2) - 1,
                             k == pl.num_programs(3) - 1))
    def _finalize():
        y = acc_ref[...] + b_ref[...] + r_ref[...].astype(jnp.float32)
        o_ref[...] = jnp.maximum(y, 0.0).astype(o_ref.dtype)


def _max3_kernel(a_ref, b_ref, c_ref, o_ref):
    o_ref[...] = jnp.maximum(jnp.maximum(a_ref[...], b_ref[...]), c_ref[...])


# ---------------------------------------------------------------------------
# Fused conv-as-matmul wrapper (tiled, pipelined)
# ---------------------------------------------------------------------------

def fused_conv_matmul(a_taps, w_taps, bias, residual=None, relu=True,
                      out_dtype=jnp.bfloat16):
    """a_taps: (T, M, K) bf16; w_taps: (T, K, N) bf16 (BN scale pre-folded);
    bias: (N,) f32; residual: (M, N) bf16 or None. Returns (Mp, N) out_dtype."""
    T, M, K = a_taps.shape
    N = w_taps.shape[2]

    tm = min(256, _round_up(M, 16))
    Mp = _round_up(M, tm)
    tn = 256 if N % 256 == 0 else 128
    tk = K if K < 128 else (256 if K % 256 == 0 else 128)
    gm, gn, gk = Mp // tm, N // tn, K // tk

    if Mp != M:
        a_taps = jnp.pad(a_taps, ((0, 0), (0, Mp - M), (0, 0)))
        if residual is not None:
            residual = jnp.pad(residual, ((0, Mp - M), (0, 0)))

    bias2 = bias.reshape(1, N).astype(jnp.float32)

    a_spec = pl.BlockSpec((None, tm, tk), lambda i, j, t, k: (t, i, k))
    w_spec = pl.BlockSpec((None, tk, tn), lambda i, j, t, k: (t, k, j))
    b_spec = pl.BlockSpec((1, tn), lambda i, j, t, k: (0, j))
    o_spec = pl.BlockSpec((tm, tn), lambda i, j, t, k: (i, j))

    bytes_accessed = (T * Mp * K + T * K * N + Mp * N) * 2 + N * 4
    if residual is not None:
        bytes_accessed += Mp * N * 2
    cost = pl.CostEstimate(flops=2 * Mp * N * K * T, transcendentals=0,
                           bytes_accessed=bytes_accessed)
    cparams = pltpu.CompilerParams(
        dimension_semantics=("parallel", "parallel", "arbitrary", "arbitrary"),
        vmem_limit_bytes=32 * 1024 * 1024)

    common = dict(
        out_shape=jax.ShapeDtypeStruct((Mp, N), out_dtype),
        grid=(gm, gn, T, gk),
        out_specs=o_spec,
        scratch_shapes=[pltpu.VMEM((tm, tn), jnp.float32)],
        compiler_params=cparams,
        cost_estimate=cost,
    )

    if residual is None:
        return pl.pallas_call(
            functools.partial(_mm_bias_kernel, relu=relu),
            in_specs=[a_spec, w_spec, b_spec],
            **common)(a_taps, w_taps, bias2)

    r_spec = pl.BlockSpec((tm, tn), lambda i, j, t, k: (i, j))
    return pl.pallas_call(
        _mm_bias_res_relu_kernel,
        in_specs=[a_spec, w_spec, b_spec, r_spec],
        **common)(a_taps, w_taps, bias2, residual)


# ---------------------------------------------------------------------------
# Conv / pooling wrappers (JAX glue around the Pallas kernels)
# ---------------------------------------------------------------------------

def _extract_patches_stacked(x, kh, kw, stride, padding):
    """x: (B,H,W,C) -> (kh*kw, B, Ho, Wo, C) shifted strided views (zero pad)."""
    B, H, W, C = x.shape
    xp = jnp.pad(x, ((0, 0), (padding, padding), (padding, padding), (0, 0)))
    Ho = (H + 2 * padding - kh) // stride + 1
    Wo = (W + 2 * padding - kw) // stride + 1
    taps = []
    for i in range(kh):
        for j in range(kw):
            taps.append(xp[:, i:i + stride * (Ho - 1) + 1:stride,
                            j:j + stride * (Wo - 1) + 1:stride, :])
    return jnp.stack(taps, axis=0), Ho, Wo


def conv_bn(x, w, scale, bias, stride, padding, relu=True, residual=None):
    """NHWC conv + folded BN + optional residual + optional ReLU.

    x: (B,H,W,Cx) bf16, w: (kh,kw,Cin,Cout) f32, scale/bias: (Cout,) f32.
    Output channels are padded up to a multiple of 128 (lane-dense stores);
    padded channels are exactly zero, so downstream convs/residuals stay correct.
    """
    B, H, W, Cx = x.shape
    kh, kw, Cin, Cout = w.shape
    Np = _round_up(Cout, 128)

    # Fold BN scale into the weight; zero-pad Cin -> Cx and Cout -> Np.
    wf = w * scale.reshape(1, 1, 1, Cout)
    wf = jnp.pad(wf, ((0, 0), (0, 0), (0, Cx - Cin), (0, Np - Cout)))
    wf = wf.reshape(kh * kw, Cx, Np).astype(jnp.bfloat16)
    bf = jnp.pad(bias, (0, Np - Cout)).astype(jnp.float32)

    x = x.astype(jnp.bfloat16)
    if kh == 1 and kw == 1 and padding == 0:
        xs = x[:, ::stride, ::stride, :] if stride != 1 else x
        _, Ho, Wo, _ = xs.shape
        a = xs.reshape(1, B * Ho * Wo, Cx)
    else:
        taps, Ho, Wo = _extract_patches_stacked(x, kh, kw, stride, padding)
        a = taps.reshape(kh * kw, B * Ho * Wo, Cx)

    M = B * Ho * Wo
    r = None
    if residual is not None:
        Cr = residual.shape[-1]
        r = residual.astype(jnp.bfloat16).reshape(M, Cr)
        if Cr != Np:
            r = jnp.pad(r, ((0, 0), (0, Np - Cr)))

    out = fused_conv_matmul(a, wf, bf, residual=r, relu=relu)
    return out[:M].reshape(B, Ho, Wo, Np)


def maxpool_3x3_s2(x):
    """MaxPool2d(kernel_size=3, stride=2, padding=1), NHWC, separable max.
    Zero padding is safe: input is post-ReLU (non-negative)."""
    B, H, W, C = x.shape
    xp = jnp.pad(x, ((0, 0), (1, 1), (1, 1), (0, 0)))
    Ho = (H + 2 - 3) // 2 + 1
    Wo = (W + 2 - 3) // 2 + 1

    # Vertical max over 3 taps (fused elementwise by XLA, no 9x stack).
    vm = jnp.maximum(
        jnp.maximum(xp[:, 0:2 * (Ho - 1) + 1:2, :, :],
                    xp[:, 1:1 + 2 * (Ho - 1) + 1:2, :, :]),
        xp[:, 2:2 + 2 * (Ho - 1) + 1:2, :, :])          # (B, Ho, W+2, C)

    # Horizontal max over 3 stride-2 taps in a small Pallas kernel.
    M = B * Ho * Wo
    taps = [vm[:, :, j:j + 2 * (Wo - 1) + 1:2, :].reshape(M, C) for j in range(3)]
    tm = min(256, _round_up(M, 16))
    Mp = _round_up(M, tm)
    if Mp != M:
        taps = [jnp.pad(t_, ((0, Mp - M), (0, 0))) for t_ in taps]

    out = pl.pallas_call(
        _max3_kernel,
        out_shape=jax.ShapeDtypeStruct((Mp, C), x.dtype),
        grid=(Mp // tm,),
        in_specs=[pl.BlockSpec((tm, C), lambda i: (i, 0))] * 3,
        out_specs=pl.BlockSpec((tm, C), lambda i: (i, 0)),
        compiler_params=pltpu.CompilerParams(dimension_semantics=("parallel",)),
    )(*taps)
    return out[:M].reshape(B, Ho, Wo, C)


# ---------------------------------------------------------------------------
# Parameter init (deterministic, synthetic)
# ---------------------------------------------------------------------------

def _init_conv(key, cin, cout, kh, kw):
    fan_in = cin * kh * kw
    return jax.random.normal(key, (kh, kw, cin, cout), jnp.float32) * (2.0 / fan_in) ** 0.5


def _init_bn(key, c, eps=1e-5):
    k1, k2 = jax.random.split(key)
    gamma = 1.0 + 0.1 * jax.random.normal(k1, (c,), jnp.float32)
    beta = 0.1 * jax.random.normal(k2, (c,), jnp.float32)
    running_mean = jnp.zeros((c,), jnp.float32)
    running_var = jnp.ones((c,), jnp.float32)
    scale = gamma / jnp.sqrt(running_var + eps)
    bias = beta - running_mean * scale
    return scale, bias


def _init_bottleneck(key, inplanes, planes, stride):
    # NOTE: stride is NOT stored in the pytree (it would become a tracer under jit);
    # it is re-derived statically in the forward loop.
    keys = jax.random.split(key, 8)
    exp = 4
    p = {
        'w1': _init_conv(keys[0], inplanes, planes, 1, 1),
        'w2': _init_conv(keys[1], planes, planes, 3, 3),
        'w3': _init_conv(keys[2], planes, planes * exp, 1, 1),
    }
    p['s1'], p['b1'] = _init_bn(keys[3], planes)
    p['s2'], p['b2'] = _init_bn(keys[4], planes)
    p['s3'], p['b3'] = _init_bn(keys[5], planes * exp)
    if stride != 1 or inplanes != planes * exp:
        p['down'] = {'w': _init_conv(keys[6], inplanes, planes * exp, 1, 1)}
        p['down']['s'], p['down']['b'] = _init_bn(keys[7], planes * exp)
    else:
        p['down'] = None
    return p


def _init_layer(key, inplanes, planes, blocks, stride):
    keys = jax.random.split(key, blocks)
    layer = [_init_bottleneck(keys[0], inplanes, planes, stride)]
    inplanes = planes * 4
    for b in range(1, blocks):
        layer.append(_init_bottleneck(keys[b], inplanes, planes, 1))
    return layer


def init_backbone_params(key):
    k0, k1, k2, k3, k4 = jax.random.split(key, 5)
    params = {'conv1_w': _init_conv(k0, 3, 64, 7, 7)}
    params['bn1_s'], params['bn1_b'] = _init_bn(k1, 64)
    # ResNet_plus2(Bottleneck, [3, 4, 6, 3]) -> only layer1/2/3 are used by the stages.
    params['layer1'] = _init_layer(k2, 64, 64, 3, stride=1)
    params['layer2'] = _init_layer(k3, 256, 128, 4, stride=2)
    params['layer3'] = _init_layer(k4, 512, 256, 6, stride=2)
    # TODO(synk): ResNet_plus2 source not available; standard ResNet-50 strides used
    # (tracking variants sometimes use stride=1 / dilation=2 in layer3).
    return params


# ---------------------------------------------------------------------------
# Forward (NHWC internal, bf16 activations, f32 accumulation)
# ---------------------------------------------------------------------------

def _bottleneck_forward(x, p, stride):
    out = conv_bn(x, p['w1'], p['s1'], p['b1'], 1, 0, relu=True)
    out = conv_bn(out, p['w2'], p['s2'], p['b2'], stride, 1, relu=True)
    if p['down'] is not None:
        identity = conv_bn(x, p['down']['w'], p['down']['s'], p['down']['b'],
                           stride, 0, relu=False)
    else:
        identity = x
    # conv3 + BN + residual add + ReLU fused in one Pallas kernel
    return conv_bn(out, p['w3'], p['s3'], p['b3'], 1, 0, relu=True, residual=identity)


def _layer_forward(x, blocks, first_stride):
    for idx, blk in enumerate(blocks):
        x = _bottleneck_forward(x, blk, first_stride if idx == 0 else 1)
    return x


def backbone_stage_forward(params, x_nchw, stage=None):
    x = jnp.transpose(x_nchw, (0, 2, 3, 1)).astype(jnp.bfloat16)  # NCHW -> NHWC
    if stage == 'stage1':
        x = conv_bn(x, params['conv1_w'], params['bn1_s'], params['bn1_b'],
                    2, 3, relu=True)                  # conv1 + bn1 + relu
        x = maxpool_3x3_s2(x)                         # maxpool 3x3 s2 p1
        x = _layer_forward(x, params['layer1'], 1)    # layer1
    elif stage == 'stage2':
        x = _layer_forward(x, params['layer2'], 2)    # layer2
    elif stage == 'stage3':
        x = _layer_forward(x, params['layer3'], 2)    # layer3
    return jnp.transpose(x, (0, 3, 1, 2)).astype(jnp.float32)  # NHWC -> NCHW


# ---------------------------------------------------------------------------

if __name__ == "__main__":
    key = jax.random.PRNGKey(0)
    pkey, xkey = jax.random.split(key)
    params = init_backbone_params(pkey)
    k1, k2, k3 = jax.random.split(xkey, 3)

    # Small deterministic inputs consistent with each stage's expected channels.
    x_stage1 = jax.random.normal(k1, (2, 3, 16, 16), jnp.float32)    # NCHW
    x_stage2 = jax.random.normal(k2, (2, 256, 8, 8), jnp.float32)
    x_stage3 = jax.random.normal(k3, (2, 512, 8, 8), jnp.float32)

    fwd = jax.jit(backbone_stage_forward, static_argnames=('stage',))
    y1 = fwd(params, x_stage1, stage='stage1')
    y2 = fwd(params, x_stage2, stage='stage2')
    y3 = fwd(params, x_stage3, stage='stage3')
    jax.block_until_ready((y1, y2, y3))

    assert y1.shape == (2, 256, 4, 4), y1.shape
    assert y2.shape == (2, 512, 4, 4), y2.shape
    assert y3.shape == (2, 1024, 4, 4), y3.shape
    assert jnp.all(jnp.isfinite(y1)) and jnp.all(jnp.isfinite(y2)) and jnp.all(jnp.isfinite(y3))
    print("KERNEL_OK")
</pallas_src>

<mosaic_0001>
module attributes {stable_mosaic.version = 11 : i64} {
  func.func @_mm_bias_kernel(%arg0: i32, %arg1: i32, %arg2: i32, %arg3: i32, %arg4: memref<1x128x3xbf16, #tpu.memory_space<vmem>>, %arg5: memref<1x3x128xbf16, #tpu.memory_space<vmem>>, %arg6: memref<1x128xf32, #tpu.memory_space<vmem>>, %arg7: memref<128x128xbf16, #tpu.memory_space<vmem>>, %arg8: memref<128x128xf32, #tpu.memory_space<vmem>>) attributes {dimension_semantics = [#tpu.dimension_semantics<parallel>, #tpu.dimension_semantics<parallel>, #tpu.dimension_semantics<arbitrary>, #tpu.dimension_semantics<arbitrary>], iteration_bounds = array<i64: 1, 1, 49, 1>, scalar_prefetch = 0 : i64, scratch_operands = 1 : i64, tpu.core_type = #tpu.core_type<tc>, window_params = [{transform_indices = @transform_0, window_bounds = array<i64: 1, 128, 3>}, {transform_indices = @transform_1, window_bounds = array<i64: 1, 3, 128>}, {transform_indices = @transform_2, window_bounds = array<i64: 1, 128>}, {transform_indices = @transform_3, window_bounds = array<i64: 128, 128>}]} {
    %c0_i32 = arith.constant 0 : i32
    %0 = arith.cmpi eq, %arg2, %c0_i32 : i32
    %c0_i32_0 = arith.constant 0 : i32
    %1 = arith.cmpi eq, %arg3, %c0_i32_0 : i32
    %2 = arith.andi %0, %1 : i1
    %3 = arith.extui %2 : i1 to i32
    %c0_i32_1 = arith.constant 0 : i32
    %4 = arith.cmpi ne, %3, %c0_i32_1 : i32
    scf.if %4 {
      %cst_13 = arith.constant 0.000000e+00 : f32
      %18 = vector.broadcast %cst_13 : f32 to vector<128x128xf32>
      %c0_14 = arith.constant 0 : index
      %c0_15 = arith.constant 0 : index
      %19 = vector.load %arg8[%c0_14, %c0_15] : memref<128x128xf32, #tpu.memory_space<vmem>>, vector<128x128xf32>
      tpu.vector_store %arg8[%c0_14, %c0_15], %18 {strides = array<i32>} : memref<128x128xf32, #tpu.memory_space<vmem>>, vector<128x128xf32>,
    } else {
    }
    %c0 = arith.constant 0 : index
    %c0_2 = arith.constant 0 : index
    %5 = vector.load %arg8[%c0, %c0_2] : memref<128x128xf32, #tpu.memory_space<vmem>>, vector<128x128xf32>
    %c0_3 = arith.constant 0 : index
    %c0_4 = arith.constant 0 : index
    %c0_5 = arith.constant 0 : index
    %6 = vector.load %arg4[%c0_3, %c0_4, %c0_5] : memref<1x128x3xbf16, #tpu.memory_space<vmem>>, vector<1x128x3xbf16>
    %7 = vector.shape_cast %6 : vector<1x128x3xbf16> to vector<128x3xbf16>
    %c0_6 = arith.constant 0 : index
    %c0_7 = arith.constant 0 : index
    %c0_8 = arith.constant 0 : index
    %8 = vector.load %arg5[%c0_6, %c0_7, %c0_8] : memref<1x3x128xbf16, #tpu.memory_space<vmem>>, vector<1x3x128xbf16>
    %9 = vector.shape_cast %8 : vector<1x3x128xbf16> to vector<3x128xbf16>
    %cst = arith.constant dense<0.000000e+00> : vector<128x128xf32>
    %10 = tpu.matmul %7, %9, %cst {dimension_numbers = #tpu.dot_dimension_numbers<[1], [0], [0], [1], [0, 0, 1, 1], [], []>} : vector<128x3xbf16>, vector<3x128xbf16>, vector<128x128xf32> -> vector<128x128xf32>
    %11 = arith.addf %5, %10 : vector<128x128xf32>
    %c0_9 = arith.constant 0 : index
    %c0_10 = arith.constant 0 : index
    %12 = vector.load %arg8[%c0_9, %c0_10] : memref<128x128xf32, #tpu.memory_space<vmem>>, vector<128x128xf32>
    tpu.vector_store %arg8[%c0_9, %c0_10], %11 {strides = array<i32>} : memref<128x128xf32, #tpu.memory_space<vmem>>, vector<128x128xf32>,
    %c48_i32 = arith.constant 48 : i32
    %13 = arith.cmpi eq, %arg2, %c48_i32 : i32
    %c0_i32_11 = arith.constant 0 : i32
    %14 = arith.cmpi eq, %arg3, %c0_i32_11 : i32
    %15 = arith.andi %13, %14 : i1
    %16 = arith.extui %15 : i1 to i32
    %c0_i32_12 = arith.constant 0 : i32
    %17 = arith.cmpi ne, %16, %c0_i32_12 : i32
    scf.if %17 {
      %c0_13 = arith.constant 0 : index
      %c0_14 = arith.constant 0 : index
      %18 = vector.load %arg8[%c0_13, %c0_14] : memref<128x128xf32, #tpu.memory_space<vmem>>, vector<128x128xf32>
      %c0_15 = arith.constant 0 : index
      %c0_16 = arith.constant 0 : index
      %19 = vector.load %arg6[%c0_15, %c0_16] : memref<1x128xf32, #tpu.memory_space<vmem>>, vector<1x128xf32>
      %20 = vector.broadcast %19 : vector<1x128xf32> to vector<128x128xf32>
      %21 = arith.addf %18, %20 : vector<128x128xf32>
      %cst_17 = arith.constant 0.000000e+00 : f32
      %22 = vector.broadcast %cst_17 : f32 to vector<128x128xf32>
      %23 = arith.maximumf %21, %22 : vector<128x128xf32>
      %24 = arith.truncf %23 : vector<128x128xf32> to vector<128x128xbf16>
      %c0_18 = arith.constant 0 : index
      %c0_19 = arith.constant 0 : index
      %25 = vector.load %arg7[%c0_18, %c0_19] : memref<128x128xbf16, #tpu.memory_space<vmem>>, vector<128x128xbf16>
      tpu.vector_store %arg7[%c0_18, %c0_19], %24 {strides = array<i32>} : memref<128x128xbf16, #tpu.memory_space<vmem>>, vector<128x128xbf16>,
    } else {
    }
    return
  }
  func.func @transform_0(%arg0: i32, %arg1: i32, %arg2: i32, %arg3: i32) -> (i32, i32, i32) {
    %c0_i32 = arith.constant 0 : i32
    return %arg2, %arg0, %arg3 : i32, i32, i32
  }
  func.func @transform_1(%arg0: i32, %arg1: i32, %arg2: i32, %arg3: i32) -> (i32, i32, i32) {
    %c0_i32 = arith.constant 0 : i32
    return %arg2, %arg3, %arg1 : i32, i32, i32
  }
  func.func @transform_2(%arg0: i32, %arg1: i32, %arg2: i32, %arg3: i32) -> (i32, i32) {
    %c0_i32 = arith.constant 0 : i32
    %c0_i32_0 = arith.constant 0 : i32
    return %c0_i32, %arg1 : i32, i32
  }
  func.func @transform_3(%arg0: i32, %arg1: i32, %arg2: i32, %arg3: i32) -> (i32, i32) {
    %c0_i32 = arith.constant 0 : i32
    return %arg0, %arg1 : i32, i32
  }
}

module attributes {stable_mosaic.version = 11 : i64} {
  func.func @_max3_kernel(%arg0: i32, %arg1: memref<32x128xbf16, #tpu.memory_space<vmem>>, %arg2: memref<32x128xbf16, #tpu.memory_space<vmem>>, %arg3: memref<32x128xbf16, #tpu.memory_space<vmem>>, %arg4: memref<32x128xbf16, #tpu.memory_space<vmem>>) attributes {dimension_semantics = [#tpu.dimension_semantics<parallel>], iteration_bounds = array<i64: 1>, scalar_prefetch = 0 : i64, scratch_operands = 0 : i64, tpu.core_type = #tpu.core_type<tc>, window_params = [{transform_indices = @transform_0, window_bounds = array<i64: 32, 128>}, {transform_indices = @transform_1, window_bounds = array<i64: 32, 128>}, {transform_indices = @transform_2, window_bounds = array<i64: 32, 128>}, {transform_indices = @transform_3, window_bounds = array<i64: 32, 128>}]} {
    %c0 = arith.constant 0 : index
    %c0_0 = arith.constant 0 : index
    %0 = vector.load %arg1[%c0, %c0_0] : memref<32x128xbf16, #tpu.memory_space<vmem>>, vector<32x128xbf16>
    %c0_1 = arith.constant 0 : index
    %c0_2 = arith.constant 0 : index
    %1 = vector.load %arg2[%c0_1, %c0_2] : memref<32x128xbf16, #tpu.memory_space<vmem>>, vector<32x128xbf16>
    %2 = arith.maximumf %0, %1 : vector<32x128xbf16>
    %c0_3 = arith.constant 0 : index
    %c0_4 = arith.constant 0 : index
    %3 = vector.load %arg3[%c0_3, %c0_4] : memref<32x128xbf16, #tpu.memory_space<vmem>>, vector<32x128xbf16>
    %4 = arith.maximumf %2, %3 : vector<32x128xbf16>
    %c0_5 = arith.constant 0 : index
    %c0_6 = arith.constant 0 : index
    %5 = vector.load %arg4[%c0_5, %c0_6] : memref<32x128xbf16, #tpu.memory_space<vmem>>, vector<32x128xbf16>
    tpu.vector_store %arg4[%c0_5, %c0_6], %4 {strides = array<i32>} : memref<32x128xbf16, #tpu.memory_space<vmem>>, vector<32x128xbf16>,
    return
  }
  func.func @transform_0(%arg0: i32) -> (i32, i32) {
    %c0_i32 = arith.constant 0 : i32
    %c0_i32_0 = arith.constant 0 : i32
    return %arg0, %c0_i32 : i32, i32
  }
  func.func @transform_1(%arg0: i32) -> (i32, i32) {
    %c0_i32 = arith.constant 0 : i32
    %c0_i32_0 = arith.constant 0 : i32
    return %arg0, %c0_i32 : i32, i32
  }
  func.func @transform_2(%arg0: i32) -> (i32, i32) {
    %c0_i32 = arith.constant 0 : i32
    %c0_i32_0 = arith.constant 0 : i32
    return %arg0, %c0_i32 : i32, i32
  }
  func.func @transform_3(%arg0: i32) -> (i32, i32) {
    %c0_i32 = arith.constant 0 : i32
    %c0_i32_0 = arith.constant 0 : i32
    return %arg0, %c0_i32 : i32, i32
  }
}

module attributes {stable_mosaic.version = 11 : i64} {
  func.func @_mm_bias_kernel(%arg0: i32, %arg1: i32, %arg2: i32, %arg3: i32, %arg4: memref<1x32x128xbf16, #tpu.memory_space<vmem>>, %arg5: memref<1x128x128xbf16, #tpu.memory_space<vmem>>, %arg6: memref<1x128xf32, #tpu.memory_space<vmem>>, %arg7: memref<32x128xbf16, #tpu.memory_space<vmem>>, %arg8: memref<32x128xf32, #tpu.memory_space<vmem>>) attributes {dimension_semantics = [#tpu.dimension_semantics<parallel>, #tpu.dimension_semantics<parallel>, #tpu.dimension_semantics<arbitrary>, #tpu.dimension_semantics<arbitrary>], iteration_bounds = array<i64: 1, 1, 1, 1>, scalar_prefetch = 0 : i64, scratch_operands = 1 : i64, tpu.core_type = #tpu.core_type<tc>, window_params = [{transform_indices = @transform_0, window_bounds = array<i64: 1, 32, 128>}, {transform_indices = @transform_1, window_bounds = array<i64: 1, 128, 128>}, {transform_indices = @transform_2, window_bounds = array<i64: 1, 128>}, {transform_indices = @transform_3, window_bounds = array<i64: 32, 128>}]} {
    %c0_i32 = arith.constant 0 : i32
    %0 = arith.cmpi eq, %arg2, %c0_i32 : i32
    %c0_i32_0 = arith.constant 0 : i32
    %1 = arith.cmpi eq, %arg3, %c0_i32_0 : i32
    %2 = arith.andi %0, %1 : i1
    %3 = arith.extui %2 : i1 to i32
    %c0_i32_1 = arith.constant 0 : i32
    %4 = arith.cmpi ne, %3, %c0_i32_1 : i32
    scf.if %4 {
      %cst_14 = arith.constant 0.000000e+00 : f32
      %18 = vector.broadcast %cst_14 : f32 to vector<32x128xf32>
      %c0_15 = arith.constant 0 : index
      %c0_16 = arith.constant 0 : index
      %19 = vector.load %arg8[%c0_15, %c0_16] : memref<32x128xf32, #tpu.memory_space<vmem>>, vector<32x128xf32>
      tpu.vector_store %arg8[%c0_15, %c0_16], %18 {strides = array<i32>} : memref<32x128xf32, #tpu.memory_space<vmem>>, vector<32x128xf32>,
    } else {
    }
    %c0 = arith.constant 0 : index
    %c0_2 = arith.constant 0 : index
    %5 = vector.load %arg8[%c0, %c0_2] : memref<32x128xf32, #tpu.memory_space<vmem>>, vector<32x128xf32>
    %c0_3 = arith.constant 0 : index
    %c0_4 = arith.constant 0 : index
    %c0_5 = arith.constant 0 : index
    %6 = vector.load %arg4[%c0_3, %c0_4, %c0_5] : memref<1x32x128xbf16, #tpu.memory_space<vmem>>, vector<1x32x128xbf16>
    %7 = vector.shape_cast %6 : vector<1x32x128xbf16> to vector<32x128xbf16>
    %c0_6 = arith.constant 0 : index
    %c0_7 = arith.constant 0 : index
    %c0_8 = arith.constant 0 : index
    %8 = vector.load %arg5[%c0_6, %c0_7, %c0_8] : memref<1x128x128xbf16, #tpu.memory_space<vmem>>, vector<1x128x128xbf16>
    %9 = vector.shape_cast %8 : vector<1x128x128xbf16> to vector<128x128xbf16>
    %cst = arith.constant dense<0.000000e+00> : vector<32x128xf32>
    %10 = tpu.matmul %7, %9, %cst {dimension_numbers = #tpu.dot_dimension_numbers<[1], [0], [0], [1], [0, 0, 1, 1], [], []>} : vector<32x128xbf16>, vector<128x128xbf16>, vector<32x128xf32> -> vector<32x128xf32>
    %11 = arith.addf %5, %10 : vector<32x128xf32>
    %c0_9 = arith.constant 0 : index
    %c0_10 = arith.constant 0 : index
    %12 = vector.load %arg8[%c0_9, %c0_10] : memref<32x128xf32, #tpu.memory_space<vmem>>, vector<32x128xf32>
    tpu.vector_store %arg8[%c0_9, %c0_10], %11 {strides = array<i32>} : memref<32x128xf32, #tpu.memory_space<vmem>>, vector<32x128xf32>,
    %c0_i32_11 = arith.constant 0 : i32
    %13 = arith.cmpi eq, %arg2, %c0_i32_11 : i32
    %c0_i32_12 = arith.constant 0 : i32
    %14 = arith.cmpi eq, %arg3, %c0_i32_12 : i32
    %15 = arith.andi %13, %14 : i1
    %16 = arith.extui %15 : i1 to i32
    %c0_i32_13 = arith.constant 0 : i32
    %17 = arith.cmpi ne, %16, %c0_i32_13 : i32
    scf.if %17 {
      %c0_14 = arith.constant 0 : index
      %c0_15 = arith.constant 0 : index
      %18 = vector.load %arg8[%c0_14, %c0_15] : memref<32x128xf32, #tpu.memory_space<vmem>>, vector<32x128xf32>
      %c0_16 = arith.constant 0 : index
      %c0_17 = arith.constant 0 : index
      %19 = vector.load %arg6[%c0_16, %c0_17] : memref<1x128xf32, #tpu.memory_space<vmem>>, vector<1x128xf32>
      %20 = vector.broadcast %19 : vector<1x128xf32> to vector<32x128xf32>
      %21 = arith.addf %18, %20 : vector<32x128xf32>
      %cst_18 = arith.constant 0.000000e+00 : f32
      %22 = vector.broadcast %cst_18 : f32 to vector<32x128xf32>
      %23 = arith.maximumf %21, %22 : vector<32x128xf32>
      %24 = arith.truncf %23 : vector<32x128xf32> to vector<32x128xbf16>
      %c0_19 = arith.constant 0 : index
      %c0_20 = arith.constant 0 : index
      %25 = vector.load %arg7[%c0_19, %c0_20] : memref<32x128xbf16, #tpu.memory_space<vmem>>, vector<32x128xbf16>
      tpu.vector_store %arg7[%c0_19, %c0_20], %24 {strides = array<i32>} : memref<32x128xbf16, #tpu.memory_space<vmem>>, vector<32x128xbf16>,
    } else {
    }
    return
  }
  func.func @transform_0(%arg0: i32, %arg1: i32, %arg2: i32, %arg3: i32) -> (i32, i32, i32) {
    %c0_i32 = arith.constant 0 : i32
    return %arg2, %arg0, %arg3 : i32, i32, i32
  }
  func.func @transform_1(%arg0: i32, %arg1: i32, %arg2: i32, %arg3: i32) -> (i32, i32, i32) {
    %c0_i32 = arith.constant 0 : i32
    return %arg2, %arg3, %arg1 : i32, i32, i32
  }
  func.func @transform_2(%arg0: i32, %arg1: i32, %arg2: i32, %arg3: i32) -> (i32, i32) {
    %c0_i32 = arith.constant 0 : i32
    %c0_i32_0 = arith.constant 0 : i32
    return %c0_i32, %arg1 : i32, i32
  }
  func.func @transform_3(%arg0: i32, %arg1: i32, %arg2: i32, %arg3: i32) -> (i32, i32) {
    %c0_i32 = arith.constant 0 : i32
    return %arg0, %arg1 : i32, i32
  }
}

module attributes {stable_mosaic.version = 11 : i64} {
  func.func @_mm_bias_kernel(%arg0: i32, %arg1: i32, %arg2: i32, %arg3: i32, %arg4: memref<1x32x128xbf16, #tpu.memory_space<vmem>>, %arg5: memref<1x128x128xbf16, #tpu.memory_space<vmem>>, %arg6: memref<1x128xf32, #tpu.memory_space<vmem>>, %arg7: memref<32x128xbf16, #tpu.memory_space<vmem>>, %arg8: memref<32x128xf32, #tpu.memory_space<vmem>>) attributes {dimension_semantics = [#tpu.dimension_semantics<parallel>, #tpu.dimension_semantics<parallel>, #tpu.dimension_semantics<arbitrary>, #tpu.dimension_semantics<arbitrary>], iteration_bounds = array<i64: 1, 1, 9, 1>, scalar_prefetch = 0 : i64, scratch_operands = 1 : i64, tpu.core_type = #tpu.core_type<tc>, window_params = [{transform_indices = @transform_0, window_bounds = array<i64: 1, 32, 128>}, {transform_indices = @transform_1, window_bounds = array<i64: 1, 128, 128>}, {transform_indices = @transform_2, window_bounds = array<i64: 1, 128>}, {transform_indices = @transform_3, window_bounds = array<i64: 32, 128>}]} {
    %c0_i32 = arith.constant 0 : i32
    %0 = arith.cmpi eq, %arg2, %c0_i32 : i32
    %c0_i32_0 = arith.constant 0 : i32
    %1 = arith.cmpi eq, %arg3, %c0_i32_0 : i32
    %2 = arith.andi %0, %1 : i1
    %3 = arith.extui %2 : i1 to i32
    %c0_i32_1 = arith.constant 0 : i32
    %4 = arith.cmpi ne, %3, %c0_i32_1 : i32
    scf.if %4 {
      %cst_13 = arith.constant 0.000000e+00 : f32
      %18 = vector.broadcast %cst_13 : f32 to vector<32x128xf32>
      %c0_14 = arith.constant 0 : index
      %c0_15 = arith.constant 0 : index
      %19 = vector.load %arg8[%c0_14, %c0_15] : memref<32x128xf32, #tpu.memory_space<vmem>>, vector<32x128xf32>
      tpu.vector_store %arg8[%c0_14, %c0_15], %18 {strides = array<i32>} : memref<32x128xf32, #tpu.memory_space<vmem>>, vector<32x128xf32>,
    } else {
    }
    %c0 = arith.constant 0 : index
    %c0_2 = arith.constant 0 : index
    %5 = vector.load %arg8[%c0, %c0_2] : memref<32x128xf32, #tpu.memory_space<vmem>>, vector<32x128xf32>
    %c0_3 = arith.constant 0 : index
    %c0_4 = arith.constant 0 : index
    %c0_5 = arith.constant 0 : index
    %6 = vector.load %arg4[%c0_3, %c0_4, %c0_5] : memref<1x32x128xbf16, #tpu.memory_space<vmem>>, vector<1x32x128xbf16>
    %7 = vector.shape_cast %6 : vector<1x32x128xbf16> to vector<32x128xbf16>
    %c0_6 = arith.constant 0 : index
    %c0_7 = arith.constant 0 : index
    %c0_8 = arith.constant 0 : index
    %8 = vector.load %arg5[%c0_6, %c0_7, %c0_8] : memref<1x128x128xbf16, #tpu.memory_space<vmem>>, vector<1x128x128xbf16>
    %9 = vector.shape_cast %8 : vector<1x128x128xbf16> to vector<128x128xbf16>
    %cst = arith.constant dense<0.000000e+00> : vector<32x128xf32>
    %10 = tpu.matmul %7, %9, %cst {dimension_numbers = #tpu.dot_dimension_numbers<[1], [0], [0], [1], [0, 0, 1, 1], [], []>} : vector<32x128xbf16>, vector<128x128xbf16>, vector<32x128xf32> -> vector<32x128xf32>
    %11 = arith.addf %5, %10 : vector<32x128xf32>
    %c0_9 = arith.constant 0 : index
    %c0_10 = arith.constant 0 : index
    %12 = vector.load %arg8[%c0_9, %c0_10] : memref<32x128xf32, #tpu.memory_space<vmem>>, vector<32x128xf32>
    tpu.vector_store %arg8[%c0_9, %c0_10], %11 {strides = array<i32>} : memref<32x128xf32, #tpu.memory_space<vmem>>, vector<32x128xf32>,
    %c8_i32 = arith.constant 8 : i32
    %13 = arith.cmpi eq, %arg2, %c8_i32 : i32
    %c0_i32_11 = arith.constant 0 : i32
    %14 = arith.cmpi eq, %arg3, %c0_i32_11 : i32
    %15 = arith.andi %13, %14 : i1
    %16 = arith.extui %15 : i1 to i32
    %c0_i32_12 = arith.constant 0 : i32
    %17 = arith.cmpi ne, %16, %c0_i32_12 : i32
    scf.if %17 {
      %c0_13 = arith.constant 0 : index
      %c0_14 = arith.constant 0 : index
      %18 = vector.load %arg8[%c0_13, %c0_14] : memref<32x128xf32, #tpu.memory_space<vmem>>, vector<32x128xf32>
      %c0_15 = arith.constant 0 : index
      %c0_16 = arith.constant 0 : index
      %19 = vector.load %arg6[%c0_15, %c0_16] : memref<1x128xf32, #tpu.memory_space<vmem>>, vector<1x128xf32>
      %20 = vector.broadcast %19 : vector<1x128xf32> to vector<32x128xf32>
      %21 = arith.addf %18, %20 : vector<32x128xf32>
      %cst_17 = arith.constant 0.000000e+00 : f32
      %22 = vector.broadcast %cst_17 : f32 to vector<32x128xf32>
      %23 = arith.maximumf %21, %22 : vector<32x128xf32>
      %24 = arith.truncf %23 : vector<32x128xf32> to vector<32x128xbf16>
      %c0_18 = arith.constant 0 : index
      %c0_19 = arith.constant 0 : index
      %25 = vector.load %arg7[%c0_18, %c0_19] : memref<32x128xbf16, #tpu.memory_space<vmem>>, vector<32x128xbf16>
      tpu.vector_store %arg7[%c0_18, %c0_19], %24 {strides = array<i32>} : memref<32x128xbf16, #tpu.memory_space<vmem>>, vector<32x128xbf16>,
    } else {
    }
    return
  }
  func.func @transform_0(%arg0: i32, %arg1: i32, %arg2: i32, %arg3: i32) -> (i32, i32, i32) {
    %c0_i32 = arith.constant 0 : i32
    return %arg2, %arg0, %arg3 : i32, i32, i32
  }
  func.func @transform_1(%arg0: i32, %arg1: i32, %arg2: i32, %arg3: i32) -> (i32, i32, i32) {
    %c0_i32 = arith.constant 0 : i32
    return %arg2, %arg3, %arg1 : i32, i32, i32
  }
  func.func @transform_2(%arg0: i32, %arg1: i32, %arg2: i32, %arg3: i32) -> (i32, i32) {
    %c0_i32 = arith.constant 0 : i32
    %c0_i32_0 = arith.constant 0 : i32
    return %c0_i32, %arg1 : i32, i32
  }
  func.func @transform_3(%arg0: i32, %arg1: i32, %arg2: i32, %arg3: i32) -> (i32, i32) {
    %c0_i32 = arith.constant 0 : i32
    return %arg0, %arg1 : i32, i32
  }
}

module attributes {stable_mosaic.version = 11 : i64} {
  func.func @_mm_bias_res_relu_kernel(%arg0: i32, %arg1: i32, %arg2: i32, %arg3: i32, %arg4: memref<1x32x128xbf16, #tpu.memory_space<vmem>>, %arg5: memref<1x128x256xbf16, #tpu.memory_space<vmem>>, %arg6: memref<1x256xf32, #tpu.memory_space<vmem>>, %arg7: memref<32x256xbf16, #tpu.memory_space<vmem>>, %arg8: memref<32x256xbf16, #tpu.memory_space<vmem>>, %arg9: memref<32x256xf32, #tpu.memory_space<vmem>>) attributes {dimension_semantics = [#tpu.dimension_semantics<parallel>, #tpu.dimension_semantics<parallel>, #tpu.dimension_semantics<arbitrary>, #tpu.dimension_semantics<arbitrary>], iteration_bounds = array<i64: 1, 1, 1, 1>, scalar_prefetch = 0 : i64, scratch_operands = 1 : i64, tpu.core_type = #tpu.core_type<tc>, window_params = [{transform_indices = @transform_0, window_bounds = array<i64: 1, 32, 128>}, {transform_indices = @transform_1, window_bounds = array<i64: 1, 128, 256>}, {transform_indices = @transform_2, window_bounds = array<i64: 1, 256>}, {transform_indices = @transform_3, window_bounds = array<i64: 32, 256>}, {transform_indices = @transform_4, window_bounds = array<i64: 32, 256>}]} {
    %c0_i32 = arith.constant 0 : i32
    %0 = arith.cmpi eq, %arg2, %c0_i32 : i32
    %c0_i32_0 = arith.constant 0 : i32
    %1 = arith.cmpi eq, %arg3, %c0_i32_0 : i32
    %2 = arith.andi %0, %1 : i1
    %3 = arith.extui %2 : i1 to i32
    %c0_i32_1 = arith.constant 0 : i32
    %4 = arith.cmpi ne, %3, %c0_i32_1 : i32
    scf.if %4 {
      %cst_14 = arith.constant 0.000000e+00 : f32
      %18 = vector.broadcast %cst_14 : f32 to vector<32x256xf32>
      %c0_15 = arith.constant 0 : index
      %c0_16 = arith.constant 0 : index
      %19 = vector.load %arg9[%c0_15, %c0_16] : memref<32x256xf32, #tpu.memory_space<vmem>>, vector<32x256xf32>
      tpu.vector_store %arg9[%c0_15, %c0_16], %18 {strides = array<i32>} : memref<32x256xf32, #tpu.memory_space<vmem>>, vector<32x256xf32>,
    } else {
    }
    %c0 = arith.constant 0 : index
    %c0_2 = arith.constant 0 : index
    %5 = vector.load %arg9[%c0, %c0_2] : memref<32x256xf32, #tpu.memory_space<vmem>>, vector<32x256xf32>
    %c0_3 = arith.constant 0 : index
    %c0_4 = arith.constant 0 : index
    %c0_5 = arith.constant 0 : index
    %6 = vector.load %arg4[%c0_3, %c0_4, %c0_5] : memref<1x32x128xbf16, #tpu.memory_space<vmem>>, vector<1x32x128xbf16>
    %7 = vector.shape_cast %6 : vector<1x32x128xbf16> to vector<32x128xbf16>
    %c0_6 = arith.constant 0 : index
    %c0_7 = arith.constant 0 : index
    %c0_8 = arith.constant 0 : index
    %8 = vector.load %arg5[%c0_6, %c0_7, %c0_8] : memref<1x128x256xbf16, #tpu.memory_space<vmem>>, vector<1x128x256xbf16>
    %9 = vector.shape_cast %8 : vector<1x128x256xbf16> to vector<128x256xbf16>
    %cst = arith.constant dense<0.000000e+00> : vector<32x256xf32>
    %10 = tpu.matmul %7, %9, %cst {dimension_numbers = #tpu.dot_dimension_numbers<[1], [0], [0], [1], [0, 0, 1, 1], [], []>} : vector<32x128xbf16>, vector<128x256xbf16>, vector<32x256xf32> -> vector<32x256xf32>
    %11 = arith.addf %5, %10 : vector<32x256xf32>
    %c0_9 = arith.constant 0 : index
    %c0_10 = arith.constant 0 : index
    %12 = vector.load %arg9[%c0_9, %c0_10] : memref<32x256xf32, #tpu.memory_space<vmem>>, vector<32x256xf32>
    tpu.vector_store %arg9[%c0_9, %c0_10], %11 {strides = array<i32>} : memref<32x256xf32, #tpu.memory_space<vmem>>, vector<32x256xf32>,
    %c0_i32_11 = arith.constant 0 : i32
    %13 = arith.cmpi eq, %arg2, %c0_i32_11 : i32
    %c0_i32_12 = arith.constant 0 : i32
    %14 = arith.cmpi eq, %arg3, %c0_i32_12 : i32
    %15 = arith.andi %13, %14 : i1
    %16 = arith.extui %15 : i1 to i32
    %c0_i32_13 = arith.constant 0 : i32
    %17 = arith.cmpi ne, %16, %c0_i32_13 : i32
    scf.if %17 {
      %c0_14 = arith.constant 0 : index
      %c0_15 = arith.constant 0 : index
      %18 = vector.load %arg9[%c0_14, %c0_15] : memref<32x256xf32, #tpu.memory_space<vmem>>, vector<32x256xf32>
      %c0_16 = arith.constant 0 : index
      %c0_17 = arith.constant 0 : index
      %19 = vector.load %arg6[%c0_16, %c0_17] : memref<1x256xf32, #tpu.memory_space<vmem>>, vector<1x256xf32>
      %20 = vector.broadcast %19 : vector<1x256xf32> to vector<32x256xf32>
      %21 = arith.addf %18, %20 : vector<32x256xf32>
      %c0_18 = arith.constant 0 : index
      %c0_19 = arith.constant 0 : index
      %22 = vector.load %arg7[%c0_18, %c0_19] : memref<32x256xbf16, #tpu.memory_space<vmem>>, vector<32x256xbf16>
      %23 = arith.extf %22 : vector<32x256xbf16> to vector<32x256xf32>
      %24 = arith.addf %21, %23 : vector<32x256xf32>
      %cst_20 = arith.constant 0.000000e+00 : f32
      %25 = vector.broadcast %cst_20 : f32 to vector<32x256xf32>
      %26 = arith.maximumf %24, %25 : vector<32x256xf32>
      %27 = arith.truncf %26 : vector<32x256xf32> to vector<32x256xbf16>
      %c0_21 = arith.constant 0 : index
      %c0_22 = arith.constant 0 : index
      %28 = vector.load %arg8[%c0_21, %c0_22] : memref<32x256xbf16, #tpu.memory_space<vmem>>, vector<32x256xbf16>
      tpu.vector_store %arg8[%c0_21, %c0_22], %27 {strides = array<i32>} : memref<32x256xbf16, #tpu.memory_space<vmem>>, vector<32x256xbf16>,
    } else {
    }
    return
  }
  func.func @transform_0(%arg0: i32, %arg1: i32, %arg2: i32, %arg3: i32) -> (i32, i32, i32) {
    %c0_i32 = arith.constant 0 : i32
    return %arg2, %arg0, %arg3 : i32, i32, i32
  }
  func.func @transform_1(%arg0: i32, %arg1: i32, %arg2: i32, %arg3: i32) -> (i32, i32, i32) {
    %c0_i32 = arith.constant 0 : i32
    return %arg2, %arg3, %arg1 : i32, i32, i32
  }
  func.func @transform_2(%arg0: i32, %arg1: i32, %arg2: i32, %arg3: i32) -> (i32, i32) {
    %c0_i32 = arith.constant 0 : i32
    %c0_i32_0 = arith.constant 0 : i32
    return %c0_i32, %arg1 : i32, i32
  }
  func.func @transform_3(%arg0: i32, %arg1: i32, %arg2: i32, %arg3: i32) -> (i32, i32) {
    %c0_i32 = arith.constant 0 : i32
    return %arg0, %arg1 : i32, i32
  }
  func.func @transform_4(%arg0: i32, %arg1: i32, %arg2: i32, %arg3: i32) -> (i32, i32) {
    %c0_i32 = arith.constant 0 : i32
    return %arg0, %arg1 : i32, i32
  }
}

module attributes {stable_mosaic.version = 11 : i64} {
  func.func @_mm_bias_kernel(%arg0: i32, %arg1: i32, %arg2: i32, %arg3: i32, %arg4: memref<1x32x128xbf16, #tpu.memory_space<vmem>>, %arg5: memref<1x128x256xbf16, #tpu.memory_space<vmem>>, %arg6: memref<1x256xf32, #tpu.memory_space<vmem>>, %arg7: memref<32x256xbf16, #tpu.memory_space<vmem>>, %arg8: memref<32x256xf32, #tpu.memory_space<vmem>>) attributes {dimension_semantics = [#tpu.dimension_semantics<parallel>, #tpu.dimension_semantics<parallel>, #tpu.dimension_semantics<arbitrary>, #tpu.dimension_semantics<arbitrary>], iteration_bounds = array<i64: 1, 1, 1, 1>, scalar_prefetch = 0 : i64, scratch_operands = 1 : i64, tpu.core_type = #tpu.core_type<tc>, window_params = [{transform_indices = @transform_0, window_bounds = array<i64: 1, 32, 128>}, {transform_indices = @transform_1, window_bounds = array<i64: 1, 128, 256>}, {transform_indices = @transform_2, window_bounds = array<i64: 1, 256>}, {transform_indices = @transform_3, window_bounds = array<i64: 32, 256>}]} {
    %c0_i32 = arith.constant 0 : i32
    %0 = arith.cmpi eq, %arg2, %c0_i32 : i32
    %c0_i32_0 = arith.constant 0 : i32
    %1 = arith.cmpi eq, %arg3, %c0_i32_0 : i32
    %2 = arith.andi %0, %1 : i1
    %3 = arith.extui %2 : i1 to i32
    %c0_i32_1 = arith.constant 0 : i32
    %4 = arith.cmpi ne, %3, %c0_i32_1 : i32
    scf.if %4 {
      %cst_14 = arith.constant 0.000000e+00 : f32
      %18 = vector.broadcast %cst_14 : f32 to vector<32x256xf32>
      %c0_15 = arith.constant 0 : index
      %c0_16 = arith.constant 0 : index
      %19 = vector.load %arg8[%c0_15, %c0_16] : memref<32x256xf32, #tpu.memory_space<vmem>>, vector<32x256xf32>
      tpu.vector_store %arg8[%c0_15, %c0_16], %18 {strides = array<i32>} : memref<32x256xf32, #tpu.memory_space<vmem>>, vector<32x256xf32>,
    } else {
    }
    %c0 = arith.constant 0 : index
    %c0_2 = arith.constant 0 : index
    %5 = vector.load %arg8[%c0, %c0_2] : memref<32x256xf32, #tpu.memory_space<vmem>>, vector<32x256xf32>
    %c0_3 = arith.constant 0 : index
    %c0_4 = arith.constant 0 : index
    %c0_5 = arith.constant 0 : index
    %6 = vector.load %arg4[%c0_3, %c0_4, %c0_5] : memref<1x32x128xbf16, #tpu.memory_space<vmem>>, vector<1x32x128xbf16>
    %7 = vector.shape_cast %6 : vector<1x32x128xbf16> to vector<32x128xbf16>
    %c0_6 = arith.constant 0 : index
    %c0_7 = arith.constant 0 : index
    %c0_8 = arith.constant 0 : index
    %8 = vector.load %arg5[%c0_6, %c0_7, %c0_8] : memref<1x128x256xbf16, #tpu.memory_space<vmem>>, vector<1x128x256xbf16>
    %9 = vector.shape_cast %8 : vector<1x128x256xbf16> to vector<128x256xbf16>
    %cst = arith.constant dense<0.000000e+00> : vector<32x256xf32>
    %10 = tpu.matmul %7, %9, %cst {dimension_numbers = #tpu.dot_dimension_numbers<[1], [0], [0], [1], [0, 0, 1, 1], [], []>} : vector<32x128xbf16>, vector<128x256xbf16>, vector<32x256xf32> -> vector<32x256xf32>
    %11 = arith.addf %5, %10 : vector<32x256xf32>
    %c0_9 = arith.constant 0 : index
    %c0_10 = arith.constant 0 : index
    %12 = vector.load %arg8[%c0_9, %c0_10] : memref<32x256xf32, #tpu.memory_space<vmem>>, vector<32x256xf32>
    tpu.vector_store %arg8[%c0_9, %c0_10], %11 {strides = array<i32>} : memref<32x256xf32, #tpu.memory_space<vmem>>, vector<32x256xf32>,
    %c0_i32_11 = arith.constant 0 : i32
    %13 = arith.cmpi eq, %arg2, %c0_i32_11 : i32
    %c0_i32_12 = arith.constant 0 : i32
    %14 = arith.cmpi eq, %arg3, %c0_i32_12 : i32
    %15 = arith.andi %13, %14 : i1
    %16 = arith.extui %15 : i1 to i32
    %c0_i32_13 = arith.constant 0 : i32
    %17 = arith.cmpi ne, %16, %c0_i32_13 : i32
    scf.if %17 {
      %c0_14 = arith.constant 0 : index
      %c0_15 = arith.constant 0 : index
      %18 = vector.load %arg8[%c0_14, %c0_15] : memref<32x256xf32, #tpu.memory_space<vmem>>, vector<32x256xf32>
      %c0_16 = arith.constant 0 : index
      %c0_17 = arith.constant 0 : index
      %19 = vector.load %arg6[%c0_16, %c0_17] : memref<1x256xf32, #tpu.memory_space<vmem>>, vector<1x256xf32>
      %20 = vector.broadcast %19 : vector<1x256xf32> to vector<32x256xf32>
      %21 = arith.addf %18, %20 : vector<32x256xf32>
      %22 = arith.truncf %21 : vector<32x256xf32> to vector<32x256xbf16>
      %c0_18 = arith.constant 0 : index
      %c0_19 = arith.constant 0 : index
      %23 = vector.load %arg7[%c0_18, %c0_19] : memref<32x256xbf16, #tpu.memory_space<vmem>>, vector<32x256xbf16>
      tpu.vector_store %arg7[%c0_18, %c0_19], %22 {strides = array<i32>} : memref<32x256xbf16, #tpu.memory_space<vmem>>, vector<32x256xbf16>,
    } else {
    }
    return
  }
  func.func @transform_0(%arg0: i32, %arg1: i32, %arg2: i32, %arg3: i32) -> (i32, i32, i32) {
    %c0_i32 = arith.constant 0 : i32
    return %arg2, %arg0, %arg3 : i32, i32, i32
  }
  func.func @transform_1(%arg0: i32, %arg1: i32, %arg2: i32, %arg3: i32) -> (i32, i32, i32) {
    %c0_i32 = arith.constant 0 : i32
    return %arg2, %arg3, %arg1 : i32, i32, i32
  }
  func.func @transform_2(%arg0: i32, %arg1: i32, %arg2: i32, %arg3: i32) -> (i32, i32) {
    %c0_i32 = arith.constant 0 : i32
    %c0_i32_0 = arith.constant 0 : i32
    return %c0_i32, %arg1 : i32, i32
  }
  func.func @transform_3(%arg0: i32, %arg1: i32, %arg2: i32, %arg3: i32) -> (i32, i32) {
    %c0_i32 = arith.constant 0 : i32
    return %arg0, %arg1 : i32, i32
  }
}

module attributes {stable_mosaic.version = 11 : i64} {
  func.func @_mm_bias_kernel(%arg0: i32, %arg1: i32, %arg2: i32, %arg3: i32, %arg4: memref<1x32x256xbf16, #tpu.memory_space<vmem>>, %arg5: memref<1x256x128xbf16, #tpu.memory_space<vmem>>, %arg6: memref<1x128xf32, #tpu.memory_space<vmem>>, %arg7: memref<32x128xbf16, #tpu.memory_space<vmem>>, %arg8: memref<32x128xf32, #tpu.memory_space<vmem>>) attributes {dimension_semantics = [#tpu.dimension_semantics<parallel>, #tpu.dimension_semantics<parallel>, #tpu.dimension_semantics<arbitrary>, #tpu.dimension_semantics<arbitrary>], iteration_bounds = array<i64: 1, 1, 1, 1>, scalar_prefetch = 0 : i64, scratch_operands = 1 : i64, tpu.core_type = #tpu.core_type<tc>, window_params = [{transform_indices = @transform_0, window_bounds = array<i64: 1, 32, 256>}, {transform_indices = @transform_1, window_bounds = array<i64: 1, 256, 128>}, {transform_indices = @transform_2, window_bounds = array<i64: 1, 128>}, {transform_indices = @transform_3, window_bounds = array<i64: 32, 128>}]} {
    %c0_i32 = arith.constant 0 : i32
    %0 = arith.cmpi eq, %arg2, %c0_i32 : i32
    %c0_i32_0 = arith.constant 0 : i32
    %1 = arith.cmpi eq, %arg3, %c0_i32_0 : i32
    %2 = arith.andi %0, %1 : i1
    %3 = arith.extui %2 : i1 to i32
    %c0_i32_1 = arith.constant 0 : i32
    %4 = arith.cmpi ne, %3, %c0_i32_1 : i32
    scf.if %4 {
      %cst_14 = arith.constant 0.000000e+00 : f32
      %18 = vector.broadcast %cst_14 : f32 to vector<32x128xf32>
      %c0_15 = arith.constant 0 : index
      %c0_16 = arith.constant 0 : index
      %19 = vector.load %arg8[%c0_15, %c0_16] : memref<32x128xf32, #tpu.memory_space<vmem>>, vector<32x128xf32>
      tpu.vector_store %arg8[%c0_15, %c0_16], %18 {strides = array<i32>} : memref<32x128xf32, #tpu.memory_space<vmem>>, vector<32x128xf32>,
    } else {
    }
    %c0 = arith.constant 0 : index
    %c0_2 = arith.constant 0 : index
    %5 = vector.load %arg8[%c0, %c0_2] : memref<32x128xf32, #tpu.memory_space<vmem>>, vector<32x128xf32>
    %c0_3 = arith.constant 0 : index
    %c0_4 = arith.constant 0 : index
    %c0_5 = arith.constant 0 : index
    %6 = vector.load %arg4[%c0_3, %c0_4, %c0_5] : memref<1x32x256xbf16, #tpu.memory_space<vmem>>, vector<1x32x256xbf16>
    %7 = vector.shape_cast %6 : vector<1x32x256xbf16> to vector<32x256xbf16>
    %c0_6 = arith.constant 0 : index
    %c0_7 = arith.constant 0 : index
    %c0_8 = arith.constant 0 : index
    %8 = vector.load %arg5[%c0_6, %c0_7, %c0_8] : memref<1x256x128xbf16, #tpu.memory_space<vmem>>, vector<1x256x128xbf16>
    %9 = vector.shape_cast %8 : vector<1x256x128xbf16> to vector<256x128xbf16>
    %cst = arith.constant dense<0.000000e+00> : vector<32x128xf32>
    %10 = tpu.matmul %7, %9, %cst {dimension_numbers = #tpu.dot_dimension_numbers<[1], [0], [0], [1], [0, 0, 1, 1], [], []>} : vector<32x256xbf16>, vector<256x128xbf16>, vector<32x128xf32> -> vector<32x128xf32>
    %11 = arith.addf %5, %10 : vector<32x128xf32>
    %c0_9 = arith.constant 0 : index
    %c0_10 = arith.constant 0 : index
    %12 = vector.load %arg8[%c0_9, %c0_10] : memref<32x128xf32, #tpu.memory_space<vmem>>, vector<32x128xf32>
    tpu.vector_store %arg8[%c0_9, %c0_10], %11 {strides = array<i32>} : memref<32x128xf32, #tpu.memory_space<vmem>>, vector<32x128xf32>,
    %c0_i32_11 = arith.constant 0 : i32
    %13 = arith.cmpi eq, %arg2, %c0_i32_11 : i32
    %c0_i32_12 = arith.constant 0 : i32
    %14 = arith.cmpi eq, %arg3, %c0_i32_12 : i32
    %15 = arith.andi %13, %14 : i1
    %16 = arith.extui %15 : i1 to i32
    %c0_i32_13 = arith.constant 0 : i32
    %17 = arith.cmpi ne, %16, %c0_i32_13 : i32
    scf.if %17 {
      %c0_14 = arith.constant 0 : index
      %c0_15 = arith.constant 0 : index
      %18 = vector.load %arg8[%c0_14, %c0_15] : memref<32x128xf32, #tpu.memory_space<vmem>>, vector<32x128xf32>
      %c0_16 = arith.constant 0 : index
      %c0_17 = arith.constant 0 : index
      %19 = vector.load %arg6[%c0_16, %c0_17] : memref<1x128xf32, #tpu.memory_space<vmem>>, vector<1x128xf32>
      %20 = vector.broadcast %19 : vector<1x128xf32> to vector<32x128xf32>
      %21 = arith.addf %18, %20 : vector<32x128xf32>
      %cst_18 = arith.constant 0.000000e+00 : f32
      %22 = vector.broadcast %cst_18 : f32 to vector<32x128xf32>
      %23 = arith.maximumf %21, %22 : vector<32x128xf32>
      %24 = arith.truncf %23 : vector<32x128xf32> to vector<32x128xbf16>
      %c0_19 = arith.constant 0 : index
      %c0_20 = arith.constant 0 : index
      %25 = vector.load %arg7[%c0_19, %c0_20] : memref<32x128xbf16, #tpu.memory_space<vmem>>, vector<32x128xbf16>
      tpu.vector_store %arg7[%c0_19, %c0_20], %24 {strides = array<i32>} : memref<32x128xbf16, #tpu.memory_space<vmem>>, vector<32x128xbf16>,
    } else {
    }
    return
  }
  func.func @transform_0(%arg0: i32, %arg1: i32, %arg2: i32, %arg3: i32) -> (i32, i32, i32) {
    %c0_i32 = arith.constant 0 : i32
    return %arg2, %arg0, %arg3 : i32, i32, i32
  }
  func.func @transform_1(%arg0: i32, %arg1: i32, %arg2: i32, %arg3: i32) -> (i32, i32, i32) {
    %c0_i32 = arith.constant 0 : i32
    return %arg2, %arg3, %arg1 : i32, i32, i32
  }
  func.func @transform_2(%arg0: i32, %arg1: i32, %arg2: i32, %arg3: i32) -> (i32, i32) {
    %c0_i32 = arith.constant 0 : i32
    %c0_i32_0 = arith.constant 0 : i32
    return %c0_i32, %arg1 : i32, i32
  }
  func.func @transform_3(%arg0: i32, %arg1: i32, %arg2: i32, %arg3: i32) -> (i32, i32) {
    %c0_i32 = arith.constant 0 : i32
    return %arg0, %arg1 : i32, i32
  }
}

</mosaic_0001>

<llo_original>
// kernel: backbone_stage_forward.13
$region0: #{backbone_stage_forward.13}
  #allocation0 [shape = 'u32[]', space=smem, size = 0x4, offset = 0x4, fixed_abs, tag = 'smem constant byte address 0x4 - core index']
  #allocation1 [shape = 'u32[144,128]{1,0:T(1,128)}', space=vmem, size = 0x12000, scoped, tag = 'internal scratch']
  %s0 = inlined_call_operand.vmem [shape: bf16[32,128], index: 0, kind: input, shape index: {}]
  %s1 = inlined_call_operand.vmem [shape: bf16[32,128], index: 1, kind: input, shape index: {}]
  %s2 = inlined_call_operand.vmem [shape: bf16[32,128], index: 2, kind: input, shape index: {}]
  %s3 = inlined_call_operand.vmem [shape: bf16[32,128], index: 3, kind: output, shape index: {}]
  %s4 = sld [smem:[#allocation0]]
  $region22: #{backbone_stage_forward.13} parent=0
    _
  %s6 = ssub.s32 1, %s4
  %s7 = scalar_select 0, %s6, %s4
  // Predicated region
  $region2: #{backbone_stage_forward.13} parent=0 // pred_check
    _
  $region3: #{backbone_stage_forward.13} parent=0 // pred_check_branch
    %9 = sbr.rel (0) target = $region5
  $region4: #{backbone_stage_forward.13} parent=0 // pred_region
    _
  $region5: #{backbone_stage_forward.13} parent=0 // pred_fallthru
    _
  // Predicated region
  $region6: #{backbone_stage_forward.13} parent=0 // pred_check
    _
  $region7: #{backbone_stage_forward.13} parent=0 // pred_check_branch
    %11 = sbr.rel (0) target = $region9
  $region8: #{backbone_stage_forward.13} parent=0 // pred_region
    _
  $region9: #{backbone_stage_forward.13} parent=0 // pred_fallthru
    _
  // Predicated region
  $region10: #{backbone_stage_forward.13} parent=0 // pred_check
    _
  $region11: #{backbone_stage_forward.13} parent=0 // pred_check_branch
    %13 = sbr.rel (0) target = $region13
  $region12: #{backbone_stage_forward.13} parent=0 // pred_region
    _
  $region13: #{backbone_stage_forward.13} parent=0 // pred_fallthru
    _
  %v14 = vld [vmem:[%s0] sm:$0xf]
  %v15 = vld [vmem:[%s0 + $0x4] sm:$0xf]
  %v16 = vld [vmem:[%s0 + $0x8] sm:$0xf]
  %v17 = vld [vmem:[%s0 + $0xc] sm:$0xf]
  %v18 = vld [vmem:[%s1] sm:$0xf]
  %v19 = vld [vmem:[%s1 + $0x4] sm:$0xf]
  %v20 = vld [vmem:[%s1 + $0x8] sm:$0xf]
  %v21 = vld [vmem:[%s1 + $0xc] sm:$0xf]
  %v22 = vmax.bf16 %v14, %v18
  %v23 = vmax.bf16 %v15, %v19
  %v24 = vmax.bf16 %v16, %v20
  %v25 = vmax.bf16 %v17, %v21
  %v26 = vld [vmem:[%s2] sm:$0xf]
  %v27 = vld [vmem:[%s2 + $0x4] sm:$0xf]
  %v28 = vld [vmem:[%s2 + $0x8] sm:$0xf]
  %v29 = vld [vmem:[%s2 + $0xc] sm:$0xf]
  %v30 = vmax.bf16 %v22, %v26
  %v31 = vmax.bf16 %v23, %v27
  %v32 = vmax.bf16 %v24, %v28
  %v33 = vmax.bf16 %v25, %v29
  %34 = vst [vmem:[%s3] sm:$0xf] %v30
  %35 = vst [vmem:[%s3 + $0x4] sm:$0xf] %v31
  %36 = vst [vmem:[%s3 + $0x8] sm:$0xf] %v32
  %37 = vst [vmem:[%s3 + $0xc] sm:$0xf] %v33
  // Predicated region
  $region14: #{backbone_stage_forward.13} parent=0 // pred_check
    _
  $region15: #{backbone_stage_forward.13} parent=0 // pred_check_branch
    %39 = sbr.rel (0) target = $region17
  $region16: #{backbone_stage_forward.13} parent=0 // pred_region
    _
  $region17: #{backbone_stage_forward.13} parent=0 // pred_fallthru
    _
  // Predicated region
  $region18: #{backbone_stage_forward.13} parent=0 // pred_check
    _
  $region19: #{backbone_stage_forward.13} parent=0 // pred_check_branch
    %41 = sbr.rel (0) target = $region21
  $region20: #{backbone_stage_forward.13} parent=0 // pred_region
    _
  $region21: #{backbone_stage_forward.13} parent=0 // pred_fallthru
    _

// kernel: backbone_stage_forward.12
$region0: #{backbone_stage_forward.12}
  #allocation0 [shape = 'u32[]', space=smem, size = 0x4, offset = 0x4, fixed_abs, tag = 'smem constant byte address 0x4 - core index']
  #allocation1 [shape = 'u32[144,128]{1,0:T(1,128)}', space=vmem, size = 0x12000, scoped, tag = 'internal scratch']
  #allocation2 [shape = 'f32[128,128]{1,0:T(8,128)}', space=vmem, size = 0x10000, scoped, tag = 'scratch operand']
  %s0 = inlined_call_operand.vmem [shape: bf16[49,128,3], index: 0, kind: input, shape index: {}]
  %s1 = inlined_call_operand.vmem [shape: bf16[49,3,128], index: 1, kind: input, shape index: {}]
  %s2 = inlined_call_operand.vmem [shape: f32[1,128], index: 2, kind: input, shape index: {}]
  %s3 = inlined_call_operand.vmem [shape: bf16[128,128], index: 3, kind: output, shape index: {}]
  %s4 = sld [smem:[#allocation0]]
  $region53: #{backbone_stage_forward.12} parent=0
    _
  %s6 = ssub.s32 1, %s4
  %s7 = scalar_select 0, %s6, %s4
  loop: start=0, step=1, limit=51
  $region2: #{backbone_stage_forward.12} parent=0 // loop_pre_header
    _
  $region3: #{backbone_stage_forward.12} parent=0 // loop_header
    %s9 = sphi 0, %s13
    %p10 = scmp.ge.s32.totalorder %s9, 51
    %s16 = sphi 0, %s42
    %s17 = sphi 0, %s38
    %s18 = sphi 0, %s34
    %s19 = sphi 0, %s30
    %s20 = sphi 0, %s16
    %s21 = sphi 0, %s17
    %s22 = sphi 0, %s18
    %s23 = sphi 0, %s19
    %s24 = sphi 0, %s20
    %s25 = sphi 0, %s21
    %s26 = sphi 0, %s22
    %s27 = sphi 0, %s23
    %s49 = sphi 0, %s51
    %s52 = sphi 0, %s49
    %s53 = sphi 0, %s52
    %s69 = sphi 0, %s53
    %s79 = sphi 0, %s81
    %s82 = sphi 0, %s79
    %s83 = sphi 0, %s82
    %s99 = sphi 0, %s83
    %s105 = sphi 0, %s107
    %s108 = sphi 0, %s105
    %s109 = sphi 0, %s108
    %s125 = sphi 0, %s109
    %s133 = sphi 0, %s135
    %s136 = sphi 0, %s133
    %s137 = sphi 0, %s136
    %s153 = sphi 0, %s137
  $region4: #{backbone_stage_forward.12} parent=0 // loop_header_branch
    %12 = sbr.rel (%p10) target = $region8
  $region5: #{backbone_stage_forward.12} parent=0 // loop_body
    %s14 = ssub.s32 %s9, 1
    %s15 = ssub.s32 %s9, 2
    %s28 = sadd.s32 1, %s19
    %p29 = scmp.ge.s32.totalorder %s28, 1
    %s30 = scalar_select %p29, 0, %s28
    %s31 = sadd.s32 1, %s18
    %s32 = scalar_select %p29, %s31, %s18
    %p33 = scmp.ge.s32.totalorder %s32, 49
    %s34 = scalar_select %p33, 0, %s32
    %s35 = sadd.s32 1, %s17
    %s36 = scalar_select %p33, %s35, %s17
    %p37 = scmp.ge.s32.totalorder %s36, 1
    %s38 = scalar_select %p37, 0, %s36
    %s39 = sadd.s32 1, %s16
    %s40 = scalar_select %p37, %s39, %s16
    %p41 = scmp.ge.s32.totalorder %s40, 1
    %s42 = scalar_select %p41, 0, %s40
    %s43 = ssub.s32 %s18, %s34
    %s44 = ssub.s32 %s16, %s42
    %s45 = sor.u32 %s43, %s44
    %s46 = ssub.s32 %s19, %s30
    %s47 = sor.u32 %s45, %s46
    %p48 = scmp.eq.s32.totalorder %s47, 0
    %s50 = sadd.s32 %s49, 1
    %s51 = scalar_select %p48, %s49, %s50
    %p54 = pneg %p48
    %p55 = scmp.eq.s32.totalorder %s9, 48
    %p56 = por %p54, %p55
    %p57 = scmp.ne.s32.totalorder %s49, %s52
    %p58 = scmp.eq.s32.totalorder %s9, 0
    %p59 = por %p57, %p58
    %p60 = scmp.ne.s32.totalorder %s49, %s52
    %p61 = scmp.eq.s32.totalorder %s14, 48
    %p62 = por %p60, %p61
    %p63 = scmp.ne.s32.totalorder %s52, %s53
    %p64 = scmp.eq.s32.totalorder %s14, 0
    %p65 = por %p63, %p64
    %p66 = scmp.ne.s32.totalorder %s52, %s53
    %p67 = scmp.eq.s32.totalorder %s15, 48
    %p68 = por %p66, %p67
    %p70 = scmp.ne.s32.totalorder %s53, %s69
    %p71 = scmp.eq.s32.totalorder %s15, 0
    %p72 = por %p70, %p71
    %s73 = ssub.s32 %s18, %s34
    %s74 = ssub.s32 %s19, %s30
    %s75 = sor.u32 %s73, %s74
    %s76 = ssub.s32 %s17, %s38
    %s77 = sor.u32 %s75, %s76
    %p78 = scmp.eq.s32.totalorder %s77, 0
    %s80 = sadd.s32 %s79, 1
    %s81 = scalar_select %p78, %s79, %s80
    %p84 = pneg %p78
    %p85 = scmp.eq.s32.totalorder %s9, 48
    %p86 = por %p84, %p85
    %p87 = scmp.ne.s32.totalorder %s79, %s82
    %p88 = scmp.eq.s32.totalorder %s9, 0
    %p89 = por %p87, %p88
    %p90 = scmp.ne.s32.totalorder %s79, %s82
    %p91 = scmp.eq.s32.totalorder %s14, 48
    %p92 = por %p90, %p91
    %p93 = scmp.ne.s32.totalorder %s82, %s83
    %p94 = scmp.eq.s32.totalorder %s14, 0
    %p95 = por %p93, %p94
    %p96 = scmp.ne.s32.totalorder %s82, %s83
    %p97 = scmp.eq.s32.totalorder %s15, 48
    %p98 = por %p96, %p97
    %p100 = scmp.ne.s32.totalorder %s83, %s99
    %p101 = scmp.eq.s32.totalorder %s15, 0
    %p102 = por %p100, %p101
    %s103 = ssub.s32 %s17, %s38
    %p104 = scmp.eq.s32.totalorder %s103, 0
    %s106 = sadd.s32 %s105, 1
    %s107 = scalar_select %p104, %s105, %s106
    %p110 = pneg %p104
    %p111 = scmp.eq.s32.totalorder %s9, 48
    %p112 = por %p110, %p111
    %p113 = scmp.ne.s32.totalorder %s105, %s108
    %p114 = scmp.eq.s32.totalorder %s9, 0
    %p115 = por %p113, %p114
    %p116 = scmp.ne.s32.totalorder %s105, %s108
    %p117 = scmp.eq.s32.totalorder %s14, 48
    %p118 = por %p116, %p117
    %p119 = scmp.ne.s32.totalorder %s108, %s109
    %p120 = scmp.eq.s32.totalorder %s14, 0
    %p121 = por %p119, %p120
    %p122 = scmp.ne.s32.totalorder %s108, %s109
    %p123 = scmp.eq.s32.totalorder %s15, 48
    %p124 = por %p122, %p123
    %p126 = scmp.ne.s32.totalorder %s109, %s125
    %p127 = scmp.eq.s32.totalorder %s15, 0
    %p128 = por %p126, %p127
    %s129 = ssub.s32 %s16, %s42
    %s130 = ssub.s32 %s17, %s38
    %s131 = sor.u32 %s129, %s130
    %p132 = scmp.eq.s32.totalorder %s131, 0
    %s134 = sadd.s32 %s133, 1
    %s135 = scalar_select %p132, %s133, %s134
    %p138 = pneg %p132
    %p139 = scmp.eq.s32.totalorder %s9, 48
    %p140 = por %p138, %p139
    %p141 = scmp.ne.s32.totalorder %s133, %s136
    %p142 = scmp.eq.s32.totalorder %s9, 0
    %p143 = por %p141, %p142
    %p144 = scmp.ne.s32.totalorder %s133, %s136
    %p145 = scmp.eq.s32.totalorder %s14, 48
    %p146 = por %p144, %p145
    %p147 = scmp.ne.s32.totalorder %s136, %s137
    %p148 = scmp.eq.s32.totalorder %s14, 0
    %p149 = por %p147, %p148
    %p150 = scmp.ne.s32.totalorder %s136, %s137
    %p151 = scmp.eq.s32.totalorder %s15, 48
    %p152 = por %p150, %p151
    %p154 = scmp.ne.s32.totalorder %s137, %s153
    %p155 = scmp.eq.s32.totalorder %s15, 0
    %p156 = por %p154, %p155
    %p157 = scmp.le.s32.totalorder 1, %s9
    %p158 = scmp.lt.s32.totalorder %s9, 50
    %p159 = pnand %p157, %p158
    %p160 = pneg %p159
    // Predicated region
    $region9: #{backbone_stage_forward.12} parent=5 // pred_check
      _
    $region10: #{backbone_stage_forward.12} parent=5 // pred_check_branch
      %162 = sbr.rel (%p159) target = $region12
    $region11: #{backbone_stage_forward.12} parent=5 // pred_region
      %s163 = ssub.s32 %s9, 1
      // Predicated region
      $region13: #{backbone_stage_forward.12} parent=11 // pred_check
        %p164 = pneg %p121
      $region14: #{backbone_stage_forward.12} parent=11 // pred_check_branch
        %166 = sbr.rel (%p164) target = $region16
      $region15: #{backbone_stage_forward.12} parent=11 // pred_region
        %p167 = scmp.lt.s32.totalorder %s21, 0
        %s168 = scalar_select %p167, %s21, 0
        %s169 = scalar_lea.vmem %s2, %s168
      $region16: #{backbone_stage_forward.12} parent=11 // pred_fallthru
        _
    $region12: #{backbone_stage_forward.12} parent=5 // pred_fallthru
      _
    %p170 = scmp.lt.s32.totalorder %s9, 49
    // Predicated region
    $region17: #{backbone_stage_forward.12} parent=5 // pred_check
      %p171 = pneg %p170
    $region18: #{backbone_stage_forward.12} parent=5 // pred_check_branch
      %173 = sbr.rel (%p171) target = $region20
    $region19: #{backbone_stage_forward.12} parent=5 // pred_region
      // Predicated region
      $region21: #{backbone_stage_forward.12} parent=19 // pred_check
        %p174 = pneg %p59
      $region22: #{backbone_stage_forward.12} parent=19 // pred_check_branch
        %176 = sbr.rel (%p174) target = $region24
      $region23: #{backbone_stage_forward.12} parent=19 // pred_region
        %s177 = smul.u32 16, %s16
        %p178 = scmp.lt.s32.totalorder %s18, 48
        %s179 = scalar_select %p178, %s18, 48
        %p180 = scmp.lt.s32.totalorder %s177, 15
        %s181 = scalar_select %p180, %s177, 15
        %p182 = scmp.lt.s32.totalorder %s19, 0
        %s183 = scalar_select %p182, %s19, 0
        %s184 = sadd.s32 %s183, %s181
        %s185 = smul.addr %s179, 16
        %s186 = sadd.s32 %s184, %s185
        %s187 = smul.addr %s186, 4
        %s188 = scalar_lea.vmem %s0, %s187
        %s189 = smul.u32 16, %s16
      $region24: #{backbone_stage_forward.12} parent=19 // pred_fallthru
        _
      // Predicated region
      $region25: #{backbone_stage_forward.12} parent=19 // pred_check
        %p190 = pneg %p89
      $region26: #{backbone_stage_forward.12} parent=19 // pred_check_branch
        %192 = sbr.rel (%p190) target = $region28
      $region27: #{backbone_stage_forward.12} parent=19 // pred_region
        %p193 = scmp.lt.s32.totalorder %s18, 48
        %s194 = scalar_select %p193, %s18, 48
        %p195 = scmp.lt.s32.totalorder %s19, 0
        %s196 = scalar_select %p195, %s19, 0
        %p197 = scmp.lt.s32.totalorder %s17, 0
        %s198 = scalar_select %p197, %s17, 0
        %s199 = sadd.s32 %s198, %s196
        %s200 = sadd.s32 %s199, %s194
        %s201 = smul.addr %s200, 2
        %s202 = scalar_lea.vmem %s1, %s201
      $region28: #{backbone_stage_forward.12} parent=19 // pred_fallthru
        _
    $region20: #{backbone_stage_forward.12} parent=5 // pred_fallthru
      _
    %p203 = scmp.le.s32.totalorder 1, %s9
    %p204 = scmp.lt.s32.totalorder %s9, 50
    %p205 = pnand %p203, %p204
    %p206 = pneg %p205
    // Predicated region
    $region29: #{backbone_stage_forward.12} parent=5 // pred_check
      _
    $region30: #{backbone_stage_forward.12} parent=5 // pred_check_branch
      %208 = sbr.rel (%p205) target = $region32
    $region31: #{backbone_stage_forward.12} parent=5 // pred_region
      %s209 = ssub.s32 %s9, 1
      %s210 = smul.u32 16, %s20
      %p211 = scmp.lt.s32.totalorder %s22, 48
      %s212 = scalar_select %p211, %s22, 48
      %p213 = scmp.lt.s32.totalorder %s210, 15
      %s214 = scalar_select %p213, %s210, 15
      %p215 = scmp.lt.s32.totalorder %s23, 0
      %s216 = scalar_select %p215, %s23, 0
      %s217 = sadd.s32 %s216, %s214
      %s218 = smul.addr %s212, 16
      %s219 = sadd.s32 %s217, %s218
      %s220 = smul.addr %s219, 4
      %s221 = scalar_lea.vmem %s0, %s220
      %p222 = pneg %p65
      %p223 = pneg %p62
      %p224 = scmp.lt.s32.totalorder %s22, 48
      %s225 = scalar_select %p224, %s22, 48
      %p226 = scmp.lt.s32.totalorder %s23, 0
      %s227 = scalar_select %p226, %s23, 0
      %p228 = scmp.lt.s32.totalorder %s21, 0
      %s229 = scalar_select %p228, %s21, 0
      %s230 = sadd.s32 %s229, %s227
      %s231 = sadd.s32 %s230, %s225
      %s232 = smul.addr %s231, 2
      %s233 = scalar_lea.vmem %s1, %s232
      %p234 = pneg %p95
      %p235 = pneg %p92
      %p236 = scmp.lt.s32.totalorder %s21, 0
      %s237 = scalar_select %p236, %s21, 0
      %s238 = scalar_lea.vmem %s2, %s237
      %p239 = pneg %p121
      %p240 = pneg %p118
      %p241 = pneg %p149
      %p242 = pneg %p146
      %s243 = smul.u32 16, %s20
      %p244 = scmp.lt.s32.totalorder %s243, 15
      %s245 = scalar_select %p244, %s243, 15
      %p246 = scmp.lt.s32.totalorder %s21, 0
      %s247 = scalar_select %p246, %s21, 0
      %s248 = sadd.s32 %s247, %s245
      %s249 = smul.addr %s248, 4
      %s250 = scalar_lea.vmem %s3, %s249
      %s251 = smul.u32 16, %s20
      %p252 = scmp.lt.s32.totalorder %s22, 48
      %s253 = scalar_select %p252, %s22, 48
      %p254 = scmp.lt.s32.totalorder %s251, 15
      %s255 = scalar_select %p254, %s251, 15
      %p256 = scmp.lt.s32.totalorder %s23, 0
      %s257 = scalar_select %p256, %s23, 0
      %s258 = sadd.s32 %s257, %s255
      %s259 = smul.addr %s253, 16
      %s260 = sadd.s32 %s258, %s259
      %s261 = smul.addr %s260, 4
      %s262 = scalar_lea.vmem %s0, %s261
      %s263 = smul.u32 16, %s20
      %p264 = scmp.lt.s32.totalorder %s22, 48
      %s265 = scalar_select %p264, %s22, 48
      %p266 = scmp.lt.s32.totalorder %s23, 0
      %s267 = scalar_select %p266, %s23, 0
      %p268 = scmp.lt.s32.totalorder %s21, 0
      %s269 = scalar_select %p268, %s21, 0
      %s270 = sadd.s32 %s269, %s267
      %s271 = sadd.s32 %s270, %s265
      %s272 = smul.addr %s271, 2
      %s273 = scalar_lea.vmem %s1, %s272
      %p274 = scmp.lt.s32.totalorder %s21, 0
      %s275 = scalar_select %p274, %s21, 0
      %s276 = scalar_lea.vmem %s2, %s275
      %s277 = smul.u32 16, %s20
      %p278 = scmp.lt.s32.totalorder %s277, 15
      %s279 = scalar_select %p278, %s277, 15
      %p280 = scmp.lt.s32.totalorder %s21, 0
      %s281 = scalar_select %p280, %s21, 0
      %s282 = sadd.s32 %s281, %s279
      %s283 = smul.addr %s282, 4
      %s284 = scalar_lea.vmem %s3, %s283
      %s285 = smul.u32 16, %s20
      %p287 = scmp.eq.s32.totalorder %s22, 0
      %p288 = scmp.eq.s32.totalorder %s23, 0
      %p289 = pnand %p287, %p288
      %p290 = pneg %p289
      // Predicated region
      $region33: #{backbone_stage_forward.12} parent=31 // pred_check
        _
      $region34: #{backbone_stage_forward.12} parent=31 // pred_check_branch
        %292 = sbr.rel (%p289) target = $region36
      $region35: #{backbone_stage_forward.12} parent=31 // pred_region
        %293 = vst [vmem:[#allocation2] sm:$0xff] 0.0
        %294 = vst [vmem:[#allocation2 + $0x8] sm:$0xff] 0.0
        %295 = vst [vmem:[#allocation2 + $0x10] sm:$0xff] 0.0
        %296 = vst [vmem:[#allocation2 + $0x18] sm:$0xff] 0.0
        %297 = vst [vmem:[#allocation2 + $0x20] sm:$0xff] 0.0
        %298 = vst [vmem:[#allocation2 + $0x28] sm:$0xff] 0.0
        %299 = vst [vmem:[#allocation2 + $0x30] sm:$0xff] 0.0
        %300 = vst [vmem:[#allocation2 + $0x38] sm:$0xff] 0.0
        %301 = vst [vmem:[#allocation2 + $0x40] sm:$0xff] 0.0
        %302 = vst [vmem:[#allocation2 + $0x48] sm:$0xff] 0.0
        %303 = vst [vmem:[#allocation2 + $0x50] sm:$0xff] 0.0
        %304 = vst [vmem:[#allocation2 + $0x58] sm:$0xff] 0.0
        %305 = vst [vmem:[#allocation2 + $0x60] sm:$0xff] 0.0
        %306 = vst [vmem:[#allocation2 + $0x68] sm:$0xff] 0.0
        %307 = vst [vmem:[#allocation2 + $0x70] sm:$0xff] 0.0
        %308 = vst [vmem:[#allocation2 + $0x78] sm:$0xff] 0.0
      $region36: #{backbone_stage_forward.12} parent=31 // pred_fallthru
        _
      %v309 = vld [vmem:[#allocation2] sm:$0xff]
      %v310 = vld [vmem:[#allocation2 + $0x8] sm:$0xff]
      %v311 = vld [vmem:[#allocation2 + $0x10] sm:$0xff]
      %v312 = vld [vmem:[#allocation2 + $0x18] sm:$0xff]
      %v313 = vld [vmem:[#allocation2 + $0x20] sm:$0xff]
      %v314 = vld [vmem:[#allocation2 + $0x28] sm:$0xff]
      %v315 = vld [vmem:[#allocation2 + $0x30] sm:$0xff]
      %v316 = vld [vmem:[#allocation2 + $0x38] sm:$0xff]
      %v317 = vld [vmem:[#allocation2 + $0x40] sm:$0xff]
      %v318 = vld [vmem:[#allocation2 + $0x48] sm:$0xff]
      %v319 = vld [vmem:[#allocation2 + $0x50] sm:$0xff]
      %v320 = vld [vmem:[#allocation2 + $0x58] sm:$0xff]
      %v321 = vld [vmem:[#allocation2 + $0x60] sm:$0xff]
      %v322 = vld [vmem:[#allocation2 + $0x68] sm:$0xff]
      %v323 = vld [vmem:[#allocation2 + $0x70] sm:$0xff]
      %v324 = vld [vmem:[#allocation2 + $0x78] sm:$0xff]
      %v325 = vld [vmem:[%s262] sm:$0xf]
      %v326 = vld [vmem:[%s262 + $0x4] sm:$0xf]
      %v327 = vld [vmem:[%s262 + $0x8] sm:$0xf]
      %v328 = vld [vmem:[%s262 + $0xc] sm:$0xf]
      %v329 = vld [vmem:[%s262 + $0x10] sm:$0xf]
      %v330 = vld [vmem:[%s262 + $0x14] sm:$0xf]
      %v331 = vld [vmem:[%s262 + $0x18] sm:$0xf]
      %v332 = vld [vmem:[%s262 + $0x1c] sm:$0xf]
      %v333 = vld [vmem:[%s262 + $0x20] sm:$0xf]
      %v334 = vld [vmem:[%s262 + $0x24] sm:$0xf]
      %v335 = vld [vmem:[%s262 + $0x28] sm:$0xf]
      %v336 = vld [vmem:[%s262 + $0x2c] sm:$0xf]
      %v337 = vld [vmem:[%s262 + $0x30] sm:$0xf]
      %v338 = vld [vmem:[%s262 + $0x34] sm:$0xf]
      %v339 = vld [vmem:[%s262 + $0x38] sm:$0xf]
      %v340 = vld [vmem:[%s262 + $0x3c] sm:$0xf]
      %v341 = vld [vmem:[%s273] sm:$0x3]
      %v358 = vunpack.c.l.b16 %v325
      %v359 = vunpack.c.l.b16 %v326
      %v360 = vunpack.c.l.b16 %v327
      %v361 = vunpack.c.l.b16 %v328
      %v362 = vunpack.c.l.b16 %v329
      %v363 = vunpack.c.l.b16 %v330
      %v364 = vunpack.c.l.b16 %v331
      %v365 = vunpack.c.l.b16 %v332
      %v366 = vunpack.c.l.b16 %v333
      %v367 = vunpack.c.l.b16 %v334
      %v368 = vunpack.c.l.b16 %v335
      %v369 = vunpack.c.l.b16 %v336
      %v370 = vunpack.c.l.b16 %v337
      %v371 = vunpack.c.l.b16 %v338
      %v372 = vunpack.c.l.b16 %v339
      %v373 = vunpack.c.l.b16 %v340
      %v374 = vpack.c.b16 %v359, %v358
      %v375 = vpack.c.b16 %v361, %v360
      %v376 = vpack.c.b16 %v363, %v362
      %v377 = vpack.c.b16 %v365, %v364
      %v378 = vpack.c.b16 %v367, %v366
      %v379 = vpack.c.b16 %v369, %v368
      %v380 = vpack.c.b16 %v371, %v370
      %v381 = vpack.c.b16 %v373, %v372
      %vm382 = vcmask 23552
      %v384 = vsel %vm382, %v374, 0
      %v387 = vsel %vm382, %v375, 0
      %v390 = vsel %vm382, %v376, 0
      %v393 = vsel %vm382, %v377, 0
      %v396 = vsel %vm382, %v378, 0
      %v399 = vsel %vm382, %v379, 0
      %v402 = vsel %vm382, %v380, 0
      %v405 = vsel %vm382, %v381, 0
      %vm407 = vcmask 1040384
      %vm408 = vcmask 1041408
      %v409 = vsel %vm407, 4294967295, 65535
      %v410 = vsel %vm408, %v409, 0
      %v412 = vand.u32 %v341, %v410
      %414 = vmatprep.subr.bf16.mxu0 0
      %415 = vmatpush1.bf16.msra.mxu0 0
      %416 = vmatprep.subr.bf16.mxu0 0
      %417 = vmatpush1.bf16.msra.mxu0 0
      %418 = vmatprep.subr.bf16.mxu0 0
      %419 = vmatpush1.bf16.msra.mxu0 0
      %420 = vmatprep.subr.bf16.mxu0 0
      %421 = vmatpush1.bf16.msra.mxu0 0
      %422 = vmatprep.subr.bf16.mxu0 0
      %423 = vmatpush1.bf16.msra.mxu0 0
      %424 = vmatprep.subr.bf16.mxu0 0
      %425 = vmatpush1.bf16.msra.mxu0 0
      %426 = vmatprep.subr.bf16.mxu0 0
      %427 = vmatpush1.bf16.msra.mxu0 0
      %428 = vmatprep.subr.bf16.mxu0 0
      %429 = vmatpush1.bf16.msra.mxu0 %v412
      %430 = vmatprep.subr.bf16.mxu0 0
      %431 = vmatpush2.bf16.msra.mxu0 0
      %432 = vmatprep.subr.bf16.mxu0 0
      %433 = vmatpush2.bf16.msra.mxu0 0
      %434 = vmatprep.subr.bf16.mxu0 0
      %435 = vmatpush2.bf16.msra.mxu0 0
      %436 = vmatprep.subr.bf16.mxu0 0
      %437 = vmatpush2.bf16.msra.mxu0 0
      %438 = vmatprep.subr.bf16.mxu0 0
      %439 = vmatpush2.bf16.msra.mxu0 0
      %440 = vmatprep.subr.bf16.mxu0 0
      %441 = vmatpush2.bf16.msra.mxu0 0
      %442 = vmatprep.subr.bf16.mxu0 0
      %443 = vmatpush2.bf16.msra.mxu0 0
      %444 = vmatprep.subr.bf16.mxu0 0
      %445 = vmatpush2.bf16.msra.mxu0 0
      %446 = vmatprep.mubr.bf16.mxu0 0
      %447 = vmatmul.mubr.bf16.gmra.mxu0 %v384
      %v448 = vpop.f32.mrf.mxu0
      %v449 = vadd.f32 0.0, %v448
      %v450 = vpop.f32.mrf.mxu0
      %v451 = vpop.f32.mrf.mxu0
      %v452 = vadd.f32 0.0, %v451
      %v453 = vpop.f32.mrf.mxu0
      %454 = vmatprep.mubr.bf16.mxu0 0
      %455 = vmatmul.mubr.bf16.gmra.mxu0 %v387
      %v456 = vpop.f32.mrf.mxu0
      %v457 = vadd.f32 0.0, %v456
      %v458 = vpop.f32.mrf.mxu0
      %v459 = vpop.f32.mrf.mxu0
      %v460 = vadd.f32 0.0, %v459
      %v461 = vpop.f32.mrf.mxu0
      %462 = vmatprep.mubr.bf16.mxu0 0
      %463 = vmatmul.mubr.bf16.gmra.mxu0 %v390
      %v464 = vpop.f32.mrf.mxu0
      %v465 = vadd.f32 0.0, %v464
      %v466 = vpop.f32.mrf.mxu0
      %v467 = vpop.f32.mrf.mxu0
      %v468 = vadd.f32 0.0, %v467
      %v469 = vpop.f32.mrf.mxu0
      %470 = vmatprep.mubr.bf16.mxu0 0
      %471 = vmatmul.mubr.bf16.gmra.mxu0 %v393
      %v472 = vpop.f32.mrf.mxu0
      %v473 = vadd.f32 0.0, %v472
      %v474 = vpop.f32.mrf.mxu0
      %v475 = vpop.f32.mrf.mxu0
      %v476 = vadd.f32 0.0, %v475
      %v477 = vpop.f32.mrf.mxu0
      %478 = vmatprep.mubr.bf16.mxu0 0
      %479 = vmatmul.mubr.bf16.gmra.mxu0 %v396
      %v480 = vpop.f32.mrf.mxu0
      %v481 = vadd.f32 0.0, %v480
      %v482 = vpop.f32.mrf.mxu0
      %v483 = vpop.f32.mrf.mxu0
      %v484 = vadd.f32 0.0, %v483
      %v485 = vpop.f32.mrf.mxu0
      %486 = vmatprep.mubr.bf16.mxu0 0
      %487 = vmatmul.mubr.bf16.gmra.mxu0 %v399
      %v488 = vpop.f32.mrf.mxu0
      %v489 = vadd.f32 0.0, %v488
      %v490 = vpop.f32.mrf.mxu0
      %v491 = vpop.f32.mrf.mxu0
      %v492 = vadd.f32 0.0, %v491
      %v493 = vpop.f32.mrf.mxu0
      %494 = vmatprep.mubr.bf16.mxu0 0
      %495 = vmatmul.mubr.bf16.gmra.mxu0 %v402
      %v496 = vpop.f32.mrf.mxu0
      %v497 = vadd.f32 0.0, %v496
      %v498 = vpop.f32.mrf.mxu0
      %v499 = vpop.f32.mrf.mxu0
      %v500 = vadd.f32 0.0, %v499
      %v501 = vpop.f32.mrf.mxu0
      %502 = vmatprep.mubr.bf16.mxu0 0
      %503 = vmatmul.mubr.bf16.gmra.mxu0 %v405
      %v504 = vpop.f32.mrf.mxu0
      %v505 = vadd.f32 0.0, %v504
      %v506 = vpop.f32.mrf.mxu0
      %v507 = vpop.f32.mrf.mxu0
      %v508 = vadd.f32 0.0, %v507
      %v509 = vpop.f32.mrf.mxu0
      %510 = vdwg.mxu0
      %v511 = vadd.f32 %v309, %v449
      %v512 = vadd.f32 %v310, %v452
      %v513 = vadd.f32 %v311, %v457
      %v514 = vadd.f32 %v312, %v460
      %v515 = vadd.f32 %v313, %v465
      %v516 = vadd.f32 %v314, %v468
      %v517 = vadd.f32 %v315, %v473
      %v518 = vadd.f32 %v316, %v476
      %v519 = vadd.f32 %v317, %v481
      %v520 = vadd.f32 %v318, %v484
      %v521 = vadd.f32 %v319, %v489
      %v522 = vadd.f32 %v320, %v492
      %v523 = vadd.f32 %v321, %v497
      %v524 = vadd.f32 %v322, %v500
      %v525 = vadd.f32 %v323, %v505
      %v526 = vadd.f32 %v324, %v508
      %527 = vst [vmem:[#allocation2] sm:$0xff] %v511
      %528 = vst [vmem:[#allocation2 + $0x8] sm:$0xff] %v512
      %529 = vst [vmem:[#allocation2 + $0x10] sm:$0xff] %v513
      %530 = vst [vmem:[#allocation2 + $0x18] sm:$0xff] %v514
      %531 = vst [vmem:[#allocation2 + $0x20] sm:$0xff] %v515
      %532 = vst [vmem:[#allocation2 + $0x28] sm:$0xff] %v516
      %533 = vst [vmem:[#allocation2 + $0x30] sm:$0xff] %v517
      %534 = vst [vmem:[#allocation2 + $0x38] sm:$0xff] %v518
      %535 = vst [vmem:[#allocation2 + $0x40] sm:$0xff] %v519
      %536 = vst [vmem:[#allocation2 + $0x48] sm:$0xff] %v520
      %537 = vst [vmem:[#allocation2 + $0x50] sm:$0xff] %v521
      %538 = vst [vmem:[#allocation2 + $0x58] sm:$0xff] %v522
      %539 = vst [vmem:[#allocation2 + $0x60] sm:$0xff] %v523
      %540 = vst [vmem:[#allocation2 + $0x68] sm:$0xff] %v524
      %541 = vst [vmem:[#allocation2 + $0x70] sm:$0xff] %v525
      %542 = vst [vmem:[#allocation2 + $0x78] sm:$0xff] %v526
      %p543 = scmp.eq.s32.totalorder %s22, 48
      %p544 = pnand %p543, %p288
      %p545 = pneg %p544
      // Predicated region
      $region37: #{backbone_stage_forward.12} parent=31 // pred_check
        _
      $region38: #{backbone_stage_forward.12} parent=31 // pred_check_branch
        %547 = sbr.rel (%p544) target = $region40
      $region39: #{backbone_stage_forward.12} parent=31 // pred_region
        %v548 = vld [vmem:[#allocation2] sm:$0xff]
        %v549 = vld [vmem:[#allocation2 + $0x8] sm:$0xff]
        %v550 = vld [vmem:[#allocation2 + $0x10] sm:$0xff]
        %v551 = vld [vmem:[#allocation2 + $0x18] sm:$0xff]
        %v552 = vld [vmem:[#allocation2 + $0x20] sm:$0xff]
        %v553 = vld [vmem:[#allocation2 + $0x28] sm:$0xff]
        %v554 = vld [vmem:[#allocation2 + $0x30] sm:$0xff]
        %v555 = vld [vmem:[#allocation2 + $0x38] sm:$0xff]
        %v556 = vld [vmem:[#allocation2 + $0x40] sm:$0xff]
        %v557 = vld [vmem:[#allocation2 + $0x48] sm:$0xff]
        %v558 = vld [vmem:[#allocation2 + $0x50] sm:$0xff]
        %v559 = vld [vmem:[#allocation2 + $0x58] sm:$0xff]
        %v560 = vld [vmem:[#allocation2 + $0x60] sm:$0xff]
        %v561 = vld [vmem:[#allocation2 + $0x68] sm:$0xff]
        %v562 = vld [vmem:[#allocation2 + $0x70] sm:$0xff]
        %v563 = vld [vmem:[#allocation2 + $0x78] sm:$0xff]
        %v564 = vld [vmem:[%s276] sm:$0x1]
        %v566 = vlaneseq
        %v567 = vshrl.u32 %v566, 7
        %v568 = vsub.s32 0, %v567
        %v569 = vrot.slane %v564, %v568
        %v571 = vadd.f32 %v548, %v569
        %v572 = vadd.f32 %v549, %v569
        %v573 = vadd.f32 %v550, %v569
        %v574 = vadd.f32 %v551, %v569
        %v575 = vadd.f32 %v552, %v569
        %v576 = vadd.f32 %v553, %v569
        %v577 = vadd.f32 %v554, %v569
        %v578 = vadd.f32 %v555, %v569
        %v579 = vadd.f32 %v556, %v569
        %v580 = vadd.f32 %v557, %v569
        %v581 = vadd.f32 %v558, %v569
        %v582 = vadd.f32 %v559, %v569
        %v583 = vadd.f32 %v560, %v569
        %v584 = vadd.f32 %v561, %v569
        %v585 = vadd.f32 %v562, %v569
        %v586 = vadd.f32 %v563, %v569
        %v587 = vmax.f32 %v571, 0.0
        %v588 = vmax.f32 %v572, 0.0
        %v589 = vmax.f32 %v573, 0.0
        %v590 = vmax.f32 %v574, 0.0
        %v591 = vmax.f32 %v575, 0.0
        %v592 = vmax.f32 %v576, 0.0
        %v593 = vmax.f32 %v577, 0.0
        %v594 = vmax.f32 %v578, 0.0
        %v595 = vmax.f32 %v579, 0.0
        %v596 = vmax.f32 %v580, 0.0
        %v597 = vmax.f32 %v581, 0.0
        %v598 = vmax.f32 %v582, 0.0
        %v599 = vmax.f32 %v583, 0.0
        %v600 = vmax.f32 %v584, 0.0
        %v601 = vmax.f32 %v585, 0.0
        %v602 = vmax.f32 %v586, 0.0
        %v603 = vpack.c.bf16 %v588, %v587
        %v604 = vpack.c.bf16 %v590, %v589
        %v605 = vpack.c.bf16 %v592, %v591
        %v606 = vpack.c.bf16 %v594, %v593
        %v607 = vpack.c.bf16 %v596, %v595
        %v608 = vpack.c.bf16 %v598, %v597
        %v609 = vpack.c.bf16 %v600, %v599
        %v610 = vpack.c.bf16 %v602, %v601
        %v619 = vunpack.c.l.b16 %v603
        %v620 = vunpack.c.h.b16 %v603
        %v621 = vunpack.c.l.b16 %v604
        %v622 = vunpack.c.h.b16 %v604
        %v623 = vunpack.c.l.b16 %v605
        %v624 = vunpack.c.h.b16 %v605
        %v625 = vunpack.c.l.b16 %v606
        %v626 = vunpack.c.h.b16 %v606
        %v627 = vunpack.c.l.b16 %v607
        %v628 = vunpack.c.h.b16 %v607
        %v629 = vunpack.c.l.b16 %v608
        %v630 = vunpack.c.h.b16 %v608
        %v631 = vunpack.c.l.b16 %v609
        %v632 = vunpack.c.h.b16 %v609
        %v633 = vunpack.c.l.b16 %v610
        %v634 = vunpack.c.h.b16 %v610
        %v635 = vpack.c.b16 %v619, %v619
        %v636 = vpack.c.b16 %v620, %v620
        %v637 = vpack.c.b16 %v621, %v621
        %v638 = vpack.c.b16 %v622, %v622
        %v639 = vpack.c.b16 %v623, %v623
        %v640 = vpack.c.b16 %v624, %v624
        %v641 = vpack.c.b16 %v625, %v625
        %v642 = vpack.c.b16 %v626, %v626
        %v643 = vpack.c.b16 %v627, %v627
        %v644 = vpack.c.b16 %v628, %v628
        %v645 = vpack.c.b16 %v629, %v629
        %v646 = vpack.c.b16 %v630, %v630
        %v647 = vpack.c.b16 %v631, %v631
        %v648 = vpack.c.b16 %v632, %v632
        %v649 = vpack.c.b16 %v633, %v633
        %v650 = vpack.c.b16 %v634, %v634
        %667 = vst [vmem:[%s284] sm:$0xf] %v635
        %668 = vst [vmem:[%s284 + $0x4] sm:$0xf] %v636
        %669 = vst [vmem:[%s284 + $0x8] sm:$0xf] %v637
        %670 = vst [vmem:[%s284 + $0xc] sm:$0xf] %v638
        %671 = vst [vmem:[%s284 + $0x10] sm:$0xf] %v639
        %672 = vst [vmem:[%s284 + $0x14] sm:$0xf] %v640
        %673 = vst [vmem:[%s284 + $0x18] sm:$0xf] %v641
        %674 = vst [vmem:[%s284 + $0x1c] sm:$0xf] %v642
        %675 = vst [vmem:[%s284 + $0x20] sm:$0xf] %v643
        %676 = vst [vmem:[%s284 + $0x24] sm:$0xf] %v644
        %677 = vst [vmem:[%s284 + $0x28] sm:$0xf] %v645
        %678 = vst [vmem:[%s284 + $0x2c] sm:$0xf] %v646
        %679 = vst [vmem:[%s284 + $0x30] sm:$0xf] %v647
        %680 = vst [vmem:[%s284 + $0x34] sm:$0xf] %v648
        %681 = vst [vmem:[%s284 + $0x38] sm:$0xf] %v649
        %682 = vst [vmem:[%s284 + $0x3c] sm:$0xf] %v650
      $region40: #{backbone_stage_forward.12} parent=31 // pred_fallthru
        _
      %s683 = smul.u32 16, %s20
      %p684 = scmp.lt.s32.totalorder %s683, 15
      %s685 = scalar_select %p684, %s683, 15
      %p686 = scmp.lt.s32.totalorder %s21, 0
      %s687 = scalar_select %p686, %s21, 0
      %s688 = sadd.s32 %s687, %s685
      %s689 = smul.addr %s688, 4
      %s690 = scalar_lea.vmem %s3, %s689
      // Predicated region
      $region41: #{backbone_stage_forward.12} parent=31 // pred_check
        %p691 = pneg %p146
      $region42: #{backbone_stage_forward.12} parent=31 // pred_check_branch
        %693 = sbr.rel (%p691) target = $region44
      $region43: #{backbone_stage_forward.12} parent=31 // pred_region
        %s694 = smul.u32 16, %s20
      $region44: #{backbone_stage_forward.12} parent=31 // pred_fallthru
        _
      // Predicated region
      $region45: #{backbone_stage_forward.12} parent=31 // pred_check
        %p695 = pneg %p146
      $region46: #{backbone_stage_forward.12} parent=31 // pred_check_branch
        %697 = sbr.rel (%p695) target = $region48
      $region47: #{backbone_stage_forward.12} parent=31 // pred_region
        %s698 = smul.u32 16, %s20
        %p699 = scmp.lt.s32.totalorder %s698, 15
        %s700 = scalar_select %p699, %s698, 15
        %p701 = scmp.lt.s32.totalorder %s21, 0
        %s702 = scalar_select %p701, %s21, 0
        %s703 = sadd.s32 %s702, %s700
        %s704 = smul.addr %s703, 4
        %s705 = scalar_lea.vmem %s3, %s704
      $region48: #{backbone_stage_forward.12} parent=31 // pred_fallthru
        _
    $region32: #{backbone_stage_forward.12} parent=5 // pred_fallthru
      _
    %p706 = scmp.le.s32.totalorder 2, %s9
    // Predicated region
    $region49: #{backbone_stage_forward.12} parent=5 // pred_check
      %p707 = pneg %p706
    $region50: #{backbone_stage_forward.12} parent=5 // pred_check_branch
      %709 = sbr.rel (%p707) target = $region52
    $region51: #{backbone_stage_forward.12} parent=5 // pred_region
      %s710 = ssub.s32 %s9, 2
    $region52: #{backbone_stage_forward.12} parent=5 // pred_fallthru
      _
  $region6: #{backbone_stage_forward.12} parent=0 // loop_footer
    %s13 = sadd.s32 1, %s9
  $region7: #{backbone_stage_forward.12} parent=0 // loop_footer_branch
    %8 = sbr.rel target = $region3
  $region8: #{backbone_stage_forward.12} parent=0 // loop_exit
    _

// kernel: backbone_stage_forward.14
$region0: #{backbone_stage_forward.14}
  #allocation0 [shape = 'u32[]', space=smem, size = 0x4, offset = 0x4, fixed_abs, tag = 'smem constant byte address 0x4 - core index']
  #allocation1 [shape = 'u32[144,128]{1,0:T(1,128)}', space=vmem, size = 0x12000, scoped, tag = 'internal scratch']
  #allocation2 [shape = 'f32[32,128]{1,0:T(8,128)}', space=vmem, size = 0x4000, scoped, tag = 'scratch operand']
  %s0 = inlined_call_operand.vmem [shape: bf16[1,32,128], index: 0, kind: input, shape index: {}]
  %s1 = inlined_call_operand.vmem [shape: bf16[1,128,128], index: 1, kind: input, shape index: {}]
  %s2 = inlined_call_operand.vmem [shape: f32[1,128], index: 2, kind: input, shape index: {}]
  %s3 = inlined_call_operand.vmem [shape: bf16[32,128], index: 3, kind: output, shape index: {}]
  %s4 = sld [smem:[#allocation0]]
  $region30: #{backbone_stage_forward.14} parent=0
    _
  %s6 = ssub.s32 1, %s4
  %s7 = scalar_select 0, %s6, %s4
  // Predicated region
  $region2: #{backbone_stage_forward.14} parent=0 // pred_check
    _
  $region3: #{backbone_stage_forward.14} parent=0 // pred_check_branch
    %9 = sbr.rel (0) target = $region5
  $region4: #{backbone_stage_forward.14} parent=0 // pred_region
    _
  $region5: #{backbone_stage_forward.14} parent=0 // pred_fallthru
    _
  // Predicated region
  $region6: #{backbone_stage_forward.14} parent=0 // pred_check
    _
  $region7: #{backbone_stage_forward.14} parent=0 // pred_check_branch
    %11 = sbr.rel (0) target = $region9
  $region8: #{backbone_stage_forward.14} parent=0 // pred_region
    _
  $region9: #{backbone_stage_forward.14} parent=0 // pred_fallthru
    _
  // Predicated region
  $region10: #{backbone_stage_forward.14} parent=0 // pred_check
    _
  $region11: #{backbone_stage_forward.14} parent=0 // pred_check_branch
    %13 = sbr.rel (0) target = $region13
  $region12: #{backbone_stage_forward.14} parent=0 // pred_region
    _
  $region13: #{backbone_stage_forward.14} parent=0 // pred_fallthru
    _
  %p15 = scmp.eq.s32.totalorder 0, 0
  %p16 = scmp.eq.s32.totalorder 0, 0
  %p17 = pnand %p15, %p16
  %p18 = pneg %p17
  // Predicated region
  $region14: #{backbone_stage_forward.14} parent=0 // pred_check
    _
  $region15: #{backbone_stage_forward.14} parent=0 // pred_check_branch
    %20 = sbr.rel (%p17) target = $region17
  $region16: #{backbone_stage_forward.14} parent=0 // pred_region
    %21 = vst [vmem:[#allocation2] sm:$0xff] 0.0
    %22 = vst [vmem:[#allocation2 + $0x8] sm:$0xff] 0.0
    %23 = vst [vmem:[#allocation2 + $0x10] sm:$0xff] 0.0
    %24 = vst [vmem:[#allocation2 + $0x18] sm:$0xff] 0.0
  $region17: #{backbone_stage_forward.14} parent=0 // pred_fallthru
    _
  %v25 = vld [vmem:[#allocation2] sm:$0xff]
  %v26 = vld [vmem:[#allocation2 + $0x8] sm:$0xff]
  %v27 = vld [vmem:[#allocation2 + $0x10] sm:$0xff]
  %v28 = vld [vmem:[#allocation2 + $0x18] sm:$0xff]
  %v29 = vld [vmem:[%s0] sm:$0xf]
  %v30 = vld [vmem:[%s0 + $0x4] sm:$0xf]
  %v31 = vld [vmem:[%s0 + $0x8] sm:$0xf]
  %v32 = vld [vmem:[%s0 + $0xc] sm:$0xf]
  %v33 = vld [vmem:[%s1] sm:$0xf]
  %v34 = vld [vmem:[%s1 + $0x4] sm:$0xf]
  %v35 = vld [vmem:[%s1 + $0x8] sm:$0xf]
  %v36 = vld [vmem:[%s1 + $0xc] sm:$0xf]
  %v37 = vld [vmem:[%s1 + $0x10] sm:$0xf]
  %v38 = vld [vmem:[%s1 + $0x14] sm:$0xf]
  %v39 = vld [vmem:[%s1 + $0x18] sm:$0xf]
  %v40 = vld [vmem:[%s1 + $0x1c] sm:$0xf]
  %v41 = vld [vmem:[%s1 + $0x20] sm:$0xf]
  %v42 = vld [vmem:[%s1 + $0x24] sm:$0xf]
  %v43 = vld [vmem:[%s1 + $0x28] sm:$0xf]
  %v44 = vld [vmem:[%s1 + $0x2c] sm:$0xf]
  %v45 = vld [vmem:[%s1 + $0x30] sm:$0xf]
  %v46 = vld [vmem:[%s1 + $0x34] sm:$0xf]
  %v47 = vld [vmem:[%s1 + $0x38] sm:$0xf]
  %v48 = vld [vmem:[%s1 + $0x3c] sm:$0xf]
  %v53 = vunpack.c.l.b16 %v29
  %v54 = vunpack.c.l.b16 %v30
  %v55 = vunpack.c.l.b16 %v31
  %v56 = vunpack.c.l.b16 %v32
  %v57 = vpack.c.b16 %v54, %v53
  %v58 = vpack.c.b16 %v56, %v55
  %v77 = vunpack.c.l.b16 %v33
  %v78 = vunpack.c.l.b16 %v34
  %v79 = vunpack.c.l.b16 %v35
  %v80 = vunpack.c.l.b16 %v36
  %v81 = vunpack.c.l.b16 %v37
  %v82 = vunpack.c.l.b16 %v38
  %v83 = vunpack.c.l.b16 %v39
  %v84 = vunpack.c.l.b16 %v40
  %v85 = vunpack.c.l.b16 %v41
  %v86 = vunpack.c.l.b16 %v42
  %v87 = vunpack.c.l.b16 %v43
  %v88 = vunpack.c.l.b16 %v44
  %v89 = vunpack.c.l.b16 %v45
  %v90 = vunpack.c.l.b16 %v46
  %v91 = vunpack.c.l.b16 %v47
  %v92 = vunpack.c.l.b16 %v48
  %v93 = vpack.c.b16 %v78, %v77
  %v94 = vpack.c.b16 %v80, %v79
  %v95 = vpack.c.b16 %v82, %v81
  %v96 = vpack.c.b16 %v84, %v83
  %v97 = vpack.c.b16 %v86, %v85
  %v98 = vpack.c.b16 %v88, %v87
  %v99 = vpack.c.b16 %v90, %v89
  %v100 = vpack.c.b16 %v92, %v91
  %109 = vmatprep.subr.bf16.mxu0 0
  %110 = vmatpush1.bf16.msra.mxu0 %v100
  %111 = vmatprep.subr.bf16.mxu0 0
  %112 = vmatpush1.bf16.msra.mxu0 %v99
  %113 = vmatprep.subr.bf16.mxu0 0
  %114 = vmatpush1.bf16.msra.mxu0 %v98
  %115 = vmatprep.subr.bf16.mxu0 0
  %116 = vmatpush1.bf16.msra.mxu0 %v97
  %117 = vmatprep.subr.bf16.mxu0 0
  %118 = vmatpush1.bf16.msra.mxu0 %v96
  %119 = vmatprep.subr.bf16.mxu0 0
  %120 = vmatpush1.bf16.msra.mxu0 %v95
  %121 = vmatprep.subr.bf16.mxu0 0
  %122 = vmatpush1.bf16.msra.mxu0 %v94
  %123 = vmatprep.subr.bf16.mxu0 0
  %124 = vmatpush1.bf16.msra.mxu0 %v93
  %125 = vmatprep.subr.bf16.mxu0 0
  %126 = vmatpush2.bf16.msra.mxu0 0
  %127 = vmatprep.subr.bf16.mxu0 0
  %128 = vmatpush2.bf16.msra.mxu0 0
  %129 = vmatprep.subr.bf16.mxu0 0
  %130 = vmatpush2.bf16.msra.mxu0 0
  %131 = vmatprep.subr.bf16.mxu0 0
  %132 = vmatpush2.bf16.msra.mxu0 0
  %133 = vmatprep.subr.bf16.mxu0 0
  %134 = vmatpush2.bf16.msra.mxu0 0
  %135 = vmatprep.subr.bf16.mxu0 0
  %136 = vmatpush2.bf16.msra.mxu0 0
  %137 = vmatprep.subr.bf16.mxu0 0
  %138 = vmatpush2.bf16.msra.mxu0 0
  %139 = vmatprep.subr.bf16.mxu0 0
  %140 = vmatpush2.bf16.msra.mxu0 0
  %141 = vmatprep.mubr.bf16.mxu0 0
  %142 = vmatmul.mubr.bf16.gmra.mxu0 %v57
  %v143 = vpop.f32.mrf.mxu0
  %v144 = vadd.f32 0.0, %v143
  %v145 = vpop.f32.mrf.mxu0
  %v146 = vpop.f32.mrf.mxu0
  %v147 = vadd.f32 0.0, %v146
  %v148 = vpop.f32.mrf.mxu0
  %149 = vmatprep.mubr.bf16.mxu0 0
  %150 = vmatmul.mubr.bf16.gmra.mxu0 %v58
  %v151 = vpop.f32.mrf.mxu0
  %v152 = vadd.f32 0.0, %v151
  %v153 = vpop.f32.mrf.mxu0
  %v154 = vpop.f32.mrf.mxu0
  %v155 = vadd.f32 0.0, %v154
  %v156 = vpop.f32.mrf.mxu0
  %157 = vdwg.mxu0
  %v158 = vadd.f32 %v25, %v144
  %v159 = vadd.f32 %v26, %v147
  %v160 = vadd.f32 %v27, %v152
  %v161 = vadd.f32 %v28, %v155
  %162 = vst [vmem:[#allocation2] sm:$0xff] %v158
  %163 = vst [vmem:[#allocation2 + $0x8] sm:$0xff] %v159
  %164 = vst [vmem:[#allocation2 + $0x10] sm:$0xff] %v160
  %165 = vst [vmem:[#allocation2 + $0x18] sm:$0xff] %v161
  // Predicated region
  $region18: #{backbone_stage_forward.14} parent=0 // pred_check
    _
  $region19: #{backbone_stage_forward.14} parent=0 // pred_check_branch
    %167 = sbr.rel (%p17) target = $region21
  $region20: #{backbone_stage_forward.14} parent=0 // pred_region
    %v168 = vld [vmem:[#allocation2] sm:$0xff]
    %v169 = vld [vmem:[#allocation2 + $0x8] sm:$0xff]
    %v170 = vld [vmem:[#allocation2 + $0x10] sm:$0xff]
    %v171 = vld [vmem:[#allocation2 + $0x18] sm:$0xff]
    %v172 = vld [vmem:[%s2] sm:$0x1]
    %v174 = vlaneseq
    %v175 = vshrl.u32 %v174, 7
    %v176 = vsub.s32 0, %v175
    %v177 = vrot.slane %v172, %v176
    %v179 = vadd.f32 %v168, %v177
    %v180 = vadd.f32 %v169, %v177
    %v181 = vadd.f32 %v170, %v177
    %v182 = vadd.f32 %v171, %v177
    %v183 = vmax.f32 %v179, 0.0
    %v184 = vmax.f32 %v180, 0.0
    %v185 = vmax.f32 %v181, 0.0
    %v186 = vmax.f32 %v182, 0.0
    %v187 = vpack.c.bf16 %v184, %v183
    %v188 = vpack.c.bf16 %v186, %v185
    %v191 = vunpack.c.l.b16 %v187
    %v192 = vunpack.c.h.b16 %v187
    %v193 = vunpack.c.l.b16 %v188
    %v194 = vunpack.c.h.b16 %v188
    %v195 = vpack.c.b16 %v191, %v191
    %v196 = vpack.c.b16 %v192, %v192
    %v197 = vpack.c.b16 %v193, %v193
    %v198 = vpack.c.b16 %v194, %v194
    %203 = vst [vmem:[%s3] sm:$0xf] %v195
    %204 = vst [vmem:[%s3 + $0x4] sm:$0xf] %v196
    %205 = vst [vmem:[%s3 + $0x8] sm:$0xf] %v197
    %206 = vst [vmem:[%s3 + $0xc] sm:$0xf] %v198
  $region21: #{backbone_stage_forward.14} parent=0 // pred_fallthru
    _
  // Predicated region
  $region22: #{backbone_stage_forward.14} parent=0 // pred_check
    _
  $region23: #{backbone_stage_forward.14} parent=0 // pred_check_branch
    %208 = sbr.rel (0) target = $region25
  $region24: #{backbone_stage_forward.14} parent=0 // pred_region
    _
  $region25: #{backbone_stage_forward.14} parent=0 // pred_fallthru
    _
  // Predicated region
  $region26: #{backbone_stage_forward.14} parent=0 // pred_check
    _
  $region27: #{backbone_stage_forward.14} parent=0 // pred_check_branch
    %210 = sbr.rel (0) target = $region29
  $region28: #{backbone_stage_forward.14} parent=0 // pred_region
    _
  $region29: #{backbone_stage_forward.14} parent=0 // pred_fallthru
    _

// kernel: backbone_stage_forward.15
$region0: #{backbone_stage_forward.15}
  #allocation0 [shape = 'u32[]', space=smem, size = 0x4, offset = 0x4, fixed_abs, tag = 'smem constant byte address 0x4 - core index']
  #allocation1 [shape = 'u32[144,128]{1,0:T(1,128)}', space=vmem, size = 0x12000, scoped, tag = 'internal scratch']
  #allocation2 [shape = 'f32[32,128]{1,0:T(8,128)}', space=vmem, size = 0x4000, scoped, tag = 'scratch operand']
  %s0 = inlined_call_operand.vmem [shape: bf16[9,32,128], index: 0, kind: input, shape index: {}]
  %s1 = inlined_call_operand.vmem [shape: bf16[9,128,128], index: 1, kind: input, shape index: {}]
  %s2 = inlined_call_operand.vmem [shape: f32[1,128], index: 2, kind: input, shape index: {}]
  %s3 = inlined_call_operand.vmem [shape: bf16[32,128], index: 3, kind: output, shape index: {}]
  %s4 = sld [smem:[#allocation0]]
  $region53: #{backbone_stage_forward.15} parent=0
    _
  %s6 = ssub.s32 1, %s4
  %s7 = scalar_select 0, %s6, %s4
  loop: start=0, step=1, limit=11
  $region2: #{backbone_stage_forward.15} parent=0 // loop_pre_header
    _
  $region3: #{backbone_stage_forward.15} parent=0 // loop_header
    %s9 = sphi 0, %s13
    %p10 = scmp.ge.s32.totalorder %s9, 11
    %s16 = sphi 0, %s42
    %s17 = sphi 0, %s38
    %s18 = sphi 0, %s34
    %s19 = sphi 0, %s30
    %s20 = sphi 0, %s16
    %s21 = sphi 0, %s17
    %s22 = sphi 0, %s18
    %s23 = sphi 0, %s19
    %s24 = sphi 0, %s20
    %s25 = sphi 0, %s21
    %s26 = sphi 0, %s22
    %s27 = sphi 0, %s23
    %s49 = sphi 0, %s51
    %s52 = sphi 0, %s49
    %s53 = sphi 0, %s52
    %s69 = sphi 0, %s53
    %s79 = sphi 0, %s81
    %s82 = sphi 0, %s79
    %s83 = sphi 0, %s82
    %s99 = sphi 0, %s83
    %s105 = sphi 0, %s107
    %s108 = sphi 0, %s105
    %s109 = sphi 0, %s108
    %s125 = sphi 0, %s109
    %s133 = sphi 0, %s135
    %s136 = sphi 0, %s133
    %s137 = sphi 0, %s136
    %s153 = sphi 0, %s137
  $region4: #{backbone_stage_forward.15} parent=0 // loop_header_branch
    %12 = sbr.rel (%p10) target = $region8
  $region5: #{backbone_stage_forward.15} parent=0 // loop_body
    %s14 = ssub.s32 %s9, 1
    %s15 = ssub.s32 %s9, 2
    %s28 = sadd.s32 1, %s19
    %p29 = scmp.ge.s32.totalorder %s28, 1
    %s30 = scalar_select %p29, 0, %s28
    %s31 = sadd.s32 1, %s18
    %s32 = scalar_select %p29, %s31, %s18
    %p33 = scmp.ge.s32.totalorder %s32, 9
    %s34 = scalar_select %p33, 0, %s32
    %s35 = sadd.s32 1, %s17
    %s36 = scalar_select %p33, %s35, %s17
    %p37 = scmp.ge.s32.totalorder %s36, 1
    %s38 = scalar_select %p37, 0, %s36
    %s39 = sadd.s32 1, %s16
    %s40 = scalar_select %p37, %s39, %s16
    %p41 = scmp.ge.s32.totalorder %s40, 1
    %s42 = scalar_select %p41, 0, %s40
    %s43 = ssub.s32 %s18, %s34
    %s44 = ssub.s32 %s16, %s42
    %s45 = sor.u32 %s43, %s44
    %s46 = ssub.s32 %s19, %s30
    %s47 = sor.u32 %s45, %s46
    %p48 = scmp.eq.s32.totalorder %s47, 0
    %s50 = sadd.s32 %s49, 1
    %s51 = scalar_select %p48, %s49, %s50
    %p54 = pneg %p48
    %p55 = scmp.eq.s32.totalorder %s9, 8
    %p56 = por %p54, %p55
    %p57 = scmp.ne.s32.totalorder %s49, %s52
    %p58 = scmp.eq.s32.totalorder %s9, 0
    %p59 = por %p57, %p58
    %p60 = scmp.ne.s32.totalorder %s49, %s52
    %p61 = scmp.eq.s32.totalorder %s14, 8
    %p62 = por %p60, %p61
    %p63 = scmp.ne.s32.totalorder %s52, %s53
    %p64 = scmp.eq.s32.totalorder %s14, 0
    %p65 = por %p63, %p64
    %p66 = scmp.ne.s32.totalorder %s52, %s53
    %p67 = scmp.eq.s32.totalorder %s15, 8
    %p68 = por %p66, %p67
    %p70 = scmp.ne.s32.totalorder %s53, %s69
    %p71 = scmp.eq.s32.totalorder %s15, 0
    %p72 = por %p70, %p71
    %s73 = ssub.s32 %s18, %s34
    %s74 = ssub.s32 %s19, %s30
    %s75 = sor.u32 %s73, %s74
    %s76 = ssub.s32 %s17, %s38
    %s77 = sor.u32 %s75, %s76
    %p78 = scmp.eq.s32.totalorder %s77, 0
    %s80 = sadd.s32 %s79, 1
    %s81 = scalar_select %p78, %s79, %s80
    %p84 = pneg %p78
    %p85 = scmp.eq.s32.totalorder %s9, 8
    %p86 = por %p84, %p85
    %p87 = scmp.ne.s32.totalorder %s79, %s82
    %p88 = scmp.eq.s32.totalorder %s9, 0
    %p89 = por %p87, %p88
    %p90 = scmp.ne.s32.totalorder %s79, %s82
    %p91 = scmp.eq.s32.totalorder %s14, 8
    %p92 = por %p90, %p91
    %p93 = scmp.ne.s32.totalorder %s82, %s83
    %p94 = scmp.eq.s32.totalorder %s14, 0
    %p95 = por %p93, %p94
    %p96 = scmp.ne.s32.totalorder %s82, %s83
    %p97 = scmp.eq.s32.totalorder %s15, 8
    %p98 = por %p96, %p97
    %p100 = scmp.ne.s32.totalorder %s83, %s99
    %p101 = scmp.eq.s32.totalorder %s15, 0
    %p102 = por %p100, %p101
    %s103 = ssub.s32 %s17, %s38
    %p104 = scmp.eq.s32.totalorder %s103, 0
    %s106 = sadd.s32 %s105, 1
    %s107 = scalar_select %p104, %s105, %s106
    %p110 = pneg %p104
    %p111 = scmp.eq.s32.totalorder %s9, 8
    %p112 = por %p110, %p111
    %p113 = scmp.ne.s32.totalorder %s105, %s108
    %p114 = scmp.eq.s32.totalorder %s9, 0
    %p115 = por %p113, %p114
    %p116 = scmp.ne.s32.totalorder %s105, %s108
    %p117 = scmp.eq.s32.totalorder %s14, 8
    %p118 = por %p116, %p117
    %p119 = scmp.ne.s32.totalorder %s108, %s109
    %p120 = scmp.eq.s32.totalorder %s14, 0
    %p121 = por %p119, %p120
    %p122 = scmp.ne.s32.totalorder %s108, %s109
    %p123 = scmp.eq.s32.totalorder %s15, 8
    %p124 = por %p122, %p123
    %p126 = scmp.ne.s32.totalorder %s109, %s125
    %p127 = scmp.eq.s32.totalorder %s15, 0
    %p128 = por %p126, %p127
    %s129 = ssub.s32 %s16, %s42
    %s130 = ssub.s32 %s17, %s38
    %s131 = sor.u32 %s129, %s130
    %p132 = scmp.eq.s32.totalorder %s131, 0
    %s134 = sadd.s32 %s133, 1
    %s135 = scalar_select %p132, %s133, %s134
    %p138 = pneg %p132
    %p139 = scmp.eq.s32.totalorder %s9, 8
    %p140 = por %p138, %p139
    %p141 = scmp.ne.s32.totalorder %s133, %s136
    %p142 = scmp.eq.s32.totalorder %s9, 0
    %p143 = por %p141, %p142
    %p144 = scmp.ne.s32.totalorder %s133, %s136
    %p145 = scmp.eq.s32.totalorder %s14, 8
    %p146 = por %p144, %p145
    %p147 = scmp.ne.s32.totalorder %s136, %s137
    %p148 = scmp.eq.s32.totalorder %s14, 0
    %p149 = por %p147, %p148
    %p150 = scmp.ne.s32.totalorder %s136, %s137
    %p151 = scmp.eq.s32.totalorder %s15, 8
    %p152 = por %p150, %p151
    %p154 = scmp.ne.s32.totalorder %s137, %s153
    %p155 = scmp.eq.s32.totalorder %s15, 0
    %p156 = por %p154, %p155
    %p157 = scmp.le.s32.totalorder 1, %s9
    %p158 = scmp.lt.s32.totalorder %s9, 10
    %p159 = pnand %p157, %p158
    %p160 = pneg %p159
    // Predicated region
    $region9: #{backbone_stage_forward.15} parent=5 // pred_check
      _
    $region10: #{backbone_stage_forward.15} parent=5 // pred_check_branch
      %162 = sbr.rel (%p159) target = $region12
    $region11: #{backbone_stage_forward.15} parent=5 // pred_region
      %s163 = ssub.s32 %s9, 1
      // Predicated region
      $region13: #{backbone_stage_forward.15} parent=11 // pred_check
        %p164 = pneg %p121
      $region14: #{backbone_stage_forward.15} parent=11 // pred_check_branch
        %166 = sbr.rel (%p164) target = $region16
      $region15: #{backbone_stage_forward.15} parent=11 // pred_region
        %p167 = scmp.lt.s32.totalorder %s21, 0
        %s168 = scalar_select %p167, %s21, 0
        %s169 = scalar_lea.vmem %s2, %s168
      $region16: #{backbone_stage_forward.15} parent=11 // pred_fallthru
        _
    $region12: #{backbone_stage_forward.15} parent=5 // pred_fallthru
      _
    %p170 = scmp.lt.s32.totalorder %s9, 9
    // Predicated region
    $region17: #{backbone_stage_forward.15} parent=5 // pred_check
      %p171 = pneg %p170
    $region18: #{backbone_stage_forward.15} parent=5 // pred_check_branch
      %173 = sbr.rel (%p171) target = $region20
    $region19: #{backbone_stage_forward.15} parent=5 // pred_region
      // Predicated region
      $region21: #{backbone_stage_forward.15} parent=19 // pred_check
        %p174 = pneg %p59
      $region22: #{backbone_stage_forward.15} parent=19 // pred_check_branch
        %176 = sbr.rel (%p174) target = $region24
      $region23: #{backbone_stage_forward.15} parent=19 // pred_region
        %s177 = smul.u32 4, %s16
        %p178 = scmp.lt.s32.totalorder %s18, 8
        %s179 = scalar_select %p178, %s18, 8
        %p180 = scmp.lt.s32.totalorder %s177, 3
        %s181 = scalar_select %p180, %s177, 3
        %p182 = scmp.lt.s32.totalorder %s19, 0
        %s183 = scalar_select %p182, %s19, 0
        %s184 = sadd.s32 %s183, %s181
        %s185 = smul.addr %s179, 4
        %s186 = sadd.s32 %s184, %s185
        %s187 = smul.addr %s186, 4
        %s188 = scalar_lea.vmem %s0, %s187
        %s189 = smul.u32 4, %s16
      $region24: #{backbone_stage_forward.15} parent=19 // pred_fallthru
        _
      // Predicated region
      $region25: #{backbone_stage_forward.15} parent=19 // pred_check
        %p190 = pneg %p89
      $region26: #{backbone_stage_forward.15} parent=19 // pred_check_branch
        %192 = sbr.rel (%p190) target = $region28
      $region27: #{backbone_stage_forward.15} parent=19 // pred_region
        %s193 = smul.u32 16, %s19
        %p194 = scmp.lt.s32.totalorder %s18, 8
        %s195 = scalar_select %p194, %s18, 8
        %p196 = scmp.lt.s32.totalorder %s193, 15
        %s197 = scalar_select %p196, %s193, 15
        %p198 = scmp.lt.s32.totalorder %s17, 0
        %s199 = scalar_select %p198, %s17, 0
        %s200 = sadd.s32 %s199, %s197
        %s201 = smul.addr %s195, 16
        %s202 = sadd.s32 %s200, %s201
        %s203 = smul.addr %s202, 4
        %s204 = scalar_lea.vmem %s1, %s203
        %s205 = smul.u32 16, %s19
      $region28: #{backbone_stage_forward.15} parent=19 // pred_fallthru
        _
    $region20: #{backbone_stage_forward.15} parent=5 // pred_fallthru
      _
    %p206 = scmp.le.s32.totalorder 1, %s9
    %p207 = scmp.lt.s32.totalorder %s9, 10
    %p208 = pnand %p206, %p207
    %p209 = pneg %p208
    // Predicated region
    $region29: #{backbone_stage_forward.15} parent=5 // pred_check
      _
    $region30: #{backbone_stage_forward.15} parent=5 // pred_check_branch
      %211 = sbr.rel (%p208) target = $region32
    $region31: #{backbone_stage_forward.15} parent=5 // pred_region
      %s212 = ssub.s32 %s9, 1
      %s213 = smul.u32 4, %s20
      %p214 = scmp.lt.s32.totalorder %s22, 8
      %s215 = scalar_select %p214, %s22, 8
      %p216 = scmp.lt.s32.totalorder %s213, 3
      %s217 = scalar_select %p216, %s213, 3
      %p218 = scmp.lt.s32.totalorder %s23, 0
      %s219 = scalar_select %p218, %s23, 0
      %s220 = sadd.s32 %s219, %s217
      %s221 = smul.addr %s215, 4
      %s222 = sadd.s32 %s220, %s221
      %s223 = smul.addr %s222, 4
      %s224 = scalar_lea.vmem %s0, %s223
      %p225 = pneg %p65
      %p226 = pneg %p62
      %s227 = smul.u32 16, %s23
      %p228 = scmp.lt.s32.totalorder %s22, 8
      %s229 = scalar_select %p228, %s22, 8
      %p230 = scmp.lt.s32.totalorder %s227, 15
      %s231 = scalar_select %p230, %s227, 15
      %p232 = scmp.lt.s32.totalorder %s21, 0
      %s233 = scalar_select %p232, %s21, 0
      %s234 = sadd.s32 %s233, %s231
      %s235 = smul.addr %s229, 16
      %s236 = sadd.s32 %s234, %s235
      %s237 = smul.addr %s236, 4
      %s238 = scalar_lea.vmem %s1, %s237
      %p239 = pneg %p95
      %p240 = pneg %p92
      %p241 = scmp.lt.s32.totalorder %s21, 0
      %s242 = scalar_select %p241, %s21, 0
      %s243 = scalar_lea.vmem %s2, %s242
      %p244 = pneg %p121
      %p245 = pneg %p118
      %p246 = pneg %p149
      %p247 = pneg %p146
      %s248 = smul.u32 4, %s20
      %p249 = scmp.lt.s32.totalorder %s248, 3
      %s250 = scalar_select %p249, %s248, 3
      %p251 = scmp.lt.s32.totalorder %s21, 0
      %s252 = scalar_select %p251, %s21, 0
      %s253 = sadd.s32 %s252, %s250
      %s254 = smul.addr %s253, 4
      %s255 = scalar_lea.vmem %s3, %s254
      %s256 = smul.u32 4, %s20
      %p257 = scmp.lt.s32.totalorder %s22, 8
      %s258 = scalar_select %p257, %s22, 8
      %p259 = scmp.lt.s32.totalorder %s256, 3
      %s260 = scalar_select %p259, %s256, 3
      %p261 = scmp.lt.s32.totalorder %s23, 0
      %s262 = scalar_select %p261, %s23, 0
      %s263 = sadd.s32 %s262, %s260
      %s264 = smul.addr %s258, 4
      %s265 = sadd.s32 %s263, %s264
      %s266 = smul.addr %s265, 4
      %s267 = scalar_lea.vmem %s0, %s266
      %s268 = smul.u32 4, %s20
      %s269 = smul.u32 16, %s23
      %p270 = scmp.lt.s32.totalorder %s22, 8
      %s271 = scalar_select %p270, %s22, 8
      %p272 = scmp.lt.s32.totalorder %s269, 15
      %s273 = scalar_select %p272, %s269, 15
      %p274 = scmp.lt.s32.totalorder %s21, 0
      %s275 = scalar_select %p274, %s21, 0
      %s276 = sadd.s32 %s275, %s273
      %s277 = smul.addr %s271, 16
      %s278 = sadd.s32 %s276, %s277
      %s279 = smul.addr %s278, 4
      %s280 = scalar_lea.vmem %s1, %s279
      %s281 = smul.u32 16, %s23
      %p282 = scmp.lt.s32.totalorder %s21, 0
      %s283 = scalar_select %p282, %s21, 0
      %s284 = scalar_lea.vmem %s2, %s283
      %s285 = smul.u32 4, %s20
      %p286 = scmp.lt.s32.totalorder %s285, 3
      %s287 = scalar_select %p286, %s285, 3
      %p288 = scmp.lt.s32.totalorder %s21, 0
      %s289 = scalar_select %p288, %s21, 0
      %s290 = sadd.s32 %s289, %s287
      %s291 = smul.addr %s290, 4
      %s292 = scalar_lea.vmem %s3, %s291
      %s293 = smul.u32 4, %s20
      %p295 = scmp.eq.s32.totalorder %s22, 0
      %p296 = scmp.eq.s32.totalorder %s23, 0
      %p297 = pnand %p295, %p296
      %p298 = pneg %p297
      // Predicated region
      $region33: #{backbone_stage_forward.15} parent=31 // pred_check
        _
      $region34: #{backbone_stage_forward.15} parent=31 // pred_check_branch
        %300 = sbr.rel (%p297) target = $region36
      $region35: #{backbone_stage_forward.15} parent=31 // pred_region
        %301 = vst [vmem:[#allocation2] sm:$0xff] 0.0
        %302 = vst [vmem:[#allocation2 + $0x8] sm:$0xff] 0.0
        %303 = vst [vmem:[#allocation2 + $0x10] sm:$0xff] 0.0
        %304 = vst [vmem:[#allocation2 + $0x18] sm:$0xff] 0.0
      $region36: #{backbone_stage_forward.15} parent=31 // pred_fallthru
        _
      %v305 = vld [vmem:[#allocation2] sm:$0xff]
      %v306 = vld [vmem:[#allocation2 + $0x8] sm:$0xff]
      %v307 = vld [vmem:[#allocation2 + $0x10] sm:$0xff]
      %v308 = vld [vmem:[#allocation2 + $0x18] sm:$0xff]
      %v309 = vld [vmem:[%s267] sm:$0xf]
      %v310 = vld [vmem:[%s267 + $0x4] sm:$0xf]
      %v311 = vld [vmem:[%s267 + $0x8] sm:$0xf]
      %v312 = vld [vmem:[%s267 + $0xc] sm:$0xf]
      %v313 = vld [vmem:[%s280] sm:$0xf]
      %v314 = vld [vmem:[%s280 + $0x4] sm:$0xf]
      %v315 = vld [vmem:[%s280 + $0x8] sm:$0xf]
      %v316 = vld [vmem:[%s280 + $0xc] sm:$0xf]
      %v317 = vld [vmem:[%s280 + $0x10] sm:$0xf]
      %v318 = vld [vmem:[%s280 + $0x14] sm:$0xf]
      %v319 = vld [vmem:[%s280 + $0x18] sm:$0xf]
      %v320 = vld [vmem:[%s280 + $0x1c] sm:$0xf]
      %v321 = vld [vmem:[%s280 + $0x20] sm:$0xf]
      %v322 = vld [vmem:[%s280 + $0x24] sm:$0xf]
      %v323 = vld [vmem:[%s280 + $0x28] sm:$0xf]
      %v324 = vld [vmem:[%s280 + $0x2c] sm:$0xf]
      %v325 = vld [vmem:[%s280 + $0x30] sm:$0xf]
      %v326 = vld [vmem:[%s280 + $0x34] sm:$0xf]
      %v327 = vld [vmem:[%s280 + $0x38] sm:$0xf]
      %v328 = vld [vmem:[%s280 + $0x3c] sm:$0xf]
      %v333 = vunpack.c.l.b16 %v309
      %v334 = vunpack.c.l.b16 %v310
      %v335 = vunpack.c.l.b16 %v311
      %v336 = vunpack.c.l.b16 %v312
      %v337 = vpack.c.b16 %v334, %v333
      %v338 = vpack.c.b16 %v336, %v335
      %v357 = vunpack.c.l.b16 %v313
      %v358 = vunpack.c.l.b16 %v314
      %v359 = vunpack.c.l.b16 %v315
      %v360 = vunpack.c.l.b16 %v316
      %v361 = vunpack.c.l.b16 %v317
      %v362 = vunpack.c.l.b16 %v318
      %v363 = vunpack.c.l.b16 %v319
      %v364 = vunpack.c.l.b16 %v320
      %v365 = vunpack.c.l.b16 %v321
      %v366 = vunpack.c.l.b16 %v322
      %v367 = vunpack.c.l.b16 %v323
      %v368 = vunpack.c.l.b16 %v324
      %v369 = vunpack.c.l.b16 %v325
      %v370 = vunpack.c.l.b16 %v326
      %v371 = vunpack.c.l.b16 %v327
      %v372 = vunpack.c.l.b16 %v328
      %v373 = vpack.c.b16 %v358, %v357
      %v374 = vpack.c.b16 %v360, %v359
      %v375 = vpack.c.b16 %v362, %v361
      %v376 = vpack.c.b16 %v364, %v363
      %v377 = vpack.c.b16 %v366, %v365
      %v378 = vpack.c.b16 %v368, %v367
      %v379 = vpack.c.b16 %v370, %v369
      %v380 = vpack.c.b16 %v372, %v371
      %389 = vmatprep.subr.bf16.mxu0 0
      %390 = vmatpush1.bf16.msra.mxu0 %v380
      %391 = vmatprep.subr.bf16.mxu0 0
      %392 = vmatpush1.bf16.msra.mxu0 %v379
      %393 = vmatprep.subr.bf16.mxu0 0
      %394 = vmatpush1.bf16.msra.mxu0 %v378
      %395 = vmatprep.subr.bf16.mxu0 0
      %396 = vmatpush1.bf16.msra.mxu0 %v377
      %397 = vmatprep.subr.bf16.mxu0 0
      %398 = vmatpush1.bf16.msra.mxu0 %v376
      %399 = vmatprep.subr.bf16.mxu0 0
      %400 = vmatpush1.bf16.msra.mxu0 %v375
      %401 = vmatprep.subr.bf16.mxu0 0
      %402 = vmatpush1.bf16.msra.mxu0 %v374
      %403 = vmatprep.subr.bf16.mxu0 0
      %404 = vmatpush1.bf16.msra.mxu0 %v373
      %405 = vmatprep.subr.bf16.mxu0 0
      %406 = vmatpush2.bf16.msra.mxu0 0
      %407 = vmatprep.subr.bf16.mxu0 0
      %408 = vmatpush2.bf16.msra.mxu0 0
      %409 = vmatprep.subr.bf16.mxu0 0
      %410 = vmatpush2.bf16.msra.mxu0 0
      %411 = vmatprep.subr.bf16.mxu0 0
      %412 = vmatpush2.bf16.msra.mxu0 0
      %413 = vmatprep.subr.bf16.mxu0 0
      %414 = vmatpush2.bf16.msra.mxu0 0
      %415 = vmatprep.subr.bf16.mxu0 0
      %416 = vmatpush2.bf16.msra.mxu0 0
      %417 = vmatprep.subr.bf16.mxu0 0
      %418 = vmatpush2.bf16.msra.mxu0 0
      %419 = vmatprep.subr.bf16.mxu0 0
      %420 = vmatpush2.bf16.msra.mxu0 0
      %421 = vmatprep.mubr.bf16.mxu0 0
      %422 = vmatmul.mubr.bf16.gmra.mxu0 %v337
      %v423 = vpop.f32.mrf.mxu0
      %v424 = vadd.f32 0.0, %v423
      %v425 = vpop.f32.mrf.mxu0
      %v426 = vpop.f32.mrf.mxu0
      %v427 = vadd.f32 0.0, %v426
      %v428 = vpop.f32.mrf.mxu0
      %429 = vmatprep.mubr.bf16.mxu0 0
      %430 = vmatmul.mubr.bf16.gmra.mxu0 %v338
      %v431 = vpop.f32.mrf.mxu0
      %v432 = vadd.f32 0.0, %v431
      %v433 = vpop.f32.mrf.mxu0
      %v434 = vpop.f32.mrf.mxu0
      %v435 = vadd.f32 0.0, %v434
      %v436 = vpop.f32.mrf.mxu0
      %437 = vdwg.mxu0
      %v438 = vadd.f32 %v305, %v424
      %v439 = vadd.f32 %v306, %v427
      %v440 = vadd.f32 %v307, %v432
      %v441 = vadd.f32 %v308, %v435
      %442 = vst [vmem:[#allocation2] sm:$0xff] %v438
      %443 = vst [vmem:[#allocation2 + $0x8] sm:$0xff] %v439
      %444 = vst [vmem:[#allocation2 + $0x10] sm:$0xff] %v440
      %445 = vst [vmem:[#allocation2 + $0x18] sm:$0xff] %v441
      %p446 = scmp.eq.s32.totalorder %s22, 8
      %p447 = pnand %p446, %p296
      %p448 = pneg %p447
      // Predicated region
      $region37: #{backbone_stage_forward.15} parent=31 // pred_check
        _
      $region38: #{backbone_stage_forward.15} parent=31 // pred_check_branch
        %450 = sbr.rel (%p447) target = $region40
      $region39: #{backbone_stage_forward.15} parent=31 // pred_region
        %v451 = vld [vmem:[#allocation2] sm:$0xff]
        %v452 = vld [vmem:[#allocation2 + $0x8] sm:$0xff]
        %v453 = vld [vmem:[#allocation2 + $0x10] sm:$0xff]
        %v454 = vld [vmem:[#allocation2 + $0x18] sm:$0xff]
        %v455 = vld [vmem:[%s284] sm:$0x1]
        %v457 = vlaneseq
        %v458 = vshrl.u32 %v457, 7
        %v459 = vsub.s32 0, %v458
        %v460 = vrot.slane %v455, %v459
        %v462 = vadd.f32 %v451, %v460
        %v463 = vadd.f32 %v452, %v460
        %v464 = vadd.f32 %v453, %v460
        %v465 = vadd.f32 %v454, %v460
        %v466 = vmax.f32 %v462, 0.0
        %v467 = vmax.f32 %v463, 0.0
        %v468 = vmax.f32 %v464, 0.0
        %v469 = vmax.f32 %v465, 0.0
        %v470 = vpack.c.bf16 %v467, %v466
        %v471 = vpack.c.bf16 %v469, %v468
        %v474 = vunpack.c.l.b16 %v470
        %v475 = vunpack.c.h.b16 %v470
        %v476 = vunpack.c.l.b16 %v471
        %v477 = vunpack.c.h.b16 %v471
        %v478 = vpack.c.b16 %v474, %v474
        %v479 = vpack.c.b16 %v475, %v475
        %v480 = vpack.c.b16 %v476, %v476
        %v481 = vpack.c.b16 %v477, %v477
        %486 = vst [vmem:[%s292] sm:$0xf] %v478
        %487 = vst [vmem:[%s292 + $0x4] sm:$0xf] %v479
        %488 = vst [vmem:[%s292 + $0x8] sm:$0xf] %v480
        %489 = vst [vmem:[%s292 + $0xc] sm:$0xf] %v481
      $region40: #{backbone_stage_forward.15} parent=31 // pred_fallthru
        _
      %s490 = smul.u32 4, %s20
      %p491 = scmp.lt.s32.totalorder %s490, 3
      %s492 = scalar_select %p491, %s490, 3
      %p493 = scmp.lt.s32.totalorder %s21, 0
      %s494 = scalar_select %p493, %s21, 0
      %s495 = sadd.s32 %s494, %s492
      %s496 = smul.addr %s495, 4
      %s497 = scalar_lea.vmem %s3, %s496
      // Predicated region
      $region41: #{backbone_stage_forward.15} parent=31 // pred_check
        %p498 = pneg %p146
      $region42: #{backbone_stage_forward.15} parent=31 // pred_check_branch
        %500 = sbr.rel (%p498) target = $region44
      $region43: #{backbone_stage_forward.15} parent=31 // pred_region
        %s501 = smul.u32 4, %s20
      $region44: #{backbone_stage_forward.15} parent=31 // pred_fallthru
        _
      // Predicated region
      $region45: #{backbone_stage_forward.15} parent=31 // pred_check
        %p502 = pneg %p146
      $region46: #{backbone_stage_forward.15} parent=31 // pred_check_branch
        %504 = sbr.rel (%p502) target = $region48
      $region47: #{backbone_stage_forward.15} parent=31 // pred_region
        %s505 = smul.u32 4, %s20
        %p506 = scmp.lt.s32.totalorder %s505, 3
        %s507 = scalar_select %p506, %s505, 3
        %p508 = scmp.lt.s32.totalorder %s21, 0
        %s509 = scalar_select %p508, %s21, 0
        %s510 = sadd.s32 %s509, %s507
        %s511 = smul.addr %s510, 4
        %s512 = scalar_lea.vmem %s3, %s511
      $region48: #{backbone_stage_forward.15} parent=31 // pred_fallthru
        _
    $region32: #{backbone_stage_forward.15} parent=5 // pred_fallthru
      _
    %p513 = scmp.le.s32.totalorder 2, %s9
    // Predicated region
    $region49: #{backbone_stage_forward.15} parent=5 // pred_check
      %p514 = pneg %p513
    $region50: #{backbone_stage_forward.15} parent=5 // pred_check_branch
      %516 = sbr.rel (%p514) target = $region52
    $region51: #{backbone_stage_forward.15} parent=5 // pred_region
      %s517 = ssub.s32 %s9, 2
    $region52: #{backbone_stage_forward.15} parent=5 // pred_fallthru
      _
  $region6: #{backbone_stage_forward.15} parent=0 // loop_footer
    %s13 = sadd.s32 1, %s9
  $region7: #{backbone_stage_forward.15} parent=0 // loop_footer_branch
    %8 = sbr.rel target = $region3
  $region8: #{backbone_stage_forward.15} parent=0 // loop_exit
    _

// kernel: backbone_stage_forward.17
$region0: #{backbone_stage_forward.17}
  #allocation0 [shape = 'u32[]', space=smem, size = 0x4, offset = 0x4, fixed_abs, tag = 'smem constant byte address 0x4 - core index']
  #allocation1 [shape = 'u32[144,128]{1,0:T(1,128)}', space=vmem, size = 0x12000, scoped, tag = 'internal scratch']
  #allocation2 [shape = 'f32[32,256]{1,0:T(8,128)}', space=vmem, size = 0x8000, scoped, tag = 'scratch operand']
  %s0 = inlined_call_operand.vmem [shape: bf16[1,32,128], index: 0, kind: input, shape index: {}]
  %s1 = inlined_call_operand.vmem [shape: bf16[1,128,256], index: 1, kind: input, shape index: {}]
  %s2 = inlined_call_operand.vmem [shape: f32[1,256], index: 2, kind: input, shape index: {}]
  %s3 = inlined_call_operand.vmem [shape: bf16[32,256], index: 3, kind: input, shape index: {}]
  %s4 = inlined_call_operand.vmem [shape: bf16[32,256], index: 4, kind: output, shape index: {}]
  %s5 = sld [smem:[#allocation0]]
  $region34: #{backbone_stage_forward.17} parent=0
    _
  %s7 = ssub.s32 1, %s5
  %s8 = scalar_select 0, %s7, %s5
  // Predicated region
  $region2: #{backbone_stage_forward.17} parent=0 // pred_check
    _
  $region3: #{backbone_stage_forward.17} parent=0 // pred_check_branch
    %10 = sbr.rel (0) target = $region5
  $region4: #{backbone_stage_forward.17} parent=0 // pred_region
    _
  $region5: #{backbone_stage_forward.17} parent=0 // pred_fallthru
    _
  // Predicated region
  $region6: #{backbone_stage_forward.17} parent=0 // pred_check
    _
  $region7: #{backbone_stage_forward.17} parent=0 // pred_check_branch
    %12 = sbr.rel (0) target = $region9
  $region8: #{backbone_stage_forward.17} parent=0 // pred_region
    _
  $region9: #{backbone_stage_forward.17} parent=0 // pred_fallthru
    _
  // Predicated region
  $region10: #{backbone_stage_forward.17} parent=0 // pred_check
    _
  $region11: #{backbone_stage_forward.17} parent=0 // pred_check_branch
    %14 = sbr.rel (0) target = $region13
  $region12: #{backbone_stage_forward.17} parent=0 // pred_region
    _
  $region13: #{backbone_stage_forward.17} parent=0 // pred_fallthru
    _
  // Predicated region
  $region14: #{backbone_stage_forward.17} parent=0 // pred_check
    _
  $region15: #{backbone_stage_forward.17} parent=0 // pred_check_branch
    %16 = sbr.rel (0) target = $region17
  $region16: #{backbone_stage_forward.17} parent=0 // pred_region
    _
  $region17: #{backbone_stage_forward.17} parent=0 // pred_fallthru
    _
  %p18 = scmp.eq.s32.totalorder 0, 0
  %p19 = scmp.eq.s32.totalorder 0, 0
  %p20 = pnand %p18, %p19
  %p21 = pneg %p20
  // Predicated region
  $region18: #{backbone_stage_forward.17} parent=0 // pred_check
    _
  $region19: #{backbone_stage_forward.17} parent=0 // pred_check_branch
    %23 = sbr.rel (%p20) target = $region21
  $region20: #{backbone_stage_forward.17} parent=0 // pred_region
    %24 = vst [vmem:[#allocation2] sm:$0xff] 0.0
    %25 = vst [vmem:[#allocation2 + $0x8] sm:$0xff] 0.0
    %26 = vst [vmem:[#allocation2 + $0x10] sm:$0xff] 0.0
    %27 = vst [vmem:[#allocation2 + $0x18] sm:$0xff] 0.0
    %28 = vst [vmem:[#allocation2 + $0x20] sm:$0xff] 0.0
    %29 = vst [vmem:[#allocation2 + $0x28] sm:$0xff] 0.0
    %30 = vst [vmem:[#allocation2 + $0x30] sm:$0xff] 0.0
    %31 = vst [vmem:[#allocation2 + $0x38] sm:$0xff] 0.0
  $region21: #{backbone_stage_forward.17} parent=0 // pred_fallthru
    _
  %v32 = vld [vmem:[#allocation2] sm:$0xff]
  %v33 = vld [vmem:[#allocation2 + $0x8] sm:$0xff]
  %v34 = vld [vmem:[#allocation2 + $0x10] sm:$0xff]
  %v35 = vld [vmem:[#allocation2 + $0x18] sm:$0xff]
  %v36 = vld [vmem:[#allocation2 + $0x20] sm:$0xff]
  %v37 = vld [vmem:[#allocation2 + $0x28] sm:$0xff]
  %v38 = vld [vmem:[#allocation2 + $0x30] sm:$0xff]
  %v39 = vld [vmem:[#allocation2 + $0x38] sm:$0xff]
  %v40 = vld [vmem:[%s0] sm:$0xf]
  %v41 = vld [vmem:[%s0 + $0x4] sm:$0xf]
  %v42 = vld [vmem:[%s0 + $0x8] sm:$0xf]
  %v43 = vld [vmem:[%s0 + $0xc] sm:$0xf]
  %v44 = vld [vmem:[%s1] sm:$0xff]
  %v45 = vld [vmem:[%s1 + $0x8] sm:$0xff]
  %v46 = vld [vmem:[%s1 + $0x10] sm:$0xff]
  %v47 = vld [vmem:[%s1 + $0x18] sm:$0xff]
  %v48 = vld [vmem:[%s1 + $0x20] sm:$0xff]
  %v49 = vld [vmem:[%s1 + $0x28] sm:$0xff]
  %v50 = vld [vmem:[%s1 + $0x30] sm:$0xff]
  %v51 = vld [vmem:[%s1 + $0x38] sm:$0xff]
  %v52 = vld [vmem:[%s1 + $0x40] sm:$0xff]
  %v53 = vld [vmem:[%s1 + $0x48] sm:$0xff]
  %v54 = vld [vmem:[%s1 + $0x50] sm:$0xff]
  %v55 = vld [vmem:[%s1 + $0x58] sm:$0xff]
  %v56 = vld [vmem:[%s1 + $0x60] sm:$0xff]
  %v57 = vld [vmem:[%s1 + $0x68] sm:$0xff]
  %v58 = vld [vmem:[%s1 + $0x70] sm:$0xff]
  %v59 = vld [vmem:[%s1 + $0x78] sm:$0xff]
  %v64 = vunpack.c.l.b16 %v40
  %v65 = vunpack.c.l.b16 %v41
  %v66 = vunpack.c.l.b16 %v42
  %v67 = vunpack.c.l.b16 %v43
  %v68 = vpack.c.b16 %v65, %v64
  %v69 = vpack.c.b16 %v67, %v66
  %v88 = vunpack.c.l.b16 %v44
  %v89 = vunpack.c.h.b16 %v44
  %v90 = vunpack.c.l.b16 %v45
  %v91 = vunpack.c.h.b16 %v45
  %v92 = vunpack.c.l.b16 %v46
  %v93 = vunpack.c.h.b16 %v46
  %v94 = vunpack.c.l.b16 %v47
  %v95 = vunpack.c.h.b16 %v47
  %v96 = vunpack.c.l.b16 %v48
  %v97 = vunpack.c.h.b16 %v48
  %v98 = vunpack.c.l.b16 %v49
  %v99 = vunpack.c.h.b16 %v49
  %v100 = vunpack.c.l.b16 %v50
  %v101 = vunpack.c.h.b16 %v50
  %v102 = vunpack.c.l.b16 %v51
  %v103 = vunpack.c.h.b16 %v51
  %v104 = vunpack.c.l.b16 %v52
  %v105 = vunpack.c.h.b16 %v52
  %v106 = vunpack.c.l.b16 %v53
  %v107 = vunpack.c.h.b16 %v53
  %v108 = vunpack.c.l.b16 %v54
  %v109 = vunpack.c.h.b16 %v54
  %v110 = vunpack.c.l.b16 %v55
  %v111 = vunpack.c.h.b16 %v55
  %v112 = vunpack.c.l.b16 %v56
  %v113 = vunpack.c.h.b16 %v56
  %v114 = vunpack.c.l.b16 %v57
  %v115 = vunpack.c.h.b16 %v57
  %v116 = vunpack.c.l.b16 %v58
  %v117 = vunpack.c.h.b16 %v58
  %v118 = vunpack.c.l.b16 %v59
  %v119 = vunpack.c.h.b16 %v59
  %v120 = vpack.c.b16 %v90, %v88
  %v121 = vpack.c.b16 %v91, %v89
  %v122 = vpack.c.b16 %v94, %v92
  %v123 = vpack.c.b16 %v95, %v93
  %v124 = vpack.c.b16 %v98, %v96
  %v125 = vpack.c.b16 %v99, %v97
  %v126 = vpack.c.b16 %v102, %v100
  %v127 = vpack.c.b16 %v103, %v101
  %v128 = vpack.c.b16 %v106, %v104
  %v129 = vpack.c.b16 %v107, %v105
  %v130 = vpack.c.b16 %v110, %v108
  %v131 = vpack.c.b16 %v111, %v109
  %v132 = vpack.c.b16 %v114, %v112
  %v133 = vpack.c.b16 %v115, %v113
  %v134 = vpack.c.b16 %v118, %v116
  %v135 = vpack.c.b16 %v119, %v117
  %152 = vmatprep.subr.bf16.mxu0 %v135
  %153 = vmatpush1.bf16.msra.mxu0 %v134
  %154 = vmatprep.subr.bf16.mxu0 %v133
  %155 = vmatpush1.bf16.msra.mxu0 %v132
  %156 = vmatprep.subr.bf16.mxu0 %v131
  %157 = vmatpush1.bf16.msra.mxu0 %v130
  %158 = vmatprep.subr.bf16.mxu0 %v129
  %159 = vmatpush1.bf16.msra.mxu0 %v128
  %160 = vmatprep.subr.bf16.mxu0 %v127
  %161 = vmatpush1.bf16.msra.mxu0 %v126
  %162 = vmatprep.subr.bf16.mxu0 %v125
  %163 = vmatpush1.bf16.msra.mxu0 %v124
  %164 = vmatprep.subr.bf16.mxu0 %v123
  %165 = vmatpush1.bf16.msra.mxu0 %v122
  %166 = vmatprep.subr.bf16.mxu0 %v121
  %167 = vmatpush1.bf16.msra.mxu0 %v120
  %168 = vmatprep.subr.bf16.mxu0 0
  %169 = vmatpush2.bf16.msra.mxu0 0
  %170 = vmatprep.subr.bf16.mxu0 0
  %171 = vmatpush2.bf16.msra.mxu0 0
  %172 = vmatprep.subr.bf16.mxu0 0
  %173 = vmatpush2.bf16.msra.mxu0 0
  %174 = vmatprep.subr.bf16.mxu0 0
  %175 = vmatpush2.bf16.msra.mxu0 0
  %176 = vmatprep.subr.bf16.mxu0 0
  %177 = vmatpush2.bf16.msra.mxu0 0
  %178 = vmatprep.subr.bf16.mxu0 0
  %179 = vmatpush2.bf16.msra.mxu0 0
  %180 = vmatprep.subr.bf16.mxu0 0
  %181 = vmatpush2.bf16.msra.mxu0 0
  %182 = vmatprep.subr.bf16.mxu0 0
  %183 = vmatpush2.bf16.msra.mxu0 0
  %184 = vmatprep.mubr.bf16.mxu0 0
  %185 = vmatmul.mubr.bf16.gmra.mxu0 %v68
  %v186 = vpop.f32.mrf.mxu0
  %v187 = vadd.f32 0.0, %v186
  %v188 = vpop.f32.mrf.mxu0
  %v189 = vadd.f32 0.0, %v188
  %v190 = vpop.f32.mrf.mxu0
  %v191 = vadd.f32 0.0, %v190
  %v192 = vpop.f32.mrf.mxu0
  %v193 = vadd.f32 0.0, %v192
  %194 = vmatprep.mubr.bf16.mxu0 0
  %195 = vmatmul.mubr.bf16.gmra.mxu0 %v69
  %v196 = vpop.f32.mrf.mxu0
  %v197 = vadd.f32 0.0, %v196
  %v198 = vpop.f32.mrf.mxu0
  %v199 = vadd.f32 0.0, %v198
  %v200 = vpop.f32.mrf.mxu0
  %v201 = vadd.f32 0.0, %v200
  %v202 = vpop.f32.mrf.mxu0
  %v203 = vadd.f32 0.0, %v202
  %204 = vdwg.mxu0
  %v205 = vadd.f32 %v32, %v187
  %v206 = vadd.f32 %v33, %v189
  %v207 = vadd.f32 %v34, %v191
  %v208 = vadd.f32 %v35, %v193
  %v209 = vadd.f32 %v36, %v197
  %v210 = vadd.f32 %v37, %v199
  %v211 = vadd.f32 %v38, %v201
  %v212 = vadd.f32 %v39, %v203
  %213 = vst [vmem:[#allocation2] sm:$0xff] %v205
  %214 = vst [vmem:[#allocation2 + $0x8] sm:$0xff] %v206
  %215 = vst [vmem:[#allocation2 + $0x10] sm:$0xff] %v207
  %216 = vst [vmem:[#allocation2 + $0x18] sm:$0xff] %v208
  %217 = vst [vmem:[#allocation2 + $0x20] sm:$0xff] %v209
  %218 = vst [vmem:[#allocation2 + $0x28] sm:$0xff] %v210
  %219 = vst [vmem:[#allocation2 + $0x30] sm:$0xff] %v211
  %220 = vst [vmem:[#allocation2 + $0x38] sm:$0xff] %v212
  // Predicated region
  $region22: #{backbone_stage_forward.17} parent=0 // pred_check
    _
  $region23: #{backbone_stage_forward.17} parent=0 // pred_check_branch
    %222 = sbr.rel (%p20) target = $region25
  $region24: #{backbone_stage_forward.17} parent=0 // pred_region
    %v223 = vld [vmem:[#allocation2] sm:$0xff]
    %v224 = vld [vmem:[#allocation2 + $0x8] sm:$0xff]
    %v225 = vld [vmem:[#allocation2 + $0x10] sm:$0xff]
    %v226 = vld [vmem:[#allocation2 + $0x18] sm:$0xff]
    %v227 = vld [vmem:[#allocation2 + $0x20] sm:$0xff]
    %v228 = vld [vmem:[#allocation2 + $0x28] sm:$0xff]
    %v229 = vld [vmem:[#allocation2 + $0x30] sm:$0xff]
    %v230 = vld [vmem:[#allocation2 + $0x38] sm:$0xff]
    %v231 = vld [vmem:[%s2] sm:$0x3]
    %v233 = vlaneseq
    %v234 = vshrl.u32 %v233, 7
    %v235 = vsub.s32 0, %v234
    %v236 = vrot.slane %v231, %v235
    %v237 = vlaneseq
    %v238 = vshrl.u32 %v237, 7
    %v239 = vsub.s32 1, %v238
    %v240 = vrot.slane %v231, %v239
    %v243 = vadd.f32 %v223, %v236
    %v244 = vadd.f32 %v224, %v240
    %v245 = vadd.f32 %v225, %v236
    %v246 = vadd.f32 %v226, %v240
    %v247 = vadd.f32 %v227, %v236
    %v248 = vadd.f32 %v228, %v240
    %v249 = vadd.f32 %v229, %v236
    %v250 = vadd.f32 %v230, %v240
    %v251 = vld [vmem:[%s3] sm:$0xff]
    %v252 = vld [vmem:[%s3 + $0x8] sm:$0xff]
    %v253 = vld [vmem:[%s3 + $0x10] sm:$0xff]
    %v254 = vld [vmem:[%s3 + $0x18] sm:$0xff]
    %v255 = vunpack.c.l.bf16 %v251
    %v256 = vunpack.c.h.bf16 %v251
    %v257 = vunpack.c.l.bf16 %v252
    %v258 = vunpack.c.h.bf16 %v252
    %v259 = vunpack.c.l.bf16 %v253
    %v260 = vunpack.c.h.bf16 %v253
    %v261 = vunpack.c.l.bf16 %v254
    %v262 = vunpack.c.h.bf16 %v254
    %v263 = vadd.f32 %v243, %v255
    %v264 = vadd.f32 %v244, %v256
    %v265 = vadd.f32 %v245, %v257
    %v266 = vadd.f32 %v246, %v258
    %v267 = vadd.f32 %v247, %v259
    %v268 = vadd.f32 %v248, %v260
    %v269 = vadd.f32 %v249, %v261
    %v270 = vadd.f32 %v250, %v262
    %v271 = vmax.f32 %v263, 0.0
    %v272 = vmax.f32 %v264, 0.0
    %v273 = vmax.f32 %v265, 0.0
    %v274 = vmax.f32 %v266, 0.0
    %v275 = vmax.f32 %v267, 0.0
    %v276 = vmax.f32 %v268, 0.0
    %v277 = vmax.f32 %v269, 0.0
    %v278 = vmax.f32 %v270, 0.0
    %v279 = vpack.c.bf16 %v273, %v271
    %v280 = vpack.c.bf16 %v274, %v272
    %v281 = vpack.c.bf16 %v277, %v275
    %v282 = vpack.c.bf16 %v278, %v276
    %v287 = vunpack.c.l.b16 %v279
    %v288 = vunpack.c.l.b16 %v280
    %v289 = vunpack.c.h.b16 %v279
    %v290 = vunpack.c.h.b16 %v280
    %v291 = vunpack.c.l.b16 %v281
    %v292 = vunpack.c.l.b16 %v282
    %v293 = vunpack.c.h.b16 %v281
    %v294 = vunpack.c.h.b16 %v282
    %v295 = vpack.c.b16 %v288, %v287
    %v296 = vpack.c.b16 %v290, %v289
    %v297 = vpack.c.b16 %v292, %v291
    %v298 = vpack.c.b16 %v294, %v293
    %303 = vst [vmem:[%s4] sm:$0xff] %v295
    %304 = vst [vmem:[%s4 + $0x8] sm:$0xff] %v296
    %305 = vst [vmem:[%s4 + $0x10] sm:$0xff] %v297
    %306 = vst [vmem:[%s4 + $0x18] sm:$0xff] %v298
  $region25: #{backbone_stage_forward.17} parent=0 // pred_fallthru
    _
  // Predicated region
  $region26: #{backbone_stage_forward.17} parent=0 // pred_check
    _
  $region27: #{backbone_stage_forward.17} parent=0 // pred_check_branch
    %308 = sbr.rel (0) target = $region29
  $region28: #{backbone_stage_forward.17} parent=0 // pred_region
    _
  $region29: #{backbone_stage_forward.17} parent=0 // pred_fallthru
    _
  // Predicated region
  $region30: #{backbone_stage_forward.17} parent=0 // pred_check
    _
  $region31: #{backbone_stage_forward.17} parent=0 // pred_check_branch
    %310 = sbr.rel (0) target = $region33
  $region32: #{backbone_stage_forward.17} parent=0 // pred_region
    _
  $region33: #{backbone_stage_forward.17} parent=0 // pred_fallthru
    _

// kernel: backbone_stage_forward.16
$region0: #{backbone_stage_forward.16}
  #allocation0 [shape = 'u32[]', space=smem, size = 0x4, offset = 0x4, fixed_abs, tag = 'smem constant byte address 0x4 - core index']
  #allocation1 [shape = 'u32[144,128]{1,0:T(1,128)}', space=vmem, size = 0x12000, scoped, tag = 'internal scratch']
  #allocation2 [shape = 'f32[32,256]{1,0:T(8,128)}', space=vmem, size = 0x8000, scoped, tag = 'scratch operand']
  %s0 = inlined_call_operand.vmem [shape: bf16[1,32,128], index: 0, kind: input, shape index: {}]
  %s1 = inlined_call_operand.vmem [shape: bf16[1,128,256], index: 1, kind: input, shape index: {}]
  %s2 = inlined_call_operand.vmem [shape: f32[1,256], index: 2, kind: input, shape index: {}]
  %s3 = inlined_call_operand.vmem [shape: bf16[32,256], index: 3, kind: output, shape index: {}]
  %s4 = sld [smem:[#allocation0]]
  $region30: #{backbone_stage_forward.16} parent=0
    _
  %s6 = ssub.s32 1, %s4
  %s7 = scalar_select 0, %s6, %s4
  // Predicated region
  $region2: #{backbone_stage_forward.16} parent=0 // pred_check
    _
  $region3: #{backbone_stage_forward.16} parent=0 // pred_check_branch
    %9 = sbr.rel (0) target = $region5
  $region4: #{backbone_stage_forward.16} parent=0 // pred_region
    _
  $region5: #{backbone_stage_forward.16} parent=0 // pred_fallthru
    _
  // Predicated region
  $region6: #{backbone_stage_forward.16} parent=0 // pred_check
    _
  $region7: #{backbone_stage_forward.16} parent=0 // pred_check_branch
    %11 = sbr.rel (0) target = $region9
  $region8: #{backbone_stage_forward.16} parent=0 // pred_region
    _
  $region9: #{backbone_stage_forward.16} parent=0 // pred_fallthru
    _
  // Predicated region
  $region10: #{backbone_stage_forward.16} parent=0 // pred_check
    _
  $region11: #{backbone_stage_forward.16} parent=0 // pred_check_branch
    %13 = sbr.rel (0) target = $region13
  $region12: #{backbone_stage_forward.16} parent=0 // pred_region
    _
  $region13: #{backbone_stage_forward.16} parent=0 // pred_fallthru
    _
  %p15 = scmp.eq.s32.totalorder 0, 0
  %p16 = scmp.eq.s32.totalorder 0, 0
  %p17 = pnand %p15, %p16
  %p18 = pneg %p17
  // Predicated region
  $region14: #{backbone_stage_forward.16} parent=0 // pred_check
    _
  $region15: #{backbone_stage_forward.16} parent=0 // pred_check_branch
    %20 = sbr.rel (%p17) target = $region17
  $region16: #{backbone_stage_forward.16} parent=0 // pred_region
    %21 = vst [vmem:[#allocation2] sm:$0xff] 0.0
    %22 = vst [vmem:[#allocation2 + $0x8] sm:$0xff] 0.0
    %23 = vst [vmem:[#allocation2 + $0x10] sm:$0xff] 0.0
    %24 = vst [vmem:[#allocation2 + $0x18] sm:$0xff] 0.0
    %25 = vst [vmem:[#allocation2 + $0x20] sm:$0xff] 0.0
    %26 = vst [vmem:[#allocation2 + $0x28] sm:$0xff] 0.0
    %27 = vst [vmem:[#allocation2 + $0x30] sm:$0xff] 0.0
    %28 = vst [vmem:[#allocation2 + $0x38] sm:$0xff] 0.0
  $region17: #{backbone_stage_forward.16} parent=0 // pred_fallthru
    _
  %v29 = vld [vmem:[#allocation2] sm:$0xff]
  %v30 = vld [vmem:[#allocation2 + $0x8] sm:$0xff]
  %v31 = vld [vmem:[#allocation2 + $0x10] sm:$0xff]
  %v32 = vld [vmem:[#allocation2 + $0x18] sm:$0xff]
  %v33 = vld [vmem:[#allocation2 + $0x20] sm:$0xff]
  %v34 = vld [vmem:[#allocation2 + $0x28] sm:$0xff]
  %v35 = vld [vmem:[#allocation2 + $0x30] sm:$0xff]
  %v36 = vld [vmem:[#allocation2 + $0x38] sm:$0xff]
  %v37 = vld [vmem:[%s0] sm:$0xf]
  %v38 = vld [vmem:[%s0 + $0x4] sm:$0xf]
  %v39 = vld [vmem:[%s0 + $0x8] sm:$0xf]
  %v40 = vld [vmem:[%s0 + $0xc] sm:$0xf]
  %v41 = vld [vmem:[%s1] sm:$0xff]
  %v42 = vld [vmem:[%s1 + $0x8] sm:$0xff]
  %v43 = vld [vmem:[%s1 + $0x10] sm:$0xff]
  %v44 = vld [vmem:[%s1 + $0x18] sm:$0xff]
  %v45 = vld [vmem:[%s1 + $0x20] sm:$0xff]
  %v46 = vld [vmem:[%s1 + $0x28] sm:$0xff]
  %v47 = vld [vmem:[%s1 + $0x30] sm:$0xff]
  %v48 = vld [vmem:[%s1 + $0x38] sm:$0xff]
  %v49 = vld [vmem:[%s1 + $0x40] sm:$0xff]
  %v50 = vld [vmem:[%s1 + $0x48] sm:$0xff]
  %v51 = vld [vmem:[%s1 + $0x50] sm:$0xff]
  %v52 = vld [vmem:[%s1 + $0x58] sm:$0xff]
  %v53 = vld [vmem:[%s1 + $0x60] sm:$0xff]
  %v54 = vld [vmem:[%s1 + $0x68] sm:$0xff]
  %v55 = vld [vmem:[%s1 + $0x70] sm:$0xff]
  %v56 = vld [vmem:[%s1 + $0x78] sm:$0xff]
  %v61 = vunpack.c.l.b16 %v37
  %v62 = vunpack.c.l.b16 %v38
  %v63 = vunpack.c.l.b16 %v39
  %v64 = vunpack.c.l.b16 %v40
  %v65 = vpack.c.b16 %v62, %v61
  %v66 = vpack.c.b16 %v64, %v63
  %v85 = vunpack.c.l.b16 %v41
  %v86 = vunpack.c.h.b16 %v41
  %v87 = vunpack.c.l.b16 %v42
  %v88 = vunpack.c.h.b16 %v42
  %v89 = vunpack.c.l.b16 %v43
  %v90 = vunpack.c.h.b16 %v43
  %v91 = vunpack.c.l.b16 %v44
  %v92 = vunpack.c.h.b16 %v44
  %v93 = vunpack.c.l.b16 %v45
  %v94 = vunpack.c.h.b16 %v45
  %v95 = vunpack.c.l.b16 %v46
  %v96 = vunpack.c.h.b16 %v46
  %v97 = vunpack.c.l.b16 %v47
  %v98 = vunpack.c.h.b16 %v47
  %v99 = vunpack.c.l.b16 %v48
  %v100 = vunpack.c.h.b16 %v48
  %v101 = vunpack.c.l.b16 %v49
  %v102 = vunpack.c.h.b16 %v49
  %v103 = vunpack.c.l.b16 %v50
  %v104 = vunpack.c.h.b16 %v50
  %v105 = vunpack.c.l.b16 %v51
  %v106 = vunpack.c.h.b16 %v51
  %v107 = vunpack.c.l.b16 %v52
  %v108 = vunpack.c.h.b16 %v52
  %v109 = vunpack.c.l.b16 %v53
  %v110 = vunpack.c.h.b16 %v53
  %v111 = vunpack.c.l.b16 %v54
  %v112 = vunpack.c.h.b16 %v54
  %v113 = vunpack.c.l.b16 %v55
  %v114 = vunpack.c.h.b16 %v55
  %v115 = vunpack.c.l.b16 %v56
  %v116 = vunpack.c.h.b16 %v56
  %v117 = vpack.c.b16 %v87, %v85
  %v118 = vpack.c.b16 %v88, %v86
  %v119 = vpack.c.b16 %v91, %v89
  %v120 = vpack.c.b16 %v92, %v90
  %v121 = vpack.c.b16 %v95, %v93
  %v122 = vpack.c.b16 %v96, %v94
  %v123 = vpack.c.b16 %v99, %v97
  %v124 = vpack.c.b16 %v100, %v98
  %v125 = vpack.c.b16 %v103, %v101
  %v126 = vpack.c.b16 %v104, %v102
  %v127 = vpack.c.b16 %v107, %v105
  %v128 = vpack.c.b16 %v108, %v106
  %v129 = vpack.c.b16 %v111, %v109
  %v130 = vpack.c.b16 %v112, %v110
  %v131 = vpack.c.b16 %v115, %v113
  %v132 = vpack.c.b16 %v116, %v114
  %149 = vmatprep.subr.bf16.mxu0 %v132
  %150 = vmatpush1.bf16.msra.mxu0 %v131
  %151 = vmatprep.subr.bf16.mxu0 %v130
  %152 = vmatpush1.bf16.msra.mxu0 %v129
  %153 = vmatprep.subr.bf16.mxu0 %v128
  %154 = vmatpush1.bf16.msra.mxu0 %v127
  %155 = vmatprep.subr.bf16.mxu0 %v126
  %156 = vmatpush1.bf16.msra.mxu0 %v125
  %157 = vmatprep.subr.bf16.mxu0 %v124
  %158 = vmatpush1.bf16.msra.mxu0 %v123
  %159 = vmatprep.subr.bf16.mxu0 %v122
  %160 = vmatpush1.bf16.msra.mxu0 %v121
  %161 = vmatprep.subr.bf16.mxu0 %v120
  %162 = vmatpush1.bf16.msra.mxu0 %v119
  %163 = vmatprep.subr.bf16.mxu0 %v118
  %164 = vmatpush1.bf16.msra.mxu0 %v117
  %165 = vmatprep.subr.bf16.mxu0 0
  %166 = vmatpush2.bf16.msra.mxu0 0
  %167 = vmatprep.subr.bf16.mxu0 0
  %168 = vmatpush2.bf16.msra.mxu0 0
  %169 = vmatprep.subr.bf16.mxu0 0
  %170 = vmatpush2.bf16.msra.mxu0 0
  %171 = vmatprep.subr.bf16.mxu0 0
  %172 = vmatpush2.bf16.msra.mxu0 0
  %173 = vmatprep.subr.bf16.mxu0 0
  %174 = vmatpush2.bf16.msra.mxu0 0
  %175 = vmatprep.subr.bf16.mxu0 0
  %176 = vmatpush2.bf16.msra.mxu0 0
  %177 = vmatprep.subr.bf16.mxu0 0
  %178 = vmatpush2.bf16.msra.mxu0 0
  %179 = vmatprep.subr.bf16.mxu0 0
  %180 = vmatpush2.bf16.msra.mxu0 0
  %181 = vmatprep.mubr.bf16.mxu0 0
  %182 = vmatmul.mubr.bf16.gmra.mxu0 %v65
  %v183 = vpop.f32.mrf.mxu0
  %v184 = vadd.f32 0.0, %v183
  %v185 = vpop.f32.mrf.mxu0
  %v186 = vadd.f32 0.0, %v185
  %v187 = vpop.f32.mrf.mxu0
  %v188 = vadd.f32 0.0, %v187
  %v189 = vpop.f32.mrf.mxu0
  %v190 = vadd.f32 0.0, %v189
  %191 = vmatprep.mubr.bf16.mxu0 0
  %192 = vmatmul.mubr.bf16.gmra.mxu0 %v66
  %v193 = vpop.f32.mrf.mxu0
  %v194 = vadd.f32 0.0, %v193
  %v195 = vpop.f32.mrf.mxu0
  %v196 = vadd.f32 0.0, %v195
  %v197 = vpop.f32.mrf.mxu0
  %v198 = vadd.f32 0.0, %v197
  %v199 = vpop.f32.mrf.mxu0
  %v200 = vadd.f32 0.0, %v199
  %201 = vdwg.mxu0
  %v202 = vadd.f32 %v29, %v184
  %v203 = vadd.f32 %v30, %v186
  %v204 = vadd.f32 %v31, %v188
  %v205 = vadd.f32 %v32, %v190
  %v206 = vadd.f32 %v33, %v194
  %v207 = vadd.f32 %v34, %v196
  %v208 = vadd.f32 %v35, %v198
  %v209 = vadd.f32 %v36, %v200
  %210 = vst [vmem:[#allocation2] sm:$0xff] %v202
  %211 = vst [vmem:[#allocation2 + $0x8] sm:$0xff] %v203
  %212 = vst [vmem:[#allocation2 + $0x10] sm:$0xff] %v204
  %213 = vst [vmem:[#allocation2 + $0x18] sm:$0xff] %v205
  %214 = vst [vmem:[#allocation2 + $0x20] sm:$0xff] %v206
  %215 = vst [vmem:[#allocation2 + $0x28] sm:$0xff] %v207
  %216 = vst [vmem:[#allocation2 + $0x30] sm:$0xff] %v208
  %217 = vst [vmem:[#allocation2 + $0x38] sm:$0xff] %v209
  // Predicated region
  $region18: #{backbone_stage_forward.16} parent=0 // pred_check
    _
  $region19: #{backbone_stage_forward.16} parent=0 // pred_check_branch
    %219 = sbr.rel (%p17) target = $region21
  $region20: #{backbone_stage_forward.16} parent=0 // pred_region
    %v220 = vld [vmem:[#allocation2] sm:$0xff]
    %v221 = vld [vmem:[#allocation2 + $0x8] sm:$0xff]
    %v222 = vld [vmem:[#allocation2 + $0x10] sm:$0xff]
    %v223 = vld [vmem:[#allocation2 + $0x18] sm:$0xff]
    %v224 = vld [vmem:[#allocation2 + $0x20] sm:$0xff]
    %v225 = vld [vmem:[#allocation2 + $0x28] sm:$0xff]
    %v226 = vld [vmem:[#allocation2 + $0x30] sm:$0xff]
    %v227 = vld [vmem:[#allocation2 + $0x38] sm:$0xff]
    %v228 = vld [vmem:[%s2] sm:$0x3]
    %v230 = vlaneseq
    %v231 = vshrl.u32 %v230, 7
    %v232 = vsub.s32 0, %v231
    %v233 = vrot.slane %v228, %v232
    %v234 = vlaneseq
    %v235 = vshrl.u32 %v234, 7
    %v236 = vsub.s32 1, %v235
    %v237 = vrot.slane %v228, %v236
    %v240 = vadd.f32 %v220, %v233
    %v241 = vadd.f32 %v221, %v237
    %v242 = vadd.f32 %v222, %v233
    %v243 = vadd.f32 %v223, %v237
    %v244 = vadd.f32 %v224, %v233
    %v245 = vadd.f32 %v225, %v237
    %v246 = vadd.f32 %v226, %v233
    %v247 = vadd.f32 %v227, %v237
    %v248 = vpack.c.bf16 %v242, %v240
    %v249 = vpack.c.bf16 %v243, %v241
    %v250 = vpack.c.bf16 %v246, %v244
    %v251 = vpack.c.bf16 %v247, %v245
    %v256 = vunpack.c.l.b16 %v248
    %v257 = vunpack.c.l.b16 %v249
    %v258 = vunpack.c.h.b16 %v248
    %v259 = vunpack.c.h.b16 %v249
    %v260 = vunpack.c.l.b16 %v250
    %v261 = vunpack.c.l.b16 %v251
    %v262 = vunpack.c.h.b16 %v250
    %v263 = vunpack.c.h.b16 %v251
    %v264 = vpack.c.b16 %v257, %v256
    %v265 = vpack.c.b16 %v259, %v258
    %v266 = vpack.c.b16 %v261, %v260
    %v267 = vpack.c.b16 %v263, %v262
    %272 = vst [vmem:[%s3] sm:$0xff] %v264
    %273 = vst [vmem:[%s3 + $0x8] sm:$0xff] %v265
    %274 = vst [vmem:[%s3 + $0x10] sm:$0xff] %v266
    %275 = vst [vmem:[%s3 + $0x18] sm:$0xff] %v267
  $region21: #{backbone_stage_forward.16} parent=0 // pred_fallthru
    _
  // Predicated region
  $region22: #{backbone_stage_forward.16} parent=0 // pred_check
    _
  $region23: #{backbone_stage_forward.16} parent=0 // pred_check_branch
    %277 = sbr.rel (0) target = $region25
  $region24: #{backbone_stage_forward.16} parent=0 // pred_region
    _
  $region25: #{backbone_stage_forward.16} parent=0 // pred_fallthru
    _
  // Predicated region
  $region26: #{backbone_stage_forward.16} parent=0 // pred_check
    _
  $region27: #{backbone_stage_forward.16} parent=0 // pred_check_branch
    %279 = sbr.rel (0) target = $region29
  $region28: #{backbone_stage_forward.16} parent=0 // pred_region
    _
  $region29: #{backbone_stage_forward.16} parent=0 // pred_fallthru
    _

// kernel: backbone_stage_forward.18
$region0: #{backbone_stage_forward.18}
  #allocation0 [shape = 'u32[]', space=smem, size = 0x4, offset = 0x4, fixed_abs, tag = 'smem constant byte address 0x4 - core index']
  #allocation1 [shape = 'u32[144,128]{1,0:T(1,128)}', space=vmem, size = 0x12000, scoped, tag = 'internal scratch']
  #allocation2 [shape = 'f32[32,128]{1,0:T(8,128)}', space=vmem, size = 0x4000, scoped, tag = 'scratch operand']
  %s0 = inlined_call_operand.vmem [shape: bf16[1,32,256], index: 0, kind: input, shape index: {}]
  %s1 = inlined_call_operand.vmem [shape: bf16[1,256,128], index: 1, kind: input, shape index: {}]
  %s2 = inlined_call_operand.vmem [shape: f32[1,128], index: 2, kind: input, shape index: {}]
  %s3 = inlined_call_operand.vmem [shape: bf16[32,128], index: 3, kind: output, shape index: {}]
  %s4 = sld [smem:[#allocation0]]
  $region30: #{backbone_stage_forward.18} parent=0
    _
  %s6 = ssub.s32 1, %s4
  %s7 = scalar_select 0, %s6, %s4
  // Predicated region
  $region2: #{backbone_stage_forward.18} parent=0 // pred_check
    _
  $region3: #{backbone_stage_forward.18} parent=0 // pred_check_branch
    %9 = sbr.rel (0) target = $region5
  $region4: #{backbone_stage_forward.18} parent=0 // pred_region
    _
  $region5: #{backbone_stage_forward.18} parent=0 // pred_fallthru
    _
  // Predicated region
  $region6: #{backbone_stage_forward.18} parent=0 // pred_check
    _
  $region7: #{backbone_stage_forward.18} parent=0 // pred_check_branch
    %11 = sbr.rel (0) target = $region9
  $region8: #{backbone_stage_forward.18} parent=0 // pred_region
    _
  $region9: #{backbone_stage_forward.18} parent=0 // pred_fallthru
    _
  // Predicated region
  $region10: #{backbone_stage_forward.18} parent=0 // pred_check
    _
  $region11: #{backbone_stage_forward.18} parent=0 // pred_check_branch
    %13 = sbr.rel (0) target = $region13
  $region12: #{backbone_stage_forward.18} parent=0 // pred_region
    _
  $region13: #{backbone_stage_forward.18} parent=0 // pred_fallthru
    _
  %p15 = scmp.eq.s32.totalorder 0, 0
  %p16 = scmp.eq.s32.totalorder 0, 0
  %p17 = pnand %p15, %p16
  %p18 = pneg %p17
  // Predicated region
  $region14: #{backbone_stage_forward.18} parent=0 // pred_check
    _
  $region15: #{backbone_stage_forward.18} parent=0 // pred_check_branch
    %20 = sbr.rel (%p17) target = $region17
  $region16: #{backbone_stage_forward.18} parent=0 // pred_region
    %21 = vst [vmem:[#allocation2] sm:$0xff] 0.0
    %22 = vst [vmem:[#allocation2 + $0x8] sm:$0xff] 0.0
    %23 = vst [vmem:[#allocation2 + $0x10] sm:$0xff] 0.0
    %24 = vst [vmem:[#allocation2 + $0x18] sm:$0xff] 0.0
  $region17: #{backbone_stage_forward.18} parent=0 // pred_fallthru
    _
  %v25 = vld [vmem:[#allocation2] sm:$0xff]
  %v26 = vld [vmem:[#allocation2 + $0x8] sm:$0xff]
  %v27 = vld [vmem:[#allocation2 + $0x10] sm:$0xff]
  %v28 = vld [vmem:[#allocation2 + $0x18] sm:$0xff]
  %v29 = vld [vmem:[%s0] sm:$0xff]
  %v30 = vld [vmem:[%s0 + $0x8] sm:$0xff]
  %v31 = vld [vmem:[%s0 + $0x10] sm:$0xff]
  %v32 = vld [vmem:[%s0 + $0x18] sm:$0xff]
  %v33 = vld [vmem:[%s1] sm:$0xf]
  %v34 = vld [vmem:[%s1 + $0x4] sm:$0xf]
  %v35 = vld [vmem:[%s1 + $0x8] sm:$0xf]
  %v36 = vld [vmem:[%s1 + $0xc] sm:$0xf]
  %v37 = vld [vmem:[%s1 + $0x10] sm:$0xf]
  %v38 = vld [vmem:[%s1 + $0x14] sm:$0xf]
  %v39 = vld [vmem:[%s1 + $0x18] sm:$0xf]
  %v40 = vld [vmem:[%s1 + $0x1c] sm:$0xf]
  %v41 = vld [vmem:[%s1 + $0x20] sm:$0xf]
  %v42 = vld [vmem:[%s1 + $0x24] sm:$0xf]
  %v43 = vld [vmem:[%s1 + $0x28] sm:$0xf]
  %v44 = vld [vmem:[%s1 + $0x2c] sm:$0xf]
  %v45 = vld [vmem:[%s1 + $0x30] sm:$0xf]
  %v46 = vld [vmem:[%s1 + $0x34] sm:$0xf]
  %v47 = vld [vmem:[%s1 + $0x38] sm:$0xf]
  %v48 = vld [vmem:[%s1 + $0x3c] sm:$0xf]
  %v49 = vld [vmem:[%s1 + $0x40] sm:$0xf]
  %v50 = vld [vmem:[%s1 + $0x44] sm:$0xf]
  %v51 = vld [vmem:[%s1 + $0x48] sm:$0xf]
  %v52 = vld [vmem:[%s1 + $0x4c] sm:$0xf]
  %v53 = vld [vmem:[%s1 + $0x50] sm:$0xf]
  %v54 = vld [vmem:[%s1 + $0x54] sm:$0xf]
  %v55 = vld [vmem:[%s1 + $0x58] sm:$0xf]
  %v56 = vld [vmem:[%s1 + $0x5c] sm:$0xf]
  %v57 = vld [vmem:[%s1 + $0x60] sm:$0xf]
  %v58 = vld [vmem:[%s1 + $0x64] sm:$0xf]
  %v59 = vld [vmem:[%s1 + $0x68] sm:$0xf]
  %v60 = vld [vmem:[%s1 + $0x6c] sm:$0xf]
  %v61 = vld [vmem:[%s1 + $0x70] sm:$0xf]
  %v62 = vld [vmem:[%s1 + $0x74] sm:$0xf]
  %v63 = vld [vmem:[%s1 + $0x78] sm:$0xf]
  %v64 = vld [vmem:[%s1 + $0x7c] sm:$0xf]
  %v69 = vunpack.c.l.b16 %v29
  %v70 = vunpack.c.h.b16 %v29
  %v71 = vunpack.c.l.b16 %v30
  %v72 = vunpack.c.h.b16 %v30
  %v73 = vunpack.c.l.b16 %v31
  %v74 = vunpack.c.h.b16 %v31
  %v75 = vunpack.c.l.b16 %v32
  %v76 = vunpack.c.h.b16 %v32
  %v77 = vpack.c.b16 %v71, %v69
  %v78 = vpack.c.b16 %v72, %v70
  %v79 = vpack.c.b16 %v75, %v73
  %v80 = vpack.c.b16 %v76, %v74
  %v117 = vunpack.c.l.b16 %v33
  %v118 = vunpack.c.l.b16 %v34
  %v119 = vunpack.c.l.b16 %v35
  %v120 = vunpack.c.l.b16 %v36
  %v121 = vunpack.c.l.b16 %v37
  %v122 = vunpack.c.l.b16 %v38
  %v123 = vunpack.c.l.b16 %v39
  %v124 = vunpack.c.l.b16 %v40
  %v125 = vunpack.c.l.b16 %v41
  %v126 = vunpack.c.l.b16 %v42
  %v127 = vunpack.c.l.b16 %v43
  %v128 = vunpack.c.l.b16 %v44
  %v129 = vunpack.c.l.b16 %v45
  %v130 = vunpack.c.l.b16 %v46
  %v131 = vunpack.c.l.b16 %v47
  %v132 = vunpack.c.l.b16 %v48
  %v133 = vunpack.c.l.b16 %v49
  %v134 = vunpack.c.l.b16 %v50
  %v135 = vunpack.c.l.b16 %v51
  %v136 = vunpack.c.l.b16 %v52
  %v137 = vunpack.c.l.b16 %v53
  %v138 = vunpack.c.l.b16 %v54
  %v139 = vunpack.c.l.b16 %v55
  %v140 = vunpack.c.l.b16 %v56
  %v141 = vunpack.c.l.b16 %v57
  %v142 = vunpack.c.l.b16 %v58
  %v143 = vunpack.c.l.b16 %v59
  %v144 = vunpack.c.l.b16 %v60
  %v145 = vunpack.c.l.b16 %v61
  %v146 = vunpack.c.l.b16 %v62
  %v147 = vunpack.c.l.b16 %v63
  %v148 = vunpack.c.l.b16 %v64
  %v149 = vpack.c.b16 %v118, %v117
  %v150 = vpack.c.b16 %v120, %v119
  %v151 = vpack.c.b16 %v122, %v121
  %v152 = vpack.c.b16 %v124, %v123
  %v153 = vpack.c.b16 %v126, %v125
  %v154 = vpack.c.b16 %v128, %v127
  %v155 = vpack.c.b16 %v130, %v129
  %v156 = vpack.c.b16 %v132, %v131
  %v157 = vpack.c.b16 %v134, %v133
  %v158 = vpack.c.b16 %v136, %v135
  %v159 = vpack.c.b16 %v138, %v137
  %v160 = vpack.c.b16 %v140, %v139
  %v161 = vpack.c.b16 %v142, %v141
  %v162 = vpack.c.b16 %v144, %v143
  %v163 = vpack.c.b16 %v146, %v145
  %v164 = vpack.c.b16 %v148, %v147
  %181 = vmatprep.subr.bf16.mxu0 0
  %182 = vmatpush1.bf16.msra.mxu0 %v156
  %183 = vmatprep.subr.bf16.mxu0 0
  %184 = vmatpush1.bf16.msra.mxu0 %v155
  %185 = vmatprep.subr.bf16.mxu0 0
  %186 = vmatpush1.bf16.msra.mxu0 %v154
  %187 = vmatprep.subr.bf16.mxu0 0
  %188 = vmatpush1.bf16.msra.mxu0 %v153
  %189 = vmatprep.subr.bf16.mxu0 0
  %190 = vmatpush1.bf16.msra.mxu0 %v152
  %191 = vmatprep.subr.bf16.mxu0 0
  %192 = vmatpush1.bf16.msra.mxu0 %v151
  %193 = vmatprep.subr.bf16.mxu0 0
  %194 = vmatpush1.bf16.msra.mxu0 %v150
  %195 = vmatprep.subr.bf16.mxu0 0
  %196 = vmatpush1.bf16.msra.mxu0 %v149
  %197 = vmatprep.subr.bf16.mxu0 0
  %198 = vmatpush2.bf16.msra.mxu0 %v164
  %199 = vmatprep.subr.bf16.mxu0 0
  %200 = vmatpush2.bf16.msra.mxu0 %v163
  %201 = vmatprep.subr.bf16.mxu0 0
  %202 = vmatpush2.bf16.msra.mxu0 %v162
  %203 = vmatprep.subr.bf16.mxu0 0
  %204 = vmatpush2.bf16.msra.mxu0 %v161
  %205 = vmatprep.subr.bf16.mxu0 0
  %206 = vmatpush2.bf16.msra.mxu0 %v160
  %207 = vmatprep.subr.bf16.mxu0 0
  %208 = vmatpush2.bf16.msra.mxu0 %v159
  %209 = vmatprep.subr.bf16.mxu0 0
  %210 = vmatpush2.bf16.msra.mxu0 %v158
  %211 = vmatprep.subr.bf16.mxu0 0
  %212 = vmatpush2.bf16.msra.mxu0 %v157
  %213 = vmatprep.mubr.bf16.mxu0 %v78
  %214 = vmatmul.mubr.bf16.gmra.mxu0 %v77
  %v215 = vpop.f32.mrf.mxu0
  %v216 = vadd.f32 0.0, %v215
  %v217 = vpop.f32.mrf.mxu0
  %v218 = vpop.f32.mrf.mxu0
  %v219 = vadd.f32 0.0, %v218
  %v220 = vpop.f32.mrf.mxu0
  %221 = vmatprep.mubr.bf16.mxu0 %v80
  %222 = vmatmul.mubr.bf16.gmra.mxu0 %v79
  %v223 = vpop.f32.mrf.mxu0
  %v224 = vadd.f32 0.0, %v223
  %v225 = vpop.f32.mrf.mxu0
  %v226 = vpop.f32.mrf.mxu0
  %v227 = vadd.f32 0.0, %v226
  %v228 = vpop.f32.mrf.mxu0
  %229 = vdwg.mxu0
  %v230 = vadd.f32 %v25, %v216
  %v231 = vadd.f32 %v26, %v219
  %v232 = vadd.f32 %v27, %v224
  %v233 = vadd.f32 %v28, %v227
  %234 = vst [vmem:[#allocation2] sm:$0xff] %v230
  %235 = vst [vmem:[#allocation2 + $0x8] sm:$0xff] %v231
  %236 = vst [vmem:[#allocation2 + $0x10] sm:$0xff] %v232
  %237 = vst [vmem:[#allocation2 + $0x18] sm:$0xff] %v233
  // Predicated region
  $region18: #{backbone_stage_forward.18} parent=0 // pred_check
    _
  $region19: #{backbone_stage_forward.18} parent=0 // pred_check_branch
    %239 = sbr.rel (%p17) target = $region21
  $region20: #{backbone_stage_forward.18} parent=0 // pred_region
    %v240 = vld [vmem:[#allocation2] sm:$0xff]
    %v241 = vld [vmem:[#allocation2 + $0x8] sm:$0xff]
    %v242 = vld [vmem:[#allocation2 + $0x10] sm:$0xff]
    %v243 = vld [vmem:[#allocation2 + $0x18] sm:$0xff]
    %v244 = vld [vmem:[%s2] sm:$0x1]
    %v246 = vlaneseq
    %v247 = vshrl.u32 %v246, 7
    %v248 = vsub.s32 0, %v247
    %v249 = vrot.slane %v244, %v248
    %v251 = vadd.f32 %v240, %v249
    %v252 = vadd.f32 %v241, %v249
    %v253 = vadd.f32 %v242, %v249
    %v254 = vadd.f32 %v243, %v249
    %v255 = vmax.f32 %v251, 0.0
    %v256 = vmax.f32 %v252, 0.0
    %v257 = vmax.f32 %v253, 0.0
    %v258 = vmax.f32 %v254, 0.0
    %v259 = vpack.c.bf16 %v256, %v255
    %v260 = vpack.c.bf16 %v258, %v257
    %v263 = vunpack.c.l.b16 %v259
    %v264 = vunpack.c.h.b16 %v259
    %v265 = vunpack.c.l.b16 %v260
    %v266 = vunpack.c.h.b16 %v260
    %v267 = vpack.c.b16 %v263, %v263
    %v268 = vpack.c.b16 %v264, %v264
    %v269 = vpack.c.b16 %v265, %v265
    %v270 = vpack.c.b16 %v266, %v266
    %275 = vst [vmem:[%s3] sm:$0xf] %v267
    %276 = vst [vmem:[%s3 + $0x4] sm:$0xf] %v268
    %277 = vst [vmem:[%s3 + $0x8] sm:$0xf] %v269
    %278 = vst [vmem:[%s3 + $0xc] sm:$0xf] %v270
  $region21: #{backbone_stage_forward.18} parent=0 // pred_fallthru
    _
  // Predicated region
  $region22: #{backbone_stage_forward.18} parent=0 // pred_check
    _
  $region23: #{backbone_stage_forward.18} parent=0 // pred_check_branch
    %280 = sbr.rel (0) target = $region25
  $region24: #{backbone_stage_forward.18} parent=0 // pred_region
    _
  $region25: #{backbone_stage_forward.18} parent=0 // pred_fallthru
    _
  // Predicated region
  $region26: #{backbone_stage_forward.18} parent=0 // pred_check
    _
  $region27: #{backbone_stage_forward.18} parent=0 // pred_check_branch
    %282 = sbr.rel (0) target = $region29
  $region28: #{backbone_stage_forward.18} parent=0 // pred_region
    _
  $region29: #{backbone_stage_forward.18} parent=0 // pred_fallthru
    _

</llo_original>
